<compile_context>
chip_gen: v7x
topology: tpu7x:2x2x1
jax: 0.10.0
libtpu: 0.0.40
codegen_flags: <defaults>
</compile_context>

<pallas_src>
import math
import functools

import jax
import jax.numpy as jnp
from jax import lax
from jax.experimental import pallas as pl
from jax.experimental.pallas import tpu as pltpu


# Set to jnp.bfloat16 on v6e/v7x for ~2-4x MXU throughput at realistic sizes (review
# item); float32 here so the toy-size output matches an f32 reference closely.
_MXU_DTYPE = jnp.float32


# ------------------------------ in-kernel helpers ------------------------------

def _mm(a, b):
    """2-D matmul on the MXU with f32 accumulation."""
    return jnp.dot(a.astype(_MXU_DTYPE), b.astype(_MXU_DTYPE),
                   preferred_element_type=jnp.float32)


def _bdot(a, b, ca, cb):
    """Batched matmul over a leading (head) axis, contracting a dim ca with b dim cb."""
    return lax.dot_general(
        a.astype(_MXU_DTYPE), b.astype(_MXU_DTYPE),
        dimension_numbers=(((ca,), (cb,)), ((0,), (0,))),
        preferred_element_type=jnp.float32)


def _layer_norm(h, gamma, beta, eps):
    # Two-pass (subtract mean first) LayerNorm over the last axis — numerically stable
    # like PyTorch; biased variance, eps inside the rsqrt.
    mu = jnp.mean(h, axis=-1, keepdims=True)
    c = h - mu
    var = jnp.mean(c * c, axis=-1, keepdims=True)
    return c * lax.rsqrt(var + eps) * gamma + beta


# ---------------------------------- fused kernel -------------------------------

def _fused_forward_kernel(
        src_ref, pe_ref, mask_ref, enc_w_ref, enc_b_ref,
        wq_ref, wk_ref, wv_ref, bq_ref, bk_ref, bv_ref, wo_ref, bo_ref,
        ln1_g_ref, ln1_b_ref, w1_ref, b1_ref, w2_ref, b2_ref, ln2_g_ref, ln2_b_ref,
        dec_w_ref, dec_b_ref, out_ref, mem_ref,
        *, nlayers, nhead, scale, sm_scale, eps):
    """Full forward for one batch element: encode -> nlayers encoder layers -> decode."""
    x = src_ref[0]                                              # (S, D_in)

    # encoder linear (+bias), * sqrt(d_model), + positional encoding
    h = (_mm(x, enc_w_ref[...]) + enc_b_ref[...]) * scale + pe_ref[...]    # (S, D)
    # TODO(synk): nn.Dropout(p=0.01) after the positional encoding is identity (eval).

    mask_add = mask_ref[0][None]                                # (1, 1, S) additive mask

    for l in range(nlayers):            # static unroll; all weights are VMEM-resident
        # --- multi-head self-attention, head-major batched over a leading H axis ---
        xh = jnp.broadcast_to(h[None], (nhead,) + h.shape)      # (H, S, D)
        q = _bdot(xh, wq_ref[l], 2, 1) + bq_ref[l]              # (H, S, hd)
        k = _bdot(xh, wk_ref[l], 2, 1) + bk_ref[l]              # (H, S, hd)
        v = _bdot(xh, wv_ref[l], 2, 1) + bv_ref[l]              # (H, S, hd)

        s = _bdot(q, k, 2, 2) * sm_scale + mask_add             # (H, S, S)
        m = jnp.max(s, axis=-1, keepdims=True)
        p = jnp.exp(s - m)
        p = p / jnp.sum(p, axis=-1, keepdims=True)              # exact softmax
        # TODO(synk): attention / residual dropout (p=0.01) is identity in eval mode.

        o = _bdot(p, v, 2, 1)                                   # (H, S, hd)
        # Per-head out-projection summed over heads == concat(heads) @ Wo.
        attn = jnp.sum(_bdot(o, wo_ref[l], 2, 1), axis=0) + bo_ref[l]   # (S, D)

        # --- add & norm 1 ---
        h1 = _layer_norm(h + attn, ln1_g_ref[l], ln1_b_ref[l], eps)

        # --- feed-forward (relu), add & norm 2 ---
        ff = jnp.maximum(_mm(h1, w1_ref[l]) + b1_ref[l], 0.0)
        ff = _mm(ff, w2_ref[l]) + b2_ref[l]
        h = _layer_norm(h1 + ff, ln2_g_ref[l], ln2_b_ref[l], eps)

    mem_ref[0] = h                                              # (S, D)
    out_ref[0] = _mm(h, dec_w_ref[...]) + dec_b_ref[...]        # (S, D_out)


# ------------------------------- kernel wrapper ---------------------------------

def fused_forward(src_bm, pe, add_mask, p):
    """src_bm: [B, S, D_in]; add_mask: [B, 1, S] additive; p: packed params."""
    B, S, D_in = src_bm.shape
    L, H, D, hd = p["wq"].shape
    d_hid = p["w1"].shape[2]
    d_out = p["dec_w"].shape[1]

    kern = functools.partial(
        _fused_forward_kernel, nlayers=L, nhead=H,
        scale=math.sqrt(D), sm_scale=1.0 / math.sqrt(hd), eps=1e-5)

    const2 = lambda b: (0, 0)
    const3 = lambda b: (0, 0, 0)
    const4 = lambda b: (0, 0, 0, 0)
    per_b3 = lambda b: (b, 0, 0)

    out_bm, mem_bm = pl.pallas_call(
        kern,
        out_shape=(jax.ShapeDtypeStruct((B, S, d_out), jnp.float32),
                   jax.ShapeDtypeStruct((B, S, D), jnp.float32)),
        grid=(B,),
        in_specs=[
            pl.BlockSpec((1, S, D_in), per_b3),          # src (one batch element)
            pl.BlockSpec((S, D), const2),                # positional-encoding table
            pl.BlockSpec((1, 1, S), per_b3),             # additive key-padding mask
            pl.BlockSpec((D_in, D), const2),             # encoder W
            pl.BlockSpec((1, D), const2),                # encoder b
            pl.BlockSpec((L, H, D, hd), const4),         # Wq (head-major)
            pl.BlockSpec((L, H, D, hd), const4),         # Wk
            pl.BlockSpec((L, H, D, hd), const4),         # Wv
            pl.BlockSpec((L, H, 1, hd), const4),         # bq
            pl.BlockSpec((L, H, 1, hd), const4),         # bk
            pl.BlockSpec((L, H, 1, hd), const4),         # bv
            pl.BlockSpec((L, H, hd, D), const4),         # Wo (head-major rows)
            pl.BlockSpec((L, 1, D), const3),             # bo
            pl.BlockSpec((L, 1, D), const3),             # ln1 gamma
            pl.BlockSpec((L, 1, D), const3),             # ln1 beta
            pl.BlockSpec((L, D, d_hid), const3),         # FFN W1
            pl.BlockSpec((L, 1, d_hid), const3),         # FFN b1
            pl.BlockSpec((L, d_hid, D), const3),         # FFN W2
            pl.BlockSpec((L, 1, D), const3),             # FFN b2
            pl.BlockSpec((L, 1, D), const3),             # ln2 gamma
            pl.BlockSpec((L, 1, D), const3),             # ln2 beta
            pl.BlockSpec((D, d_out), const2),            # decoder W
            pl.BlockSpec((1, d_out), const2),            # decoder b
        ],
        out_specs=(pl.BlockSpec((1, S, d_out), per_b3),
                   pl.BlockSpec((1, S, D), per_b3)),
        compiler_params=pltpu.CompilerParams(
            dimension_semantics=("parallel",),           # megacore: shard over batch
            vmem_limit_bytes=32 * 1024 * 1024),
    )(src_bm, pe, add_mask,
      p["enc_w"], p["enc_b"],
      p["wq"], p["wk"], p["wv"], p["bq"], p["bk"], p["bv"], p["wo"], p["bo"],
      p["ln1_g"], p["ln1_b"], p["w1"], p["b1"], p["w2"], p["b2"],
      p["ln2_g"], p["ln2_b"], p["dec_w"], p["dec_b"])
    return out_bm, mem_bm


# --------------------------------- model glue -----------------------------------

def positional_encoding(seq_len, d_model):
    position = jnp.arange(seq_len, dtype=jnp.float32)[:, None]
    div_term = jnp.exp(
        jnp.arange(0, d_model, 2, dtype=jnp.float32) * (-math.log(10000.0) / d_model))
    ang = position * div_term                                   # [S, d_model/2]
    pe = jnp.zeros((seq_len, d_model), jnp.float32)
    pe = pe.at[:, 0::2].set(jnp.sin(ang))
    pe = pe.at[:, 1::2].set(jnp.cos(ang))
    return pe                                                   # [S, d_model]


def transformer_forward(packed, src, src_mask):
    """src: [S, B, D_in] (PyTorch layout); src_mask: bool [B, S] (True = padded key)."""
    S, B, D_in = src.shape
    D = packed["enc_w"].shape[1]

    src_bm = jnp.transpose(src, (1, 0, 2))                      # src.permute(1, 0, 2)
    # TODO(synk): the literal PyTorch module indexes the PE table by the *batch* index
    # (pe[:x.size(0)] after the permute) and runs attention over the batch dim; we
    # implement the intended standard semantics (PE per sequence position, attention
    # over the sequence).
    pe = positional_encoding(S, D)

    # TODO(synk): the docstring claims src_mask is [S, S], but it is passed as
    # src_key_padding_mask, so it is treated as a [B, S] boolean key-padding mask;
    # fully-masked rows yield uniform attention instead of NaN (unlike PyTorch).
    add_mask = jnp.where(src_mask, jnp.float32(-1e30),
                         jnp.float32(0.0)).reshape(B, 1, S)

    out_bm, mem_bm = fused_forward(src_bm, pe, add_mask, packed)

    # Tiny [B,S,*] -> [S,B,*] transposes back to the module's output layout.
    # TODO(synk): at scale, fold these into the out_spec index_map instead.
    out = jnp.transpose(out_bm, (1, 0, 2))                      # [S, B, D_out]
    mem = jnp.transpose(mem_bm, (1, 0, 2))                      # [S, B, d_model]
    return out, mem


def init_params(key, D_in, d_model, nhead, d_hid, nlayers, D_out):
    """Standard (PyTorch-like) parameter layout."""
    initrange = 0.1
    keys = jax.random.split(key, 2 + 4 * nlayers)
    u = lambda k, shape: jax.random.uniform(
        k, shape, jnp.float32, minval=-initrange, maxval=initrange)
    params = {
        "enc_w": u(keys[0], (D_in, d_model)),
        "enc_b": jnp.zeros((d_model,), jnp.float32),
        "dec_w": u(keys[1], (d_model, D_out)),
        "dec_b": jnp.zeros((D_out,), jnp.float32),
        "layers": [],
    }
    for l in range(nlayers):
        k0, k1, k2, k3 = keys[2 + 4 * l: 6 + 4 * l]
        params["layers"].append({
            "Wqkv": u(k0, (d_model, 3 * d_model)),
            "bqkv": jnp.zeros((3 * d_model,), jnp.float32),
            "Wo": u(k1, (d_model, d_model)),
            "bo": jnp.zeros((d_model,), jnp.float32),
            "ln1_g": jnp.ones((d_model,), jnp.float32),
            "ln1_b": jnp.zeros((d_model,), jnp.float32),
            "W1": u(k2, (d_model, d_hid)),
            "b1": jnp.zeros((d_hid,), jnp.float32),
            "W2": u(k3, (d_hid, d_model)),
            "b2": jnp.zeros((d_model,), jnp.float32),
            "ln2_g": jnp.ones((d_model,), jnp.float32),
            "ln2_b": jnp.zeros((d_model,), jnp.float32),
        })
    return params


def pack_params(params, *, nhead):
    """One-time offline re-layout: stack layers and split attention weights per head."""
    D = params["enc_w"].shape[1]
    d_hid = params["layers"][0]["W1"].shape[1]
    assert D % nhead == 0
    hd = D // nhead
    layers = params["layers"]
    stack = lambda f: jnp.stack([f(l) for l in layers], axis=0)

    qkv_block = lambda l, i: l["Wqkv"][:, i * D:(i + 1) * D]     # (D, D), head-major cols
    to_heads_w = lambda w: w.reshape(D, nhead, hd).transpose(1, 0, 2)      # (H, D, hd)
    to_heads_b = lambda l, i: l["bqkv"][i * D:(i + 1) * D].reshape(nhead, 1, hd)

    return {
        "enc_w": params["enc_w"],
        "enc_b": params["enc_b"].reshape(1, -1),
        "wq": stack(lambda l: to_heads_w(qkv_block(l, 0))),      # (L, H, D, hd)
        "wk": stack(lambda l: to_heads_w(qkv_block(l, 1))),
        "wv": stack(lambda l: to_heads_w(qkv_block(l, 2))),
        "bq": stack(lambda l: to_heads_b(l, 0)),                 # (L, H, 1, hd)
        "bk": stack(lambda l: to_heads_b(l, 1)),
        "bv": stack(lambda l: to_heads_b(l, 2)),
        "wo": stack(lambda l: l["Wo"].reshape(nhead, hd, D)),    # (L, H, hd, D)
        "bo": stack(lambda l: l["bo"].reshape(1, D)),            # (L, 1, D)
        "ln1_g": stack(lambda l: l["ln1_g"].reshape(1, D)),
        "ln1_b": stack(lambda l: l["ln1_b"].reshape(1, D)),
        "w1": stack(lambda l: l["W1"]),                          # (L, D, d_hid)
        "b1": stack(lambda l: l["b1"].reshape(1, d_hid)),
        "w2": stack(lambda l: l["W2"]),                          # (L, d_hid, D)
        "b2": stack(lambda l: l["b2"].reshape(1, D)),
        "ln2_g": stack(lambda l: l["ln2_g"].reshape(1, D)),
        "ln2_b": stack(lambda l: l["ln2_b"].reshape(1, D)),
        "dec_w": params["dec_w"],
        "dec_b": params["dec_b"].reshape(1, -1),
    }


if __name__ == "__main__":
    # small shapes consistent with the module (D=D_in features, emsize=D_out)
    B, S, D_in = 2, 8, 16
    d_model, nhead, d_hid, nlayers, emsize = 32, 4, 64, 2, 8

    key = jax.random.PRNGKey(0)
    k_src, k_par = jax.random.split(key)
    src = jax.random.normal(k_src, (S, B, D_in), jnp.float32)   # [S, B, D_in]
    src_mask = jnp.zeros((B, S), dtype=bool)
    src_mask = src_mask.at[1, -1].set(True)                     # pad one key in batch 1

    params = init_params(k_par, D_in, d_model, nhead, d_hid, nlayers, emsize)
    packed = pack_params(params, nhead=nhead)                   # one-time offline pack

    fwd = jax.jit(transformer_forward)
    out, mem = fwd(packed, src, src_mask)
    jax.block_until_ready((out, mem))

    assert out.shape == (S, B, emsize), out.shape
    assert mem.shape == (S, B, d_model), mem.shape
    assert bool(jnp.isfinite(out).all()) and bool(jnp.isfinite(mem).all())
    print("KERNEL_OK")
</pallas_src>

<mosaic_0001>
module attributes {stable_mosaic.version = 11 : i64} {
  func.func @_fused_forward_kernel(%arg0: i32, %arg1: memref<1x8x16xf32, #tpu.memory_space<vmem>>, %arg2: memref<8x32xf32, #tpu.memory_space<vmem>>, %arg3: memref<1x1x8xf32, #tpu.memory_space<vmem>>, %arg4: memref<16x32xf32, #tpu.memory_space<vmem>>, %arg5: memref<1x32xf32, #tpu.memory_space<vmem>>, %arg6: memref<2x4x32x8xf32, #tpu.memory_space<vmem>>, %arg7: memref<2x4x32x8xf32, #tpu.memory_space<vmem>>, %arg8: memref<2x4x32x8xf32, #tpu.memory_space<vmem>>, %arg9: memref<2x4x1x8xf32, #tpu.memory_space<vmem>>, %arg10: memref<2x4x1x8xf32, #tpu.memory_space<vmem>>, %arg11: memref<2x4x1x8xf32, #tpu.memory_space<vmem>>, %arg12: memref<2x4x8x32xf32, #tpu.memory_space<vmem>>, %arg13: memref<2x1x32xf32, #tpu.memory_space<vmem>>, %arg14: memref<2x1x32xf32, #tpu.memory_space<vmem>>, %arg15: memref<2x1x32xf32, #tpu.memory_space<vmem>>, %arg16: memref<2x32x64xf32, #tpu.memory_space<vmem>>, %arg17: memref<2x1x64xf32, #tpu.memory_space<vmem>>, %arg18: memref<2x64x32xf32, #tpu.memory_space<vmem>>, %arg19: memref<2x1x32xf32, #tpu.memory_space<vmem>>, %arg20: memref<2x1x32xf32, #tpu.memory_space<vmem>>, %arg21: memref<2x1x32xf32, #tpu.memory_space<vmem>>, %arg22: memref<32x8xf32, #tpu.memory_space<vmem>>, %arg23: memref<1x8xf32, #tpu.memory_space<vmem>>, %arg24: memref<1x8x8xf32, #tpu.memory_space<vmem>>, %arg25: memref<1x8x32xf32, #tpu.memory_space<vmem>>) attributes {dimension_semantics = [#tpu.dimension_semantics<parallel>], iteration_bounds = array<i64: 2>, scalar_prefetch = 0 : i64, scratch_operands = 0 : i64, tpu.core_type = #tpu.core_type<tc>, window_params = [{transform_indices = @transform_0, window_bounds = array<i64: 1, 8, 16>}, {pipeline_mode = #tpu.pipeline_mode<synchronous>, transform_indices = @transform_1, window_bounds = array<i64: 8, 32>}, {transform_indices = @transform_2, window_bounds = array<i64: 1, 1, 8>}, {pipeline_mode = #tpu.pipeline_mode<synchronous>, transform_indices = @transform_3, window_bounds = array<i64: 16, 32>}, {pipeline_mode = #tpu.pipeline_mode<synchronous>, transform_indices = @transform_4, window_bounds = array<i64: 1, 32>}, {pipeline_mode = #tpu.pipeline_mode<synchronous>, transform_indices = @transform_5, window_bounds = array<i64: 2, 4, 32, 8>}, {pipeline_mode = #tpu.pipeline_mode<synchronous>, transform_indices = @transform_6, window_bounds = array<i64: 2, 4, 32, 8>}, {pipeline_mode = #tpu.pipeline_mode<synchronous>, transform_indices = @transform_7, window_bounds = array<i64: 2, 4, 32, 8>}, {pipeline_mode = #tpu.pipeline_mode<synchronous>, transform_indices = @transform_8, window_bounds = array<i64: 2, 4, 1, 8>}, {pipeline_mode = #tpu.pipeline_mode<synchronous>, transform_indices = @transform_9, window_bounds = array<i64: 2, 4, 1, 8>}, {pipeline_mode = #tpu.pipeline_mode<synchronous>, transform_indices = @transform_10, window_bounds = array<i64: 2, 4, 1, 8>}, {pipeline_mode = #tpu.pipeline_mode<synchronous>, transform_indices = @transform_11, window_bounds = array<i64: 2, 4, 8, 32>}, {pipeline_mode = #tpu.pipeline_mode<synchronous>, transform_indices = @transform_12, window_bounds = array<i64: 2, 1, 32>}, {pipeline_mode = #tpu.pipeline_mode<synchronous>, transform_indices = @transform_13, window_bounds = array<i64: 2, 1, 32>}, {pipeline_mode = #tpu.pipeline_mode<synchronous>, transform_indices = @transform_14, window_bounds = array<i64: 2, 1, 32>}, {pipeline_mode = #tpu.pipeline_mode<synchronous>, transform_indices = @transform_15, window_bounds = array<i64: 2, 32, 64>}, {pipeline_mode = #tpu.pipeline_mode<synchronous>, transform_indices = @transform_16, window_bounds = array<i64: 2, 1, 64>}, {pipeline_mode = #tpu.pipeline_mode<synchronous>, transform_indices = @transform_17, window_bounds = array<i64: 2, 64, 32>}, {pipeline_mode = #tpu.pipeline_mode<synchronous>, transform_indices = @transform_18, window_bounds = array<i64: 2, 1, 32>}, {pipeline_mode = #tpu.pipeline_mode<synchronous>, transform_indices = @transform_19, window_bounds = array<i64: 2, 1, 32>}, {pipeline_mode = #tpu.pipeline_mode<synchronous>, transform_indices = @transform_20, window_bounds = array<i64: 2, 1, 32>}, {pipeline_mode = #tpu.pipeline_mode<synchronous>, transform_indices = @transform_21, window_bounds = array<i64: 32, 8>}, {pipeline_mode = #tpu.pipeline_mode<synchronous>, transform_indices = @transform_22, window_bounds = array<i64: 1, 8>}, {transform_indices = @transform_23, window_bounds = array<i64: 1, 8, 8>}, {transform_indices = @transform_24, window_bounds = array<i64: 1, 8, 32>}]} {
    %c0 = arith.constant 0 : index
    %c0_0 = arith.constant 0 : index
    %c0_1 = arith.constant 0 : index
    %0 = vector.load %arg1[%c0, %c0_0, %c0_1] : memref<1x8x16xf32, #tpu.memory_space<vmem>>, vector<1x8x16xf32>
    %1 = vector.shape_cast %0 : vector<1x8x16xf32> to vector<8x16xf32>
    %c0_2 = arith.constant 0 : index
    %c0_3 = arith.constant 0 : index
    %2 = vector.load %arg4[%c0_2, %c0_3] : memref<16x32xf32, #tpu.memory_space<vmem>>, vector<16x32xf32>
    %cst = arith.constant dense<0.000000e+00> : vector<8x32xf32>
    %3 = tpu.matmul %1, %2, %cst {dimension_numbers = #tpu.dot_dimension_numbers<[1], [0], [0], [1], [0, 0, 1, 1], [], []>} : vector<8x16xf32>, vector<16x32xf32>, vector<8x32xf32> -> vector<8x32xf32>
    %c0_4 = arith.constant 0 : index
    %c0_5 = arith.constant 0 : index
    %4 = vector.load %arg5[%c0_4, %c0_5] : memref<1x32xf32, #tpu.memory_space<vmem>>, vector<1x32xf32>
    %5 = vector.broadcast %4 : vector<1x32xf32> to vector<8x32xf32>
    %6 = arith.addf %3, %5 : vector<8x32xf32>
    %cst_6 = arith.constant 5.65685415 : f32
    %7 = vector.broadcast %cst_6 : f32 to vector<8x32xf32>
    %8 = arith.mulf %6, %7 : vector<8x32xf32>
    %c0_7 = arith.constant 0 : index
    %c0_8 = arith.constant 0 : index
    %9 = vector.load %arg2[%c0_7, %c0_8] : memref<8x32xf32, #tpu.memory_space<vmem>>, vector<8x32xf32>
    %10 = arith.addf %8, %9 : vector<8x32xf32>
    %c0_9 = arith.constant 0 : index
    %c0_10 = arith.constant 0 : index
    %c0_11 = arith.constant 0 : index
    %11 = vector.load %arg3[%c0_9, %c0_10, %c0_11] : memref<1x1x8xf32, #tpu.memory_space<vmem>>, vector<1x1x8xf32>
    %12 = vector.shape_cast %11 : vector<1x1x8xf32> to vector<1x8xf32>
    %13 = vector.shape_cast %12 : vector<1x8xf32> to vector<1x1x8xf32>
    %14 = vector.shape_cast %10 : vector<8x32xf32> to vector<1x8x32xf32>
    %15 = vector.shape_cast %14 : vector<1x8x32xf32> to vector<1x8x32xf32>
    %16 = vector.broadcast %15 : vector<1x8x32xf32> to vector<4x8x32xf32>
    %c0_12 = arith.constant 0 : index
    %c0_13 = arith.constant 0 : index
    %c0_14 = arith.constant 0 : index
    %c0_15 = arith.constant 0 : index
    %17 = vector.load %arg6[%c0_12, %c0_13, %c0_14, %c0_15] : memref<2x4x32x8xf32, #tpu.memory_space<vmem>>, vector<1x4x32x8xf32>
    %18 = vector.shape_cast %17 : vector<1x4x32x8xf32> to vector<4x32x8xf32>
    %cst_16 = arith.constant dense<0.000000e+00> : vector<4x8x8xf32>
    %19 = tpu.matmul %16, %18, %cst_16 {dimension_numbers = #tpu.dot_dimension_numbers<[2], [1], [1], [2], [0, 0, 0, 1, 1, 2], [0], [0]>} : vector<4x8x32xf32>, vector<4x32x8xf32>, vector<4x8x8xf32> -> vector<4x8x8xf32>
    %c0_17 = arith.constant 0 : index
    %c0_18 = arith.constant 0 : index
    %c0_19 = arith.constant 0 : index
    %c0_20 = arith.constant 0 : index
    %20 = vector.load %arg9[%c0_17, %c0_18, %c0_19, %c0_20] : memref<2x4x1x8xf32, #tpu.memory_space<vmem>>, vector<1x4x1x8xf32>
    %21 = vector.shape_cast %20 : vector<1x4x1x8xf32> to vector<4x1x8xf32>
    %22 = vector.broadcast %21 : vector<4x1x8xf32> to vector<4x8x8xf32>
    %23 = arith.addf %19, %22 : vector<4x8x8xf32>
    %c0_21 = arith.constant 0 : index
    %c0_22 = arith.constant 0 : index
    %c0_23 = arith.constant 0 : index
    %c0_24 = arith.constant 0 : index
    %24 = vector.load %arg7[%c0_21, %c0_22, %c0_23, %c0_24] : memref<2x4x32x8xf32, #tpu.memory_space<vmem>>, vector<1x4x32x8xf32>
    %25 = vector.shape_cast %24 : vector<1x4x32x8xf32> to vector<4x32x8xf32>
    %cst_25 = arith.constant dense<0.000000e+00> : vector<4x8x8xf32>
    %26 = tpu.matmul %16, %25, %cst_25 {dimension_numbers = #tpu.dot_dimension_numbers<[2], [1], [1], [2], [0, 0, 0, 1, 1, 2], [0], [0]>} : vector<4x8x32xf32>, vector<4x32x8xf32>, vector<4x8x8xf32> -> vector<4x8x8xf32>
    %c0_26 = arith.constant 0 : index
    %c0_27 = arith.constant 0 : index
    %c0_28 = arith.constant 0 : index
    %c0_29 = arith.constant 0 : index
    %27 = vector.load %arg10[%c0_26, %c0_27, %c0_28, %c0_29] : memref<2x4x1x8xf32, #tpu.memory_space<vmem>>, vector<1x4x1x8xf32>
    %28 = vector.shape_cast %27 : vector<1x4x1x8xf32> to vector<4x1x8xf32>
    %29 = vector.broadcast %28 : vector<4x1x8xf32> to vector<4x8x8xf32>
    %30 = arith.addf %26, %29 : vector<4x8x8xf32>
    %c0_30 = arith.constant 0 : index
    %c0_31 = arith.constant 0 : index
    %c0_32 = arith.constant 0 : index
    %c0_33 = arith.constant 0 : index
    %31 = vector.load %arg8[%c0_30, %c0_31, %c0_32, %c0_33] : memref<2x4x32x8xf32, #tpu.memory_space<vmem>>, vector<1x4x32x8xf32>
    %32 = vector.shape_cast %31 : vector<1x4x32x8xf32> to vector<4x32x8xf32>
    %cst_34 = arith.constant dense<0.000000e+00> : vector<4x8x8xf32>
    %33 = tpu.matmul %16, %32, %cst_34 {dimension_numbers = #tpu.dot_dimension_numbers<[2], [1], [1], [2], [0, 0, 0, 1, 1, 2], [0], [0]>} : vector<4x8x32xf32>, vector<4x32x8xf32>, vector<4x8x8xf32> -> vector<4x8x8xf32>
    %c0_35 = arith.constant 0 : index
    %c0_36 = arith.constant 0 : index
    %c0_37 = arith.constant 0 : index
    %c0_38 = arith.constant 0 : index
    %34 = vector.load %arg11[%c0_35, %c0_36, %c0_37, %c0_38] : memref<2x4x1x8xf32, #tpu.memory_space<vmem>>, vector<1x4x1x8xf32>
    %35 = vector.shape_cast %34 : vector<1x4x1x8xf32> to vector<4x1x8xf32>
    %36 = vector.broadcast %35 : vector<4x1x8xf32> to vector<4x8x8xf32>
    %37 = arith.addf %33, %36 : vector<4x8x8xf32>
    %cst_39 = arith.constant dense<0.000000e+00> : vector<4x8x8xf32>
    %38 = tpu.matmul %23, %30, %cst_39 {dimension_numbers = #tpu.dot_dimension_numbers<[2], [2], [1], [1], [0, 0, 0, 1, 1, 1], [0], [0]>} : vector<4x8x8xf32>, vector<4x8x8xf32>, vector<4x8x8xf32> -> vector<4x8x8xf32>
    %cst_40 = arith.constant 0.353553385 : f32
    %39 = vector.broadcast %cst_40 : f32 to vector<4x8x8xf32>
    %40 = arith.mulf %38, %39 : vector<4x8x8xf32>
    %41 = vector.broadcast %13 : vector<1x1x8xf32> to vector<4x8x8xf32>
    %42 = arith.addf %40, %41 : vector<4x8x8xf32>
    %cst_41 = arith.constant dense<0xFF800000> : vector<4x8xf32>
    %43 = vector.multi_reduction <maximumf>, %42, %cst_41 [2] : vector<4x8x8xf32> to vector<4x8xf32>
    %44 = vector.shape_cast %43 : vector<4x8xf32> to vector<4x8x1xf32>
    %45 = vector.broadcast %44 : vector<4x8x1xf32> to vector<4x8x8xf32>
    %46 = arith.subf %42, %45 : vector<4x8x8xf32>
    %47 = math.exp %46 : vector<4x8x8xf32>
    %cst_42 = arith.constant dense<0.000000e+00> : vector<4x8xf32>
    %48 = vector.multi_reduction <add>, %47, %cst_42 [2] : vector<4x8x8xf32> to vector<4x8xf32>
    %49 = vector.shape_cast %48 : vector<4x8xf32> to vector<4x8x1xf32>
    %50 = vector.broadcast %49 : vector<4x8x1xf32> to vector<4x8x8xf32>
    %51 = arith.divf %47, %50 : vector<4x8x8xf32>
    %cst_43 = arith.constant dense<0.000000e+00> : vector<4x8x8xf32>
    %52 = tpu.matmul %51, %37, %cst_43 {dimension_numbers = #tpu.dot_dimension_numbers<[2], [1], [1], [2], [0, 0, 0, 1, 1, 2], [0], [0]>} : vector<4x8x8xf32>, vector<4x8x8xf32>, vector<4x8x8xf32> -> vector<4x8x8xf32>
    %c0_44 = arith.constant 0 : index
    %c0_45 = arith.constant 0 : index
    %c0_46 = arith.constant 0 : index
    %c0_47 = arith.constant 0 : index
    %53 = vector.load %arg12[%c0_44, %c0_45, %c0_46, %c0_47] : memref<2x4x8x32xf32, #tpu.memory_space<vmem>>, vector<1x4x8x32xf32>
    %54 = vector.shape_cast %53 : vector<1x4x8x32xf32> to vector<4x8x32xf32>
    %cst_48 = arith.constant dense<0.000000e+00> : vector<4x8x32xf32>
    %55 = tpu.matmul %52, %54, %cst_48 {dimension_numbers = #tpu.dot_dimension_numbers<[2], [1], [1], [2], [0, 0, 0, 1, 1, 2], [0], [0]>} : vector<4x8x8xf32>, vector<4x8x32xf32>, vector<4x8x32xf32> -> vector<4x8x32xf32>
    %cst_49 = arith.constant dense<0.000000e+00> : vector<8x32xf32>
    %56 = vector.multi_reduction <add>, %55, %cst_49 [0] : vector<4x8x32xf32> to vector<8x32xf32>
    %c0_50 = arith.constant 0 : index
    %c0_51 = arith.constant 0 : index
    %c0_52 = arith.constant 0 : index
    %57 = vector.load %arg13[%c0_50, %c0_51, %c0_52] : memref<2x1x32xf32, #tpu.memory_space<vmem>>, vector<1x1x32xf32>
    %58 = vector.shape_cast %57 : vector<1x1x32xf32> to vector<1x32xf32>
    %59 = vector.broadcast %58 : vector<1x32xf32> to vector<8x32xf32>
    %60 = arith.addf %56, %59 : vector<8x32xf32>
    %61 = arith.addf %10, %60 : vector<8x32xf32>
    %c0_53 = arith.constant 0 : index
    %c0_54 = arith.constant 0 : index
    %c0_55 = arith.constant 0 : index
    %62 = vector.load %arg14[%c0_53, %c0_54, %c0_55] : memref<2x1x32xf32, #tpu.memory_space<vmem>>, vector<1x1x32xf32>
    %63 = vector.shape_cast %62 : vector<1x1x32xf32> to vector<1x32xf32>
    %c0_56 = arith.constant 0 : index
    %c0_57 = arith.constant 0 : index
    %c0_58 = arith.constant 0 : index
    %64 = vector.load %arg15[%c0_56, %c0_57, %c0_58] : memref<2x1x32xf32, #tpu.memory_space<vmem>>, vector<1x1x32xf32>
    %65 = vector.shape_cast %64 : vector<1x1x32xf32> to vector<1x32xf32>
    %cst_59 = arith.constant dense<0.000000e+00> : vector<8xf32>
    %66 = vector.multi_reduction <add>, %61, %cst_59 [1] : vector<8x32xf32> to vector<8xf32>
    %67 = vector.shape_cast %66 : vector<8xf32> to vector<8x1xf32>
    %cst_60 = arith.constant 3.200000e+01 : f32
    %68 = vector.broadcast %cst_60 : f32 to vector<8x1xf32>
    %69 = arith.divf %67, %68 : vector<8x1xf32>
    %70 = vector.broadcast %69 : vector<8x1xf32> to vector<8x32xf32>
    %71 = arith.subf %61, %70 : vector<8x32xf32>
    %72 = arith.mulf %71, %71 : vector<8x32xf32>
    %cst_61 = arith.constant dense<0.000000e+00> : vector<8xf32>
    %73 = vector.multi_reduction <add>, %72, %cst_61 [1] : vector<8x32xf32> to vector<8xf32>
    %74 = vector.shape_cast %73 : vector<8xf32> to vector<8x1xf32>
    %cst_62 = arith.constant 3.200000e+01 : f32
    %75 = vector.broadcast %cst_62 : f32 to vector<8x1xf32>
    %76 = arith.divf %74, %75 : vector<8x1xf32>
    %cst_63 = arith.constant 9.99999974E-6 : f32
    %77 = vector.broadcast %cst_63 : f32 to vector<8x1xf32>
    %78 = arith.addf %76, %77 : vector<8x1xf32>
    %79 = math.rsqrt %78 : vector<8x1xf32>
    %80 = vector.broadcast %79 : vector<8x1xf32> to vector<8x32xf32>
    %81 = arith.mulf %71, %80 : vector<8x32xf32>
    %82 = vector.broadcast %63 : vector<1x32xf32> to vector<8x32xf32>
    %83 = arith.mulf %81, %82 : vector<8x32xf32>
    %84 = vector.broadcast %65 : vector<1x32xf32> to vector<8x32xf32>
    %85 = arith.addf %83, %84 : vector<8x32xf32>
    %c0_64 = arith.constant 0 : index
    %c0_65 = arith.constant 0 : index
    %c0_66 = arith.constant 0 : index
    %86 = vector.load %arg16[%c0_64, %c0_65, %c0_66] : memref<2x32x64xf32, #tpu.memory_space<vmem>>, vector<1x32x64xf32>
    %87 = vector.shape_cast %86 : vector<1x32x64xf32> to vector<32x64xf32>
    %cst_67 = arith.constant dense<0.000000e+00> : vector<8x64xf32>
    %88 = tpu.matmul %85, %87, %cst_67 {dimension_numbers = #tpu.dot_dimension_numbers<[1], [0], [0], [1], [0, 0, 1, 1], [], []>} : vector<8x32xf32>, vector<32x64xf32>, vector<8x64xf32> -> vector<8x64xf32>
    %c0_68 = arith.constant 0 : index
    %c0_69 = arith.constant 0 : index
    %c0_70 = arith.constant 0 : index
    %89 = vector.load %arg17[%c0_68, %c0_69, %c0_70] : memref<2x1x64xf32, #tpu.memory_space<vmem>>, vector<1x1x64xf32>
    %90 = vector.shape_cast %89 : vector<1x1x64xf32> to vector<1x64xf32>
    %91 = vector.broadcast %90 : vector<1x64xf32> to vector<8x64xf32>
    %92 = arith.addf %88, %91 : vector<8x64xf32>
    %cst_71 = arith.constant 0.000000e+00 : f32
    %93 = vector.broadcast %cst_71 : f32 to vector<8x64xf32>
    %94 = arith.maximumf %92, %93 : vector<8x64xf32>
    %c0_72 = arith.constant 0 : index
    %c0_73 = arith.constant 0 : index
    %c0_74 = arith.constant 0 : index
    %95 = vector.load %arg18[%c0_72, %c0_73, %c0_74] : memref<2x64x32xf32, #tpu.memory_space<vmem>>, vector<1x64x32xf32>
    %96 = vector.shape_cast %95 : vector<1x64x32xf32> to vector<64x32xf32>
    %cst_75 = arith.constant dense<0.000000e+00> : vector<8x32xf32>
    %97 = tpu.matmul %94, %96, %cst_75 {dimension_numbers = #tpu.dot_dimension_numbers<[1], [0], [0], [1], [0, 0, 1, 1], [], []>} : vector<8x64xf32>, vector<64x32xf32>, vector<8x32xf32> -> vector<8x32xf32>
    %c0_76 = arith.constant 0 : index
    %c0_77 = arith.constant 0 : index
    %c0_78 = arith.constant 0 : index
    %98 = vector.load %arg19[%c0_76, %c0_77, %c0_78] : memref<2x1x32xf32, #tpu.memory_space<vmem>>, vector<1x1x32xf32>
    %99 = vector.shape_cast %98 : vector<1x1x32xf32> to vector<1x32xf32>
    %100 = vector.broadcast %99 : vector<1x32xf32> to vector<8x32xf32>
    %101 = arith.addf %97, %100 : vector<8x32xf32>
    %102 = arith.addf %85, %101 : vector<8x32xf32>
    %c0_79 = arith.constant 0 : index
    %c0_80 = arith.constant 0 : index
    %c0_81 = arith.constant 0 : index
    %103 = vector.load %arg20[%c0_79, %c0_80, %c0_81] : memref<2x1x32xf32, #tpu.memory_space<vmem>>, vector<1x1x32xf32>
    %104 = vector.shape_cast %103 : vector<1x1x32xf32> to vector<1x32xf32>
    %c0_82 = arith.constant 0 : index
    %c0_83 = arith.constant 0 : index
    %c0_84 = arith.constant 0 : index
    %105 = vector.load %arg21[%c0_82, %c0_83, %c0_84] : memref<2x1x32xf32, #tpu.memory_space<vmem>>, vector<1x1x32xf32>
    %106 = vector.shape_cast %105 : vector<1x1x32xf32> to vector<1x32xf32>
    %cst_85 = arith.constant dense<0.000000e+00> : vector<8xf32>
    %107 = vector.multi_reduction <add>, %102, %cst_85 [1] : vector<8x32xf32> to vector<8xf32>
    %108 = vector.shape_cast %107 : vector<8xf32> to vector<8x1xf32>
    %cst_86 = arith.constant 3.200000e+01 : f32
    %109 = vector.broadcast %cst_86 : f32 to vector<8x1xf32>
    %110 = arith.divf %108, %109 : vector<8x1xf32>
    %111 = vector.broadcast %110 : vector<8x1xf32> to vector<8x32xf32>
    %112 = arith.subf %102, %111 : vector<8x32xf32>
    %113 = arith.mulf %112, %112 : vector<8x32xf32>
    %cst_87 = arith.constant dense<0.000000e+00> : vector<8xf32>
    %114 = vector.multi_reduction <add>, %113, %cst_87 [1] : vector<8x32xf32> to vector<8xf32>
    %115 = vector.shape_cast %114 : vector<8xf32> to vector<8x1xf32>
    %cst_88 = arith.constant 3.200000e+01 : f32
    %116 = vector.broadcast %cst_88 : f32 to vector<8x1xf32>
    %117 = arith.divf %115, %116 : vector<8x1xf32>
    %cst_89 = arith.constant 9.99999974E-6 : f32
    %118 = vector.broadcast %cst_89 : f32 to vector<8x1xf32>
    %119 = arith.addf %117, %118 : vector<8x1xf32>
    %120 = math.rsqrt %119 : vector<8x1xf32>
    %121 = vector.broadcast %120 : vector<8x1xf32> to vector<8x32xf32>
    %122 = arith.mulf %112, %121 : vector<8x32xf32>
    %123 = vector.broadcast %104 : vector<1x32xf32> to vector<8x32xf32>
    %124 = arith.mulf %122, %123 : vector<8x32xf32>
    %125 = vector.broadcast %106 : vector<1x32xf32> to vector<8x32xf32>
    %126 = arith.addf %124, %125 : vector<8x32xf32>
    %127 = vector.shape_cast %126 : vector<8x32xf32> to vector<1x8x32xf32>
    %128 = vector.shape_cast %127 : vector<1x8x32xf32> to vector<1x8x32xf32>
    %129 = vector.broadcast %128 : vector<1x8x32xf32> to vector<4x8x32xf32>
    %c1 = arith.constant 1 : index
    %c0_90 = arith.constant 0 : index
    %c0_91 = arith.constant 0 : index
    %c0_92 = arith.constant 0 : index
    %130 = vector.load %arg6[%c1, %c0_90, %c0_91, %c0_92] : memref<2x4x32x8xf32, #tpu.memory_space<vmem>>, vector<1x4x32x8xf32>
    %131 = vector.shape_cast %130 : vector<1x4x32x8xf32> to vector<4x32x8xf32>
    %cst_93 = arith.constant dense<0.000000e+00> : vector<4x8x8xf32>
    %132 = tpu.matmul %129, %131, %cst_93 {dimension_numbers = #tpu.dot_dimension_numbers<[2], [1], [1], [2], [0, 0, 0, 1, 1, 2], [0], [0]>} : vector<4x8x32xf32>, vector<4x32x8xf32>, vector<4x8x8xf32> -> vector<4x8x8xf32>
    %c1_94 = arith.constant 1 : index
    %c0_95 = arith.constant 0 : index
    %c0_96 = arith.constant 0 : index
    %c0_97 = arith.constant 0 : index
    %133 = vector.load %arg9[%c1_94, %c0_95, %c0_96, %c0_97] : memref<2x4x1x8xf32, #tpu.memory_space<vmem>>, vector<1x4x1x8xf32>
    %134 = vector.shape_cast %133 : vector<1x4x1x8xf32> to vector<4x1x8xf32>
    %135 = vector.broadcast %134 : vector<4x1x8xf32> to vector<4x8x8xf32>
    %136 = arith.addf %132, %135 : vector<4x8x8xf32>
    %c1_98 = arith.constant 1 : index
    %c0_99 = arith.constant 0 : index
    %c0_100 = arith.constant 0 : index
    %c0_101 = arith.constant 0 : index
    %137 = vector.load %arg7[%c1_98, %c0_99, %c0_100, %c0_101] : memref<2x4x32x8xf32, #tpu.memory_space<vmem>>, vector<1x4x32x8xf32>
    %138 = vector.shape_cast %137 : vector<1x4x32x8xf32> to vector<4x32x8xf32>
    %cst_102 = arith.constant dense<0.000000e+00> : vector<4x8x8xf32>
    %139 = tpu.matmul %129, %138, %cst_102 {dimension_numbers = #tpu.dot_dimension_numbers<[2], [1], [1], [2], [0, 0, 0, 1, 1, 2], [0], [0]>} : vector<4x8x32xf32>, vector<4x32x8xf32>, vector<4x8x8xf32> -> vector<4x8x8xf32>
    %c1_103 = arith.constant 1 : index
    %c0_104 = arith.constant 0 : index
    %c0_105 = arith.constant 0 : index
    %c0_106 = arith.constant 0 : index
    %140 = vector.load %arg10[%c1_103, %c0_104, %c0_105, %c0_106] : memref<2x4x1x8xf32, #tpu.memory_space<vmem>>, vector<1x4x1x8xf32>
    %141 = vector.shape_cast %140 : vector<1x4x1x8xf32> to vector<4x1x8xf32>
    %142 = vector.broadcast %141 : vector<4x1x8xf32> to vector<4x8x8xf32>
    %143 = arith.addf %139, %142 : vector<4x8x8xf32>
    %c1_107 = arith.constant 1 : index
    %c0_108 = arith.constant 0 : index
    %c0_109 = arith.constant 0 : index
    %c0_110 = arith.constant 0 : index
    %144 = vector.load %arg8[%c1_107, %c0_108, %c0_109, %c0_110] : memref<2x4x32x8xf32, #tpu.memory_space<vmem>>, vector<1x4x32x8xf32>
    %145 = vector.shape_cast %144 : vector<1x4x32x8xf32> to vector<4x32x8xf32>
    %cst_111 = arith.constant dense<0.000000e+00> : vector<4x8x8xf32>
    %146 = tpu.matmul %129, %145, %cst_111 {dimension_numbers = #tpu.dot_dimension_numbers<[2], [1], [1], [2], [0, 0, 0, 1, 1, 2], [0], [0]>} : vector<4x8x32xf32>, vector<4x32x8xf32>, vector<4x8x8xf32> -> vector<4x8x8xf32>
    %c1_112 = arith.constant 1 : index
    %c0_113 = arith.constant 0 : index
    %c0_114 = arith.constant 0 : index
    %c0_115 = arith.constant 0 : index
    %147 = vector.load %arg11[%c1_112, %c0_113, %c0_114, %c0_115] : memref<2x4x1x8xf32, #tpu.memory_space<vmem>>, vector<1x4x1x8xf32>
    %148 = vector.shape_cast %147 : vector<1x4x1x8xf32> to vector<4x1x8xf32>
    %149 = vector.broadcast %148 : vector<4x1x8xf32> to vector<4x8x8xf32>
    %150 = arith.addf %146, %149 : vector<4x8x8xf32>
    %cst_116 = arith.constant dense<0.000000e+00> : vector<4x8x8xf32>
    %151 = tpu.matmul %136, %143, %cst_116 {dimension_numbers = #tpu.dot_dimension_numbers<[2], [2], [1], [1], [0, 0, 0, 1, 1, 1], [0], [0]>} : vector<4x8x8xf32>, vector<4x8x8xf32>, vector<4x8x8xf32> -> vector<4x8x8xf32>
    %cst_117 = arith.constant 0.353553385 : f32
    %152 = vector.broadcast %cst_117 : f32 to vector<4x8x8xf32>
    %153 = arith.mulf %151, %152 : vector<4x8x8xf32>
    %154 = vector.broadcast %13 : vector<1x1x8xf32> to vector<4x8x8xf32>
    %155 = arith.addf %153, %154 : vector<4x8x8xf32>
    %cst_118 = arith.constant dense<0xFF800000> : vector<4x8xf32>
    %156 = vector.multi_reduction <maximumf>, %155, %cst_118 [2] : vector<4x8x8xf32> to vector<4x8xf32>
    %157 = vector.shape_cast %156 : vector<4x8xf32> to vector<4x8x1xf32>
    %158 = vector.broadcast %157 : vector<4x8x1xf32> to vector<4x8x8xf32>
    %159 = arith.subf %155, %158 : vector<4x8x8xf32>
    %160 = math.exp %159 : vector<4x8x8xf32>
    %cst_119 = arith.constant dense<0.000000e+00> : vector<4x8xf32>
    %161 = vector.multi_reduction <add>, %160, %cst_119 [2] : vector<4x8x8xf32> to vector<4x8xf32>
    %162 = vector.shape_cast %161 : vector<4x8xf32> to vector<4x8x1xf32>
    %163 = vector.broadcast %162 : vector<4x8x1xf32> to vector<4x8x8xf32>
    %164 = arith.divf %160, %163 : vector<4x8x8xf32>
    %cst_120 = arith.constant dense<0.000000e+00> : vector<4x8x8xf32>
    %165 = tpu.matmul %164, %150, %cst_120 {dimension_numbers = #tpu.dot_dimension_numbers<[2], [1], [1], [2], [0, 0, 0, 1, 1, 2], [0], [0]>} : vector<4x8x8xf32>, vector<4x8x8xf32>, vector<4x8x8xf32> -> vector<4x8x8xf32>
    %c1_121 = arith.constant 1 : index
    %c0_122 = arith.constant 0 : index
    %c0_123 = arith.constant 0 : index
    %c0_124 = arith.constant 0 : index
    %166 = vector.load %arg12[%c1_121, %c0_122, %c0_123, %c0_124] : memref<2x4x8x32xf32, #tpu.memory_space<vmem>>, vector<1x4x8x32xf32>
    %167 = vector.shape_cast %166 : vector<1x4x8x32xf32> to vector<4x8x32xf32>
    %cst_125 = arith.constant dense<0.000000e+00> : vector<4x8x32xf32>
    %168 = tpu.matmul %165, %167, %cst_125 {dimension_numbers = #tpu.dot_dimension_numbers<[2], [1], [1], [2], [0, 0, 0, 1, 1, 2], [0], [0]>} : vector<4x8x8xf32>, vector<4x8x32xf32>, vector<4x8x32xf32> -> vector<4x8x32xf32>
    %cst_126 = arith.constant dense<0.000000e+00> : vector<8x32xf32>
    %169 = vector.multi_reduction <add>, %168, %cst_126 [0] : vector<4x8x32xf32> to vector<8x32xf32>
    %c1_127 = arith.constant 1 : index
    %c0_128 = arith.constant 0 : index
    %c0_129 = arith.constant 0 : index
    %170 = vector.load %arg13[%c1_127, %c0_128, %c0_129] : memref<2x1x32xf32, #tpu.memory_space<vmem>>, vector<1x1x32xf32>
    %171 = vector.shape_cast %170 : vector<1x1x32xf32> to vector<1x32xf32>
    %172 = vector.broadcast %171 : vector<1x32xf32> to vector<8x32xf32>
    %173 = arith.addf %169, %172 : vector<8x32xf32>
    %174 = arith.addf %126, %173 : vector<8x32xf32>
    %c1_130 = arith.constant 1 : index
    %c0_131 = arith.constant 0 : index
    %c0_132 = arith.constant 0 : index
    %175 = vector.load %arg14[%c1_130, %c0_131, %c0_132] : memref<2x1x32xf32, #tpu.memory_space<vmem>>, vector<1x1x32xf32>
    %176 = vector.shape_cast %175 : vector<1x1x32xf32> to vector<1x32xf32>
    %c1_133 = arith.constant 1 : index
    %c0_134 = arith.constant 0 : index
    %c0_135 = arith.constant 0 : index
    %177 = vector.load %arg15[%c1_133, %c0_134, %c0_135] : memref<2x1x32xf32, #tpu.memory_space<vmem>>, vector<1x1x32xf32>
    %178 = vector.shape_cast %177 : vector<1x1x32xf32> to vector<1x32xf32>
    %cst_136 = arith.constant dense<0.000000e+00> : vector<8xf32>
    %179 = vector.multi_reduction <add>, %174, %cst_136 [1] : vector<8x32xf32> to vector<8xf32>
    %180 = vector.shape_cast %179 : vector<8xf32> to vector<8x1xf32>
    %cst_137 = arith.constant 3.200000e+01 : f32
    %181 = vector.broadcast %cst_137 : f32 to vector<8x1xf32>
    %182 = arith.divf %180, %181 : vector<8x1xf32>
    %183 = vector.broadcast %182 : vector<8x1xf32> to vector<8x32xf32>
    %184 = arith.subf %174, %183 : vector<8x32xf32>
    %185 = arith.mulf %184, %184 : vector<8x32xf32>
    %cst_138 = arith.constant dense<0.000000e+00> : vector<8xf32>
    %186 = vector.multi_reduction <add>, %185, %cst_138 [1] : vector<8x32xf32> to vector<8xf32>
    %187 = vector.shape_cast %186 : vector<8xf32> to vector<8x1xf32>
    %cst_139 = arith.constant 3.200000e+01 : f32
    %188 = vector.broadcast %cst_139 : f32 to vector<8x1xf32>
    %189 = arith.divf %187, %188 : vector<8x1xf32>
    %cst_140 = arith.constant 9.99999974E-6 : f32
    %190 = vector.broadcast %cst_140 : f32 to vector<8x1xf32>
    %191 = arith.addf %189, %190 : vector<8x1xf32>
    %192 = math.rsqrt %191 : vector<8x1xf32>
    %193 = vector.broadcast %192 : vector<8x1xf32> to vector<8x32xf32>
    %194 = arith.mulf %184, %193 : vector<8x32xf32>
    %195 = vector.broadcast %176 : vector<1x32xf32> to vector<8x32xf32>
    %196 = arith.mulf %194, %195 : vector<8x32xf32>
    %197 = vector.broadcast %178 : vector<1x32xf32> to vector<8x32xf32>
    %198 = arith.addf %196, %197 : vector<8x32xf32>
    %c1_141 = arith.constant 1 : index
    %c0_142 = arith.constant 0 : index
    %c0_143 = arith.constant 0 : index
    %199 = vector.load %arg16[%c1_141, %c0_142, %c0_143] : memref<2x32x64xf32, #tpu.memory_space<vmem>>, vector<1x32x64xf32>
    %200 = vector.shape_cast %199 : vector<1x32x64xf32> to vector<32x64xf32>
    %cst_144 = arith.constant dense<0.000000e+00> : vector<8x64xf32>
    %201 = tpu.matmul %198, %200, %cst_144 {dimension_numbers = #tpu.dot_dimension_numbers<[1], [0], [0], [1], [0, 0, 1, 1], [], []>} : vector<8x32xf32>, vector<32x64xf32>, vector<8x64xf32> -> vector<8x64xf32>
    %c1_145 = arith.constant 1 : index
    %c0_146 = arith.constant 0 : index
    %c0_147 = arith.constant 0 : index
    %202 = vector.load %arg17[%c1_145, %c0_146, %c0_147] : memref<2x1x64xf32, #tpu.memory_space<vmem>>, vector<1x1x64xf32>
    %203 = vector.shape_cast %202 : vector<1x1x64xf32> to vector<1x64xf32>
    %204 = vector.broadcast %203 : vector<1x64xf32> to vector<8x64xf32>
    %205 = arith.addf %201, %204 : vector<8x64xf32>
    %cst_148 = arith.constant 0.000000e+00 : f32
    %206 = vector.broadcast %cst_148 : f32 to vector<8x64xf32>
    %207 = arith.maximumf %205, %206 : vector<8x64xf32>
    %c1_149 = arith.constant 1 : index
    %c0_150 = arith.constant 0 : index
    %c0_151 = arith.constant 0 : index
    %208 = vector.load %arg18[%c1_149, %c0_150, %c0_151] : memref<2x64x32xf32, #tpu.memory_space<vmem>>, vector<1x64x32xf32>
    %209 = vector.shape_cast %208 : vector<1x64x32xf32> to vector<64x32xf32>
    %cst_152 = arith.constant dense<0.000000e+00> : vector<8x32xf32>
    %210 = tpu.matmul %207, %209, %cst_152 {dimension_numbers = #tpu.dot_dimension_numbers<[1], [0], [0], [1], [0, 0, 1, 1], [], []>} : vector<8x64xf32>, vector<64x32xf32>, vector<8x32xf32> -> vector<8x32xf32>
    %c1_153 = arith.constant 1 : index
    %c0_154 = arith.constant 0 : index
    %c0_155 = arith.constant 0 : index
    %211 = vector.load %arg19[%c1_153, %c0_154, %c0_155] : memref<2x1x32xf32, #tpu.memory_space<vmem>>, vector<1x1x32xf32>
    %212 = vector.shape_cast %211 : vector<1x1x32xf32> to vector<1x32xf32>
    %213 = vector.broadcast %212 : vector<1x32xf32> to vector<8x32xf32>
    %214 = arith.addf %210, %213 : vector<8x32xf32>
    %215 = arith.addf %198, %214 : vector<8x32xf32>
    %c1_156 = arith.constant 1 : index
    %c0_157 = arith.constant 0 : index
    %c0_158 = arith.constant 0 : index
    %216 = vector.load %arg20[%c1_156, %c0_157, %c0_158] : memref<2x1x32xf32, #tpu.memory_space<vmem>>, vector<1x1x32xf32>
    %217 = vector.shape_cast %216 : vector<1x1x32xf32> to vector<1x32xf32>
    %c1_159 = arith.constant 1 : index
    %c0_160 = arith.constant 0 : index
    %c0_161 = arith.constant 0 : index
    %218 = vector.load %arg21[%c1_159, %c0_160, %c0_161] : memref<2x1x32xf32, #tpu.memory_space<vmem>>, vector<1x1x32xf32>
    %219 = vector.shape_cast %218 : vector<1x1x32xf32> to vector<1x32xf32>
    %cst_162 = arith.constant dense<0.000000e+00> : vector<8xf32>
    %220 = vector.multi_reduction <add>, %215, %cst_162 [1] : vector<8x32xf32> to vector<8xf32>
    %221 = vector.shape_cast %220 : vector<8xf32> to vector<8x1xf32>
    %cst_163 = arith.constant 3.200000e+01 : f32
    %222 = vector.broadcast %cst_163 : f32 to vector<8x1xf32>
    %223 = arith.divf %221, %222 : vector<8x1xf32>
    %224 = vector.broadcast %223 : vector<8x1xf32> to vector<8x32xf32>
    %225 = arith.subf %215, %224 : vector<8x32xf32>
    %226 = arith.mulf %225, %225 : vector<8x32xf32>
    %cst_164 = arith.constant dense<0.000000e+00> : vector<8xf32>
    %227 = vector.multi_reduction <add>, %226, %cst_164 [1] : vector<8x32xf32> to vector<8xf32>
    %228 = vector.shape_cast %227 : vector<8xf32> to vector<8x1xf32>
    %cst_165 = arith.constant 3.200000e+01 : f32
    %229 = vector.broadcast %cst_165 : f32 to vector<8x1xf32>
    %230 = arith.divf %228, %229 : vector<8x1xf32>
    %cst_166 = arith.constant 9.99999974E-6 : f32
    %231 = vector.broadcast %cst_166 : f32 to vector<8x1xf32>
    %232 = arith.addf %230, %231 : vector<8x1xf32>
    %233 = math.rsqrt %232 : vector<8x1xf32>
    %234 = vector.broadcast %233 : vector<8x1xf32> to vector<8x32xf32>
    %235 = arith.mulf %225, %234 : vector<8x32xf32>
    %236 = vector.broadcast %217 : vector<1x32xf32> to vector<8x32xf32>
    %237 = arith.mulf %235, %236 : vector<8x32xf32>
    %238 = vector.broadcast %219 : vector<1x32xf32> to vector<8x32xf32>
    %239 = arith.addf %237, %238 : vector<8x32xf32>
    %c0_167 = arith.constant 0 : index
    %c0_168 = arith.constant 0 : index
    %c0_169 = arith.constant 0 : index
    %240 = vector.load %arg25[%c0_167, %c0_168, %c0_169] : memref<1x8x32xf32, #tpu.memory_space<vmem>>, vector<1x8x32xf32>
    %241 = vector.shape_cast %240 : vector<1x8x32xf32> to vector<8x32xf32>
    %242 = vector.shape_cast %239 : vector<8x32xf32> to vector<1x8x32xf32>
    tpu.vector_store %arg25[%c0_167, %c0_168, %c0_169], %242 {strides = array<i32>} : memref<1x8x32xf32, #tpu.memory_space<vmem>>, vector<1x8x32xf32>,
    %c0_170 = arith.constant 0 : index
    %c0_171 = arith.constant 0 : index
    %243 = vector.load %arg22[%c0_170, %c0_171] : memref<32x8xf32, #tpu.memory_space<vmem>>, vector<32x8xf32>
    %cst_172 = arith.constant dense<0.000000e+00> : vector<8x8xf32>
    %244 = tpu.matmul %239, %243, %cst_172 {dimension_numbers = #tpu.dot_dimension_numbers<[1], [0], [0], [1], [0, 0, 1, 1], [], []>} : vector<8x32xf32>, vector<32x8xf32>, vector<8x8xf32> -> vector<8x8xf32>
    %c0_173 = arith.constant 0 : index
    %c0_174 = arith.constant 0 : index
    %245 = vector.load %arg23[%c0_173, %c0_174] : memref<1x8xf32, #tpu.memory_space<vmem>>, vector<1x8xf32>
    %246 = vector.broadcast %245 : vector<1x8xf32> to vector<8x8xf32>
    %247 = arith.addf %244, %246 : vector<8x8xf32>
    %c0_175 = arith.constant 0 : index
    %c0_176 = arith.constant 0 : index
    %c0_177 = arith.constant 0 : index
    %248 = vector.load %arg24[%c0_175, %c0_176, %c0_177] : memref<1x8x8xf32, #tpu.memory_space<vmem>>, vector<1x8x8xf32>
    %249 = vector.shape_cast %248 : vector<1x8x8xf32> to vector<8x8xf32>
    %250 = vector.shape_cast %247 : vector<8x8xf32> to vector<1x8x8xf32>
    tpu.vector_store %arg24[%c0_175, %c0_176, %c0_177], %250 {strides = array<i32>} : memref<1x8x8xf32, #tpu.memory_space<vmem>>, vector<1x8x8xf32>,
    return
  }
  func.func @transform_0(%arg0: i32) -> (i32, i32, i32) {
    %c0_i32 = arith.constant 0 : i32
    %c0_i32_0 = arith.constant 0 : i32
    %c0_i32_1 = arith.constant 0 : i32
    return %arg0, %c0_i32, %c0_i32_0 : i32, i32, i32
  }
  func.func @transform_1(%arg0: i32) -> (i32, i32) {
    %c0_i32 = arith.constant 0 : i32
    %c0_i32_0 = arith.constant 0 : i32
    %c0_i32_1 = arith.constant 0 : i32
    return %c0_i32, %c0_i32_0 : i32, i32
  }
  func.func @transform_2(%arg0: i32) -> (i32, i32, i32) {
    %c0_i32 = arith.constant 0 : i32
    %c0_i32_0 = arith.constant 0 : i32
    %c0_i32_1 = arith.constant 0 : i32
    return %arg0, %c0_i32, %c0_i32_0 : i32, i32, i32
  }
  func.func @transform_3(%arg0: i32) -> (i32, i32) {
    %c0_i32 = arith.constant 0 : i32
    %c0_i32_0 = arith.constant 0 : i32
    %c0_i32_1 = arith.constant 0 : i32
    return %c0_i32, %c0_i32_0 : i32, i32
  }
  func.func @transform_4(%arg0: i32) -> (i32, i32) {
    %c0_i32 = arith.constant 0 : i32
    %c0_i32_0 = arith.constant 0 : i32
    %c0_i32_1 = arith.constant 0 : i32
    return %c0_i32, %c0_i32_0 : i32, i32
  }
  func.func @transform_5(%arg0: i32) -> (i32, i32, i32, i32) {
    %c0_i32 = arith.constant 0 : i32
    %c0_i32_0 = arith.constant 0 : i32
    %c0_i32_1 = arith.constant 0 : i32
    %c0_i32_2 = arith.constant 0 : i32
    %c0_i32_3 = arith.constant 0 : i32
    return %c0_i32, %c0_i32_0, %c0_i32_1, %c0_i32_2 : i32, i32, i32, i32
  }
  func.func @transform_6(%arg0: i32) -> (i32, i32, i32, i32) {
    %c0_i32 = arith.constant 0 : i32
    %c0_i32_0 = arith.constant 0 : i32
    %c0_i32_1 = arith.constant 0 : i32
    %c0_i32_2 = arith.constant 0 : i32
    %c0_i32_3 = arith.constant 0 : i32
    return %c0_i32, %c0_i32_0, %c0_i32_1, %c0_i32_2 : i32, i32, i32, i32
  }
  func.func @transform_7(%arg0: i32) -> (i32, i32, i32, i32) {
    %c0_i32 = arith.constant 0 : i32
    %c0_i32_0 = arith.constant 0 : i32
    %c0_i32_1 = arith.constant 0 : i32
    %c0_i32_2 = arith.constant 0 : i32
    %c0_i32_3 = arith.constant 0 : i32
    return %c0_i32, %c0_i32_0, %c0_i32_1, %c0_i32_2 : i32, i32, i32, i32
  }
  func.func @transform_8(%arg0: i32) -> (i32, i32, i32, i32) {
    %c0_i32 = arith.constant 0 : i32
    %c0_i32_0 = arith.constant 0 : i32
    %c0_i32_1 = arith.constant 0 : i32
    %c0_i32_2 = arith.constant 0 : i32
    %c0_i32_3 = arith.constant 0 : i32
    return %c0_i32, %c0_i32_0, %c0_i32_1, %c0_i32_2 : i32, i32, i32, i32
  }
  func.func @transform_9(%arg0: i32) -> (i32, i32, i32, i32) {
    %c0_i32 = arith.constant 0 : i32
    %c0_i32_0 = arith.constant 0 : i32
    %c0_i32_1 = arith.constant 0 : i32
    %c0_i32_2 = arith.constant 0 : i32
    %c0_i32_3 = arith.constant 0 : i32
    return %c0_i32, %c0_i32_0, %c0_i32_1, %c0_i32_2 : i32, i32, i32, i32
  }
  func.func @transform_10(%arg0: i32) -> (i32, i32, i32, i32) {
    %c0_i32 = arith.constant 0 : i32
    %c0_i32_0 = arith.constant 0 : i32
    %c0_i32_1 = arith.constant 0 : i32
    %c0_i32_2 = arith.constant 0 : i32
    %c0_i32_3 = arith.constant 0 : i32
    return %c0_i32, %c0_i32_0, %c0_i32_1, %c0_i32_2 : i32, i32, i32, i32
  }
  func.func @transform_11(%arg0: i32) -> (i32, i32, i32, i32) {
    %c0_i32 = arith.constant 0 : i32
    %c0_i32_0 = arith.constant 0 : i32
    %c0_i32_1 = arith.constant 0 : i32
    %c0_i32_2 = arith.constant 0 : i32
    %c0_i32_3 = arith.constant 0 : i32
    return %c0_i32, %c0_i32_0, %c0_i32_1, %c0_i32_2 : i32, i32, i32, i32
  }
  func.func @transform_12(%arg0: i32) -> (i32, i32, i32) {
    %c0_i32 = arith.constant 0 : i32
    %c0_i32_0 = arith.constant 0 : i32
    %c0_i32_1 = arith.constant 0 : i32
    %c0_i32_2 = arith.constant 0 : i32
    return %c0_i32, %c0_i32_0, %c0_i32_1 : i32, i32, i32
  }
  func.func @transform_13(%arg0: i32) -> (i32, i32, i32) {
    %c0_i32 = arith.constant 0 : i32
    %c0_i32_0 = arith.constant 0 : i32
    %c0_i32_1 = arith.constant 0 : i32
    %c0_i32_2 = arith.constant 0 : i32
    return %c0_i32, %c0_i32_0, %c0_i32_1 : i32, i32, i32
  }
  func.func @transform_14(%arg0: i32) -> (i32, i32, i32) {
    %c0_i32 = arith.constant 0 : i32
    %c0_i32_0 = arith.constant 0 : i32
    %c0_i32_1 = arith.constant 0 : i32
    %c0_i32_2 = arith.constant 0 : i32
    return %c0_i32, %c0_i32_0, %c0_i32_1 : i32, i32, i32
  }
  func.func @transform_15(%arg0: i32) -> (i32, i32, i32) {
    %c0_i32 = arith.constant 0 : i32
    %c0_i32_0 = arith.constant 0 : i32
    %c0_i32_1 = arith.constant 0 : i32
    %c0_i32_2 = arith.constant 0 : i32
    return %c0_i32, %c0_i32_0, %c0_i32_1 : i32, i32, i32
  }
  func.func @transform_16(%arg0: i32) -> (i32, i32, i32) {
    %c0_i32 = arith.constant 0 : i32
    %c0_i32_0 = arith.constant 0 : i32
    %c0_i32_1 = arith.constant 0 : i32
    %c0_i32_2 = arith.constant 0 : i32
    return %c0_i32, %c0_i32_0, %c0_i32_1 : i32, i32, i32
  }
  func.func @transform_17(%arg0: i32) -> (i32, i32, i32) {
    %c0_i32 = arith.constant 0 : i32
    %c0_i32_0 = arith.constant 0 : i32
    %c0_i32_1 = arith.constant 0 : i32
    %c0_i32_2 = arith.constant 0 : i32
    return %c0_i32, %c0_i32_0, %c0_i32_1 : i32, i32, i32
  }
  func.func @transform_18(%arg0: i32) -> (i32, i32, i32) {
    %c0_i32 = arith.constant 0 : i32
    %c0_i32_0 = arith.constant 0 : i32
    %c0_i32_1 = arith.constant 0 : i32
    %c0_i32_2 = arith.constant 0 : i32
    return %c0_i32, %c0_i32_0, %c0_i32_1 : i32, i32, i32
  }
  func.func @transform_19(%arg0: i32) -> (i32, i32, i32) {
    %c0_i32 = arith.constant 0 : i32
    %c0_i32_0 = arith.constant 0 : i32
    %c0_i32_1 = arith.constant 0 : i32
    %c0_i32_2 = arith.constant 0 : i32
    return %c0_i32, %c0_i32_0, %c0_i32_1 : i32, i32, i32
  }
  func.func @transform_20(%arg0: i32) -> (i32, i32, i32) {
    %c0_i32 = arith.constant 0 : i32
    %c0_i32_0 = arith.constant 0 : i32
    %c0_i32_1 = arith.constant 0 : i32
    %c0_i32_2 = arith.constant 0 : i32
    return %c0_i32, %c0_i32_0, %c0_i32_1 : i32, i32, i32
  }
  func.func @transform_21(%arg0: i32) -> (i32, i32) {
    %c0_i32 = arith.constant 0 : i32
    %c0_i32_0 = arith.constant 0 : i32
    %c0_i32_1 = arith.constant 0 : i32
    return %c0_i32, %c0_i32_0 : i32, i32
  }
  func.func @transform_22(%arg0: i32) -> (i32, i32) {
    %c0_i32 = arith.constant 0 : i32
    %c0_i32_0 = arith.constant 0 : i32
    %c0_i32_1 = arith.constant 0 : i32
    return %c0_i32, %c0_i32_0 : i32, i32
  }
  func.func @transform_23(%arg0: i32) -> (i32, i32, i32) {
    %c0_i32 = arith.constant 0 : i32
    %c0_i32_0 = arith.constant 0 : i32
    %c0_i32_1 = arith.constant 0 : i32
    return %arg0, %c0_i32, %c0_i32_0 : i32, i32, i32
  }
  func.func @transform_24(%arg0: i32) -> (i32, i32, i32) {
    %c0_i32 = arith.constant 0 : i32
    %c0_i32_0 = arith.constant 0 : i32
    %c0_i32_1 = arith.constant 0 : i32
    return %arg0, %c0_i32, %c0_i32_0 : i32, i32, i32
  }
}

</mosaic_0001>

<llo_original>
// kernel: transformer_forward.1
$region0: #{transformer_forward.1}
  #allocation0 [shape = 'u32[]', space=smem, size = 0x4, offset = 0x4, fixed_abs, tag = 'smem constant byte address 0x4 - core index']
  #allocation1 [shape = 'u32[144,128]{1,0:T(1,128)}', space=vmem, size = 0x12000, scoped, tag = 'internal scratch']
  %s0 = inlined_call_operand.vmem [shape: f32[2,8,16], index: 0, kind: input, shape index: {}]
  %s1 = inlined_call_operand.vmem [shape: f32[8,32], index: 1, kind: input, shape index: {}]
  %s2 = inlined_call_operand.vmem [shape: f32[2,1,8], index: 2, kind: input, shape index: {}]
  %s3 = inlined_call_operand.vmem [shape: f32[16,32], index: 3, kind: input, shape index: {}]
  %s4 = inlined_call_operand.vmem [shape: f32[1,32], index: 4, kind: input, shape index: {}]
  %s5 = inlined_call_operand.vmem [shape: f32[2,4,32,8], index: 5, kind: input, shape index: {}]
  %s6 = inlined_call_operand.vmem [shape: f32[2,4,32,8], index: 6, kind: input, shape index: {}]
  %s7 = inlined_call_operand.vmem [shape: f32[2,4,32,8], index: 7, kind: input, shape index: {}]
  %s8 = inlined_call_operand.vmem [shape: f32[2,4,1,8], index: 8, kind: input, shape index: {}]
  %s9 = inlined_call_operand.vmem [shape: f32[2,4,1,8], index: 9, kind: input, shape index: {}]
  %s10 = inlined_call_operand.vmem [shape: f32[2,4,1,8], index: 10, kind: input, shape index: {}]
  %s11 = inlined_call_operand.vmem [shape: f32[2,4,8,32], index: 11, kind: input, shape index: {}]
  %s12 = inlined_call_operand.vmem [shape: f32[2,1,32], index: 12, kind: input, shape index: {}]
  %s13 = inlined_call_operand.vmem [shape: f32[2,1,32], index: 13, kind: input, shape index: {}]
  %s14 = inlined_call_operand.vmem [shape: f32[2,1,32], index: 14, kind: input, shape index: {}]
  %s15 = inlined_call_operand.vmem [shape: f32[2,32,64], index: 15, kind: input, shape index: {}]
  %s16 = inlined_call_operand.vmem [shape: f32[2,1,64], index: 16, kind: input, shape index: {}]
  %s17 = inlined_call_operand.vmem [shape: f32[2,64,32], index: 17, kind: input, shape index: {}]
  %s18 = inlined_call_operand.vmem [shape: f32[2,1,32], index: 18, kind: input, shape index: {}]
  %s19 = inlined_call_operand.vmem [shape: f32[2,1,32], index: 19, kind: input, shape index: {}]
  %s20 = inlined_call_operand.vmem [shape: f32[2,1,32], index: 20, kind: input, shape index: {}]
  %s21 = inlined_call_operand.vmem [shape: f32[32,8], index: 21, kind: input, shape index: {}]
  %s22 = inlined_call_operand.vmem [shape: f32[1,8], index: 22, kind: input, shape index: {}]
  %s23 = inlined_call_operand.vmem [shape: f32[2,8,8], index: 23, kind: output, shape index: {0}]
  %s24 = inlined_call_operand.vmem [shape: f32[2,8,32], index: 24, kind: output, shape index: {1}]
  %25 = xla_tuple %s23, %s24
  %s26 = sld [smem:[#allocation0]]
  $region133: #{transformer_forward.1} parent=0
    _
  %s28 = ssub.s32 1, %s26
  %s29 = scalar_select 0, %s28, %s26
  loop: start=0, step=1, limit=4
  $region2: #{transformer_forward.1} parent=0 // loop_pre_header
    _
  $region3: #{transformer_forward.1} parent=0 // loop_header
    %s31 = sphi 0, %s35
    %p32 = scmp.ge.s32.totalorder %s31, 4
    %s41 = sphi 0, %s43
    %s44 = sphi 0, %s41
    %s45 = sphi 0, %s44
    %s61 = sphi 0, %s45
    %s65 = sphi 0, %s65
    %s67 = sphi 0, %s65
    %s68 = sphi 0, %s67
    %s82 = sphi 0, %s68
    %s88 = sphi 0, %s90
    %s91 = sphi 0, %s88
    %s92 = sphi 0, %s91
    %s108 = sphi 0, %s92
    %s112 = sphi 0, %s112
    %s114 = sphi 0, %s112
    %s115 = sphi 0, %s114
    %s129 = sphi 0, %s115
    %s133 = sphi 0, %s133
    %s135 = sphi 0, %s133
    %s136 = sphi 0, %s135
    %s150 = sphi 0, %s136
    %s154 = sphi 0, %s154
    %s156 = sphi 0, %s154
    %s157 = sphi 0, %s156
    %s171 = sphi 0, %s157
    %s175 = sphi 0, %s175
    %s177 = sphi 0, %s175
    %s178 = sphi 0, %s177
    %s192 = sphi 0, %s178
    %s196 = sphi 0, %s196
    %s198 = sphi 0, %s196
    %s199 = sphi 0, %s198
    %s213 = sphi 0, %s199
    %s217 = sphi 0, %s217
    %s219 = sphi 0, %s217
    %s220 = sphi 0, %s219
    %s234 = sphi 0, %s220
    %s238 = sphi 0, %s238
    %s240 = sphi 0, %s238
    %s241 = sphi 0, %s240
    %s255 = sphi 0, %s241
    %s259 = sphi 0, %s259
    %s261 = sphi 0, %s259
    %s262 = sphi 0, %s261
    %s276 = sphi 0, %s262
    %s280 = sphi 0, %s280
    %s282 = sphi 0, %s280
    %s283 = sphi 0, %s282
    %s297 = sphi 0, %s283
    %s301 = sphi 0, %s301
    %s303 = sphi 0, %s301
    %s304 = sphi 0, %s303
    %s318 = sphi 0, %s304
    %s322 = sphi 0, %s322
    %s324 = sphi 0, %s322
    %s325 = sphi 0, %s324
    %s339 = sphi 0, %s325
    %s343 = sphi 0, %s343
    %s345 = sphi 0, %s343
    %s346 = sphi 0, %s345
    %s360 = sphi 0, %s346
    %s364 = sphi 0, %s364
    %s366 = sphi 0, %s364
    %s367 = sphi 0, %s366
    %s381 = sphi 0, %s367
    %s385 = sphi 0, %s385
    %s387 = sphi 0, %s385
    %s388 = sphi 0, %s387
    %s402 = sphi 0, %s388
    %s406 = sphi 0, %s406
    %s408 = sphi 0, %s406
    %s409 = sphi 0, %s408
    %s423 = sphi 0, %s409
    %s427 = sphi 0, %s427
    %s429 = sphi 0, %s427
    %s430 = sphi 0, %s429
    %s444 = sphi 0, %s430
    %s448 = sphi 0, %s448
    %s450 = sphi 0, %s448
    %s451 = sphi 0, %s450
    %s465 = sphi 0, %s451
    %s469 = sphi 0, %s469
    %s471 = sphi 0, %s469
    %s472 = sphi 0, %s471
    %s486 = sphi 0, %s472
    %s490 = sphi 0, %s490
    %s492 = sphi 0, %s490
    %s493 = sphi 0, %s492
    %s507 = sphi 0, %s493
    %s511 = sphi 0, %s511
    %s513 = sphi 0, %s511
    %s514 = sphi 0, %s513
    %s528 = sphi 0, %s514
    %s534 = sphi 0, %s536
    %s537 = sphi 0, %s534
    %s538 = sphi 0, %s537
    %s554 = sphi 0, %s538
    %s560 = sphi 0, %s562
    %s563 = sphi 0, %s560
    %s564 = sphi 0, %s563
    %s580 = sphi 0, %s564
  $region4: #{transformer_forward.1} parent=0 // loop_header_branch
    %34 = sbr.rel (%p32) target = $region8
  $region5: #{transformer_forward.1} parent=0 // loop_body
    %s36 = ssub.s32 %s31, 1
    %s37 = ssub.s32 %s31, 2
    %s38 = sadd.s32 %s31, 1
    %s39 = ssub.s32 %s31, %s38
    %p40 = scmp.eq.s32.totalorder %s39, 0
    %s42 = sadd.s32 %s41, 1
    %s43 = scalar_select %p40, %s41, %s42
    %p46 = pneg %p40
    %p47 = scmp.eq.s32.totalorder %s31, 1
    %p48 = por %p46, %p47
    %p49 = scmp.ne.s32.totalorder %s41, %s44
    %p50 = scmp.eq.s32.totalorder %s31, 0
    %p51 = por %p49, %p50
    %p52 = scmp.ne.s32.totalorder %s41, %s44
    %p53 = scmp.eq.s32.totalorder %s36, 1
    %p54 = por %p52, %p53
    %p55 = scmp.ne.s32.totalorder %s44, %s45
    %p56 = scmp.eq.s32.totalorder %s36, 0
    %p57 = por %p55, %p56
    %p58 = scmp.ne.s32.totalorder %s44, %s45
    %p59 = scmp.eq.s32.totalorder %s37, 1
    %p60 = por %p58, %p59
    %p62 = scmp.ne.s32.totalorder %s45, %s61
    %p63 = scmp.eq.s32.totalorder %s37, 0
    %p64 = por %p62, %p63
    %s66 = sadd.s32 %s65, 1
    %p69 = scmp.eq.s32.totalorder %s31, 1
    %p70 = scmp.ne.s32.totalorder %s65, %s67
    %p71 = scmp.eq.s32.totalorder %s31, 0
    %p72 = por %p70, %p71
    %p73 = scmp.ne.s32.totalorder %s65, %s67
    %p74 = scmp.eq.s32.totalorder %s36, 1
    %p75 = por %p73, %p74
    %p76 = scmp.ne.s32.totalorder %s67, %s68
    %p77 = scmp.eq.s32.totalorder %s36, 0
    %p78 = por %p76, %p77
    %p79 = scmp.ne.s32.totalorder %s67, %s68
    %p80 = scmp.eq.s32.totalorder %s37, 1
    %p81 = por %p79, %p80
    %p83 = scmp.ne.s32.totalorder %s68, %s82
    %p84 = scmp.eq.s32.totalorder %s37, 0
    %p85 = por %p83, %p84
    %s86 = ssub.s32 %s31, %s38
    %p87 = scmp.eq.s32.totalorder %s86, 0
    %s89 = sadd.s32 %s88, 1
    %s90 = scalar_select %p87, %s88, %s89
    %p93 = pneg %p87
    %p94 = scmp.eq.s32.totalorder %s31, 1
    %p95 = por %p93, %p94
    %p96 = scmp.ne.s32.totalorder %s88, %s91
    %p97 = scmp.eq.s32.totalorder %s31, 0
    %p98 = por %p96, %p97
    %p99 = scmp.ne.s32.totalorder %s88, %s91
    %p100 = scmp.eq.s32.totalorder %s36, 1
    %p101 = por %p99, %p100
    %p102 = scmp.ne.s32.totalorder %s91, %s92
    %p103 = scmp.eq.s32.totalorder %s36, 0
    %p104 = por %p102, %p103
    %p105 = scmp.ne.s32.totalorder %s91, %s92
    %p106 = scmp.eq.s32.totalorder %s37, 1
    %p107 = por %p105, %p106
    %p109 = scmp.ne.s32.totalorder %s92, %s108
    %p110 = scmp.eq.s32.totalorder %s37, 0
    %p111 = por %p109, %p110
    %s113 = sadd.s32 %s112, 1
    %p116 = scmp.eq.s32.totalorder %s31, 1
    %p117 = scmp.ne.s32.totalorder %s112, %s114
    %p118 = scmp.eq.s32.totalorder %s31, 0
    %p119 = por %p117, %p118
    %p120 = scmp.ne.s32.totalorder %s112, %s114
    %p121 = scmp.eq.s32.totalorder %s36, 1
    %p122 = por %p120, %p121
    %p123 = scmp.ne.s32.totalorder %s114, %s115
    %p124 = scmp.eq.s32.totalorder %s36, 0
    %p125 = por %p123, %p124
    %p126 = scmp.ne.s32.totalorder %s114, %s115
    %p127 = scmp.eq.s32.totalorder %s37, 1
    %p128 = por %p126, %p127
    %p130 = scmp.ne.s32.totalorder %s115, %s129
    %p131 = scmp.eq.s32.totalorder %s37, 0
    %p132 = por %p130, %p131
    %s134 = sadd.s32 %s133, 1
    %p137 = scmp.eq.s32.totalorder %s31, 1
    %p138 = scmp.ne.s32.totalorder %s133, %s135
    %p139 = scmp.eq.s32.totalorder %s31, 0
    %p140 = por %p138, %p139
    %p141 = scmp.ne.s32.totalorder %s133, %s135
    %p142 = scmp.eq.s32.totalorder %s36, 1
    %p143 = por %p141, %p142
    %p144 = scmp.ne.s32.totalorder %s135, %s136
    %p145 = scmp.eq.s32.totalorder %s36, 0
    %p146 = por %p144, %p145
    %p147 = scmp.ne.s32.totalorder %s135, %s136
    %p148 = scmp.eq.s32.totalorder %s37, 1
    %p149 = por %p147, %p148
    %p151 = scmp.ne.s32.totalorder %s136, %s150
    %p152 = scmp.eq.s32.totalorder %s37, 0
    %p153 = por %p151, %p152
    %s155 = sadd.s32 %s154, 1
    %p158 = scmp.eq.s32.totalorder %s31, 1
    %p159 = scmp.ne.s32.totalorder %s154, %s156
    %p160 = scmp.eq.s32.totalorder %s31, 0
    %p161 = por %p159, %p160
    %p162 = scmp.ne.s32.totalorder %s154, %s156
    %p163 = scmp.eq.s32.totalorder %s36, 1
    %p164 = por %p162, %p163
    %p165 = scmp.ne.s32.totalorder %s156, %s157
    %p166 = scmp.eq.s32.totalorder %s36, 0
    %p167 = por %p165, %p166
    %p168 = scmp.ne.s32.totalorder %s156, %s157
    %p169 = scmp.eq.s32.totalorder %s37, 1
    %p170 = por %p168, %p169
    %p172 = scmp.ne.s32.totalorder %s157, %s171
    %p173 = scmp.eq.s32.totalorder %s37, 0
    %p174 = por %p172, %p173
    %s176 = sadd.s32 %s175, 1
    %p179 = scmp.eq.s32.totalorder %s31, 1
    %p180 = scmp.ne.s32.totalorder %s175, %s177
    %p181 = scmp.eq.s32.totalorder %s31, 0
    %p182 = por %p180, %p181
    %p183 = scmp.ne.s32.totalorder %s175, %s177
    %p184 = scmp.eq.s32.totalorder %s36, 1
    %p185 = por %p183, %p184
    %p186 = scmp.ne.s32.totalorder %s177, %s178
    %p187 = scmp.eq.s32.totalorder %s36, 0
    %p188 = por %p186, %p187
    %p189 = scmp.ne.s32.totalorder %s177, %s178
    %p190 = scmp.eq.s32.totalorder %s37, 1
    %p191 = por %p189, %p190
    %p193 = scmp.ne.s32.totalorder %s178, %s192
    %p194 = scmp.eq.s32.totalorder %s37, 0
    %p195 = por %p193, %p194
    %s197 = sadd.s32 %s196, 1
    %p200 = scmp.eq.s32.totalorder %s31, 1
    %p201 = scmp.ne.s32.totalorder %s196, %s198
    %p202 = scmp.eq.s32.totalorder %s31, 0
    %p203 = por %p201, %p202
    %p204 = scmp.ne.s32.totalorder %s196, %s198
    %p205 = scmp.eq.s32.totalorder %s36, 1
    %p206 = por %p204, %p205
    %p207 = scmp.ne.s32.totalorder %s198, %s199
    %p208 = scmp.eq.s32.totalorder %s36, 0
    %p209 = por %p207, %p208
    %p210 = scmp.ne.s32.totalorder %s198, %s199
    %p211 = scmp.eq.s32.totalorder %s37, 1
    %p212 = por %p210, %p211
    %p214 = scmp.ne.s32.totalorder %s199, %s213
    %p215 = scmp.eq.s32.totalorder %s37, 0
    %p216 = por %p214, %p215
    %s218 = sadd.s32 %s217, 1
    %p221 = scmp.eq.s32.totalorder %s31, 1
    %p222 = scmp.ne.s32.totalorder %s217, %s219
    %p223 = scmp.eq.s32.totalorder %s31, 0
    %p224 = por %p222, %p223
    %p225 = scmp.ne.s32.totalorder %s217, %s219
    %p226 = scmp.eq.s32.totalorder %s36, 1
    %p227 = por %p225, %p226
    %p228 = scmp.ne.s32.totalorder %s219, %s220
    %p229 = scmp.eq.s32.totalorder %s36, 0
    %p230 = por %p228, %p229
    %p231 = scmp.ne.s32.totalorder %s219, %s220
    %p232 = scmp.eq.s32.totalorder %s37, 1
    %p233 = por %p231, %p232
    %p235 = scmp.ne.s32.totalorder %s220, %s234
    %p236 = scmp.eq.s32.totalorder %s37, 0
    %p237 = por %p235, %p236
    %s239 = sadd.s32 %s238, 1
    %p242 = scmp.eq.s32.totalorder %s31, 1
    %p243 = scmp.ne.s32.totalorder %s238, %s240
    %p244 = scmp.eq.s32.totalorder %s31, 0
    %p245 = por %p243, %p244
    %p246 = scmp.ne.s32.totalorder %s238, %s240
    %p247 = scmp.eq.s32.totalorder %s36, 1
    %p248 = por %p246, %p247
    %p249 = scmp.ne.s32.totalorder %s240, %s241
    %p250 = scmp.eq.s32.totalorder %s36, 0
    %p251 = por %p249, %p250
    %p252 = scmp.ne.s32.totalorder %s240, %s241
    %p253 = scmp.eq.s32.totalorder %s37, 1
    %p254 = por %p252, %p253
    %p256 = scmp.ne.s32.totalorder %s241, %s255
    %p257 = scmp.eq.s32.totalorder %s37, 0
    %p258 = por %p256, %p257
    %s260 = sadd.s32 %s259, 1
    %p263 = scmp.eq.s32.totalorder %s31, 1
    %p264 = scmp.ne.s32.totalorder %s259, %s261
    %p265 = scmp.eq.s32.totalorder %s31, 0
    %p266 = por %p264, %p265
    %p267 = scmp.ne.s32.totalorder %s259, %s261
    %p268 = scmp.eq.s32.totalorder %s36, 1
    %p269 = por %p267, %p268
    %p270 = scmp.ne.s32.totalorder %s261, %s262
    %p271 = scmp.eq.s32.totalorder %s36, 0
    %p272 = por %p270, %p271
    %p273 = scmp.ne.s32.totalorder %s261, %s262
    %p274 = scmp.eq.s32.totalorder %s37, 1
    %p275 = por %p273, %p274
    %p277 = scmp.ne.s32.totalorder %s262, %s276
    %p278 = scmp.eq.s32.totalorder %s37, 0
    %p279 = por %p277, %p278
    %s281 = sadd.s32 %s280, 1
    %p284 = scmp.eq.s32.totalorder %s31, 1
    %p285 = scmp.ne.s32.totalorder %s280, %s282
    %p286 = scmp.eq.s32.totalorder %s31, 0
    %p287 = por %p285, %p286
    %p288 = scmp.ne.s32.totalorder %s280, %s282
    %p289 = scmp.eq.s32.totalorder %s36, 1
    %p290 = por %p288, %p289
    %p291 = scmp.ne.s32.totalorder %s282, %s283
    %p292 = scmp.eq.s32.totalorder %s36, 0
    %p293 = por %p291, %p292
    %p294 = scmp.ne.s32.totalorder %s282, %s283
    %p295 = scmp.eq.s32.totalorder %s37, 1
    %p296 = por %p294, %p295
    %p298 = scmp.ne.s32.totalorder %s283, %s297
    %p299 = scmp.eq.s32.totalorder %s37, 0
    %p300 = por %p298, %p299
    %s302 = sadd.s32 %s301, 1
    %p305 = scmp.eq.s32.totalorder %s31, 1
    %p306 = scmp.ne.s32.totalorder %s301, %s303
    %p307 = scmp.eq.s32.totalorder %s31, 0
    %p308 = por %p306, %p307
    %p309 = scmp.ne.s32.totalorder %s301, %s303
    %p310 = scmp.eq.s32.totalorder %s36, 1
    %p311 = por %p309, %p310
    %p312 = scmp.ne.s32.totalorder %s303, %s304
    %p313 = scmp.eq.s32.totalorder %s36, 0
    %p314 = por %p312, %p313
    %p315 = scmp.ne.s32.totalorder %s303, %s304
    %p316 = scmp.eq.s32.totalorder %s37, 1
    %p317 = por %p315, %p316
    %p319 = scmp.ne.s32.totalorder %s304, %s318
    %p320 = scmp.eq.s32.totalorder %s37, 0
    %p321 = por %p319, %p320
    %s323 = sadd.s32 %s322, 1
    %p326 = scmp.eq.s32.totalorder %s31, 1
    %p327 = scmp.ne.s32.totalorder %s322, %s324
    %p328 = scmp.eq.s32.totalorder %s31, 0
    %p329 = por %p327, %p328
    %p330 = scmp.ne.s32.totalorder %s322, %s324
    %p331 = scmp.eq.s32.totalorder %s36, 1
    %p332 = por %p330, %p331
    %p333 = scmp.ne.s32.totalorder %s324, %s325
    %p334 = scmp.eq.s32.totalorder %s36, 0
    %p335 = por %p333, %p334
    %p336 = scmp.ne.s32.totalorder %s324, %s325
    %p337 = scmp.eq.s32.totalorder %s37, 1
    %p338 = por %p336, %p337
    %p340 = scmp.ne.s32.totalorder %s325, %s339
    %p341 = scmp.eq.s32.totalorder %s37, 0
    %p342 = por %p340, %p341
    %s344 = sadd.s32 %s343, 1
    %p347 = scmp.eq.s32.totalorder %s31, 1
    %p348 = scmp.ne.s32.totalorder %s343, %s345
    %p349 = scmp.eq.s32.totalorder %s31, 0
    %p350 = por %p348, %p349
    %p351 = scmp.ne.s32.totalorder %s343, %s345
    %p352 = scmp.eq.s32.totalorder %s36, 1
    %p353 = por %p351, %p352
    %p354 = scmp.ne.s32.totalorder %s345, %s346
    %p355 = scmp.eq.s32.totalorder %s36, 0
    %p356 = por %p354, %p355
    %p357 = scmp.ne.s32.totalorder %s345, %s346
    %p358 = scmp.eq.s32.totalorder %s37, 1
    %p359 = por %p357, %p358
    %p361 = scmp.ne.s32.totalorder %s346, %s360
    %p362 = scmp.eq.s32.totalorder %s37, 0
    %p363 = por %p361, %p362
    %s365 = sadd.s32 %s364, 1
    %p368 = scmp.eq.s32.totalorder %s31, 1
    %p369 = scmp.ne.s32.totalorder %s364, %s366
    %p370 = scmp.eq.s32.totalorder %s31, 0
    %p371 = por %p369, %p370
    %p372 = scmp.ne.s32.totalorder %s364, %s366
    %p373 = scmp.eq.s32.totalorder %s36, 1
    %p374 = por %p372, %p373
    %p375 = scmp.ne.s32.totalorder %s366, %s367
    %p376 = scmp.eq.s32.totalorder %s36, 0
    %p377 = por %p375, %p376
    %p378 = scmp.ne.s32.totalorder %s366, %s367
    %p379 = scmp.eq.s32.totalorder %s37, 1
    %p380 = por %p378, %p379
    %p382 = scmp.ne.s32.totalorder %s367, %s381
    %p383 = scmp.eq.s32.totalorder %s37, 0
    %p384 = por %p382, %p383
    %s386 = sadd.s32 %s385, 1
    %p389 = scmp.eq.s32.totalorder %s31, 1
    %p390 = scmp.ne.s32.totalorder %s385, %s387
    %p391 = scmp.eq.s32.totalorder %s31, 0
    %p392 = por %p390, %p391
    %p393 = scmp.ne.s32.totalorder %s385, %s387
    %p394 = scmp.eq.s32.totalorder %s36, 1
    %p395 = por %p393, %p394
    %p396 = scmp.ne.s32.totalorder %s387, %s388
    %p397 = scmp.eq.s32.totalorder %s36, 0
    %p398 = por %p396, %p397
    %p399 = scmp.ne.s32.totalorder %s387, %s388
    %p400 = scmp.eq.s32.totalorder %s37, 1
    %p401 = por %p399, %p400
    %p403 = scmp.ne.s32.totalorder %s388, %s402
    %p404 = scmp.eq.s32.totalorder %s37, 0
    %p405 = por %p403, %p404
    %s407 = sadd.s32 %s406, 1
    %p410 = scmp.eq.s32.totalorder %s31, 1
    %p411 = scmp.ne.s32.totalorder %s406, %s408
    %p412 = scmp.eq.s32.totalorder %s31, 0
    %p413 = por %p411, %p412
    %p414 = scmp.ne.s32.totalorder %s406, %s408
    %p415 = scmp.eq.s32.totalorder %s36, 1
    %p416 = por %p414, %p415
    %p417 = scmp.ne.s32.totalorder %s408, %s409
    %p418 = scmp.eq.s32.totalorder %s36, 0
    %p419 = por %p417, %p418
    %p420 = scmp.ne.s32.totalorder %s408, %s409
    %p421 = scmp.eq.s32.totalorder %s37, 1
    %p422 = por %p420, %p421
    %p424 = scmp.ne.s32.totalorder %s409, %s423
    %p425 = scmp.eq.s32.totalorder %s37, 0
    %p426 = por %p424, %p425
    %s428 = sadd.s32 %s427, 1
    %p431 = scmp.eq.s32.totalorder %s31, 1
    %p432 = scmp.ne.s32.totalorder %s427, %s429
    %p433 = scmp.eq.s32.totalorder %s31, 0
    %p434 = por %p432, %p433
    %p435 = scmp.ne.s32.totalorder %s427, %s429
    %p436 = scmp.eq.s32.totalorder %s36, 1
    %p437 = por %p435, %p436
    %p438 = scmp.ne.s32.totalorder %s429, %s430
    %p439 = scmp.eq.s32.totalorder %s36, 0
    %p440 = por %p438, %p439
    %p441 = scmp.ne.s32.totalorder %s429, %s430
    %p442 = scmp.eq.s32.totalorder %s37, 1
    %p443 = por %p441, %p442
    %p445 = scmp.ne.s32.totalorder %s430, %s444
    %p446 = scmp.eq.s32.totalorder %s37, 0
    %p447 = por %p445, %p446
    %s449 = sadd.s32 %s448, 1
    %p452 = scmp.eq.s32.totalorder %s31, 1
    %p453 = scmp.ne.s32.totalorder %s448, %s450
    %p454 = scmp.eq.s32.totalorder %s31, 0
    %p455 = por %p453, %p454
    %p456 = scmp.ne.s32.totalorder %s448, %s450
    %p457 = scmp.eq.s32.totalorder %s36, 1
    %p458 = por %p456, %p457
    %p459 = scmp.ne.s32.totalorder %s450, %s451
    %p460 = scmp.eq.s32.totalorder %s36, 0
    %p461 = por %p459, %p460
    %p462 = scmp.ne.s32.totalorder %s450, %s451
    %p463 = scmp.eq.s32.totalorder %s37, 1
    %p464 = por %p462, %p463
    %p466 = scmp.ne.s32.totalorder %s451, %s465
    %p467 = scmp.eq.s32.totalorder %s37, 0
    %p468 = por %p466, %p467
    %s470 = sadd.s32 %s469, 1
    %p473 = scmp.eq.s32.totalorder %s31, 1
    %p474 = scmp.ne.s32.totalorder %s469, %s471
    %p475 = scmp.eq.s32.totalorder %s31, 0
    %p476 = por %p474, %p475
    %p477 = scmp.ne.s32.totalorder %s469, %s471
    %p478 = scmp.eq.s32.totalorder %s36, 1
    %p479 = por %p477, %p478
    %p480 = scmp.ne.s32.totalorder %s471, %s472
    %p481 = scmp.eq.s32.totalorder %s36, 0
    %p482 = por %p480, %p481
    %p483 = scmp.ne.s32.totalorder %s471, %s472
    %p484 = scmp.eq.s32.totalorder %s37, 1
    %p485 = por %p483, %p484
    %p487 = scmp.ne.s32.totalorder %s472, %s486
    %p488 = scmp.eq.s32.totalorder %s37, 0
    %p489 = por %p487, %p488
    %s491 = sadd.s32 %s490, 1
    %p494 = scmp.eq.s32.totalorder %s31, 1
    %p495 = scmp.ne.s32.totalorder %s490, %s492
    %p496 = scmp.eq.s32.totalorder %s31, 0
    %p497 = por %p495, %p496
    %p498 = scmp.ne.s32.totalorder %s490, %s492
    %p499 = scmp.eq.s32.totalorder %s36, 1
    %p500 = por %p498, %p499
    %p501 = scmp.ne.s32.totalorder %s492, %s493
    %p502 = scmp.eq.s32.totalorder %s36, 0
    %p503 = por %p501, %p502
    %p504 = scmp.ne.s32.totalorder %s492, %s493
    %p505 = scmp.eq.s32.totalorder %s37, 1
    %p506 = por %p504, %p505
    %p508 = scmp.ne.s32.totalorder %s493, %s507
    %p509 = scmp.eq.s32.totalorder %s37, 0
    %p510 = por %p508, %p509
    %s512 = sadd.s32 %s511, 1
    %p515 = scmp.eq.s32.totalorder %s31, 1
    %p516 = scmp.ne.s32.totalorder %s511, %s513
    %p517 = scmp.eq.s32.totalorder %s31, 0
    %p518 = por %p516, %p517
    %p519 = scmp.ne.s32.totalorder %s511, %s513
    %p520 = scmp.eq.s32.totalorder %s36, 1
    %p521 = por %p519, %p520
    %p522 = scmp.ne.s32.totalorder %s513, %s514
    %p523 = scmp.eq.s32.totalorder %s36, 0
    %p524 = por %p522, %p523
    %p525 = scmp.ne.s32.totalorder %s513, %s514
    %p526 = scmp.eq.s32.totalorder %s37, 1
    %p527 = por %p525, %p526
    %p529 = scmp.ne.s32.totalorder %s514, %s528
    %p530 = scmp.eq.s32.totalorder %s37, 0
    %p531 = por %p529, %p530
    %s532 = ssub.s32 %s31, %s38
    %p533 = scmp.eq.s32.totalorder %s532, 0
    %s535 = sadd.s32 %s534, 1
    %s536 = scalar_select %p533, %s534, %s535
    %p539 = pneg %p533
    %p540 = scmp.eq.s32.totalorder %s31, 1
    %p541 = por %p539, %p540
    %p542 = scmp.ne.s32.totalorder %s534, %s537
    %p543 = scmp.eq.s32.totalorder %s31, 0
    %p544 = por %p542, %p543
    %p545 = scmp.ne.s32.totalorder %s534, %s537
    %p546 = scmp.eq.s32.totalorder %s36, 1
    %p547 = por %p545, %p546
    %p548 = scmp.ne.s32.totalorder %s537, %s538
    %p549 = scmp.eq.s32.totalorder %s36, 0
    %p550 = por %p548, %p549
    %p551 = scmp.ne.s32.totalorder %s537, %s538
    %p552 = scmp.eq.s32.totalorder %s37, 1
    %p553 = por %p551, %p552
    %p555 = scmp.ne.s32.totalorder %s538, %s554
    %p556 = scmp.eq.s32.totalorder %s37, 0
    %p557 = por %p555, %p556
    %s558 = ssub.s32 %s31, %s38
    %p559 = scmp.eq.s32.totalorder %s558, 0
    %s561 = sadd.s32 %s560, 1
    %s562 = scalar_select %p559, %s560, %s561
    %p565 = pneg %p559
    %p566 = scmp.eq.s32.totalorder %s31, 1
    %p567 = por %p565, %p566
    %p568 = scmp.ne.s32.totalorder %s560, %s563
    %p569 = scmp.eq.s32.totalorder %s31, 0
    %p570 = por %p568, %p569
    %p571 = scmp.ne.s32.totalorder %s560, %s563
    %p572 = scmp.eq.s32.totalorder %s36, 1
    %p573 = por %p571, %p572
    %p574 = scmp.ne.s32.totalorder %s563, %s564
    %p575 = scmp.eq.s32.totalorder %s36, 0
    %p576 = por %p574, %p575
    %p577 = scmp.ne.s32.totalorder %s563, %s564
    %p578 = scmp.eq.s32.totalorder %s37, 1
    %p579 = por %p577, %p578
    %p581 = scmp.ne.s32.totalorder %s564, %s580
    %p582 = scmp.eq.s32.totalorder %s37, 0
    %p583 = por %p581, %p582
    %p584 = scmp.le.s32.totalorder 1, %s31
    %p585 = scmp.lt.s32.totalorder %s31, 3
    %p586 = pnand %p584, %p585
    %p587 = pneg %p586
    // Predicated region
    $region9: #{transformer_forward.1} parent=5 // pred_check
      _
    $region10: #{transformer_forward.1} parent=5 // pred_check_branch
      %589 = sbr.rel (%p586) target = $region12
    $region11: #{transformer_forward.1} parent=5 // pred_region
      %s590 = ssub.s32 %s31, 1
      // Predicated region
      $region13: #{transformer_forward.1} parent=11 // pred_check
        %p591 = pneg %p78
      $region14: #{transformer_forward.1} parent=11 // pred_check_branch
        %593 = sbr.rel (%p591) target = $region16
      $region15: #{transformer_forward.1} parent=11 // pred_region
        _
      $region16: #{transformer_forward.1} parent=11 // pred_fallthru
        _
      // Predicated region
      $region17: #{transformer_forward.1} parent=11 // pred_check
        %p594 = pneg %p125
      $region18: #{transformer_forward.1} parent=11 // pred_check_branch
        %596 = sbr.rel (%p594) target = $region20
      $region19: #{transformer_forward.1} parent=11 // pred_region
        _
      $region20: #{transformer_forward.1} parent=11 // pred_fallthru
        _
      // Predicated region
      $region21: #{transformer_forward.1} parent=11 // pred_check
        %p597 = pneg %p146
      $region22: #{transformer_forward.1} parent=11 // pred_check_branch
        %599 = sbr.rel (%p597) target = $region24
      $region23: #{transformer_forward.1} parent=11 // pred_region
        _
      $region24: #{transformer_forward.1} parent=11 // pred_fallthru
        _
      // Predicated region
      $region25: #{transformer_forward.1} parent=11 // pred_check
        %p600 = pneg %p167
      $region26: #{transformer_forward.1} parent=11 // pred_check_branch
        %602 = sbr.rel (%p600) target = $region28
      $region27: #{transformer_forward.1} parent=11 // pred_region
        _
      $region28: #{transformer_forward.1} parent=11 // pred_fallthru
        _
      // Predicated region
      $region29: #{transformer_forward.1} parent=11 // pred_check
        %p603 = pneg %p188
      $region30: #{transformer_forward.1} parent=11 // pred_check_branch
        %605 = sbr.rel (%p603) target = $region32
      $region31: #{transformer_forward.1} parent=11 // pred_region
        _
      $region32: #{transformer_forward.1} parent=11 // pred_fallthru
        _
      // Predicated region
      $region33: #{transformer_forward.1} parent=11 // pred_check
        %p606 = pneg %p209
      $region34: #{transformer_forward.1} parent=11 // pred_check_branch
        %608 = sbr.rel (%p606) target = $region36
      $region35: #{transformer_forward.1} parent=11 // pred_region
        _
      $region36: #{transformer_forward.1} parent=11 // pred_fallthru
        _
      // Predicated region
      $region37: #{transformer_forward.1} parent=11 // pred_check
        %p609 = pneg %p230
      $region38: #{transformer_forward.1} parent=11 // pred_check_branch
        %611 = sbr.rel (%p609) target = $region40
      $region39: #{transformer_forward.1} parent=11 // pred_region
        _
      $region40: #{transformer_forward.1} parent=11 // pred_fallthru
        _
      // Predicated region
      $region41: #{transformer_forward.1} parent=11 // pred_check
        %p612 = pneg %p251
      $region42: #{transformer_forward.1} parent=11 // pred_check_branch
        %614 = sbr.rel (%p612) target = $region44
      $region43: #{transformer_forward.1} parent=11 // pred_region
        _
      $region44: #{transformer_forward.1} parent=11 // pred_fallthru
        _
      // Predicated region
      $region45: #{transformer_forward.1} parent=11 // pred_check
        %p615 = pneg %p272
      $region46: #{transformer_forward.1} parent=11 // pred_check_branch
        %617 = sbr.rel (%p615) target = $region48
      $region47: #{transformer_forward.1} parent=11 // pred_region
        _
      $region48: #{transformer_forward.1} parent=11 // pred_fallthru
        _
      // Predicated region
      $region49: #{transformer_forward.1} parent=11 // pred_check
        %p618 = pneg %p293
      $region50: #{transformer_forward.1} parent=11 // pred_check_branch
        %620 = sbr.rel (%p618) target = $region52
      $region51: #{transformer_forward.1} parent=11 // pred_region
        _
      $region52: #{transformer_forward.1} parent=11 // pred_fallthru
        _
      // Predicated region
      $region53: #{transformer_forward.1} parent=11 // pred_check
        %p621 = pneg %p314
      $region54: #{transformer_forward.1} parent=11 // pred_check_branch
        %623 = sbr.rel (%p621) target = $region56
      $region55: #{transformer_forward.1} parent=11 // pred_region
        _
      $region56: #{transformer_forward.1} parent=11 // pred_fallthru
        _
      // Predicated region
      $region57: #{transformer_forward.1} parent=11 // pred_check
        %p624 = pneg %p335
      $region58: #{transformer_forward.1} parent=11 // pred_check_branch
        %626 = sbr.rel (%p624) target = $region60
      $region59: #{transformer_forward.1} parent=11 // pred_region
        _
      $region60: #{transformer_forward.1} parent=11 // pred_fallthru
        _
      // Predicated region
      $region61: #{transformer_forward.1} parent=11 // pred_check
        %p627 = pneg %p356
      $region62: #{transformer_forward.1} parent=11 // pred_check_branch
        %629 = sbr.rel (%p627) target = $region64
      $region63: #{transformer_forward.1} parent=11 // pred_region
        _
      $region64: #{transformer_forward.1} parent=11 // pred_fallthru
        _
      // Predicated region
      $region65: #{transformer_forward.1} parent=11 // pred_check
        %p630 = pneg %p377
      $region66: #{transformer_forward.1} parent=11 // pred_check_branch
        %632 = sbr.rel (%p630) target = $region68
      $region67: #{transformer_forward.1} parent=11 // pred_region
        _
      $region68: #{transformer_forward.1} parent=11 // pred_fallthru
        _
      // Predicated region
      $region69: #{transformer_forward.1} parent=11 // pred_check
        %p633 = pneg %p398
      $region70: #{transformer_forward.1} parent=11 // pred_check_branch
        %635 = sbr.rel (%p633) target = $region72
      $region71: #{transformer_forward.1} parent=11 // pred_region
        _
      $region72: #{transformer_forward.1} parent=11 // pred_fallthru
        _
      // Predicated region
      $region73: #{transformer_forward.1} parent=11 // pred_check
        %p636 = pneg %p419
      $region74: #{transformer_forward.1} parent=11 // pred_check_branch
        %638 = sbr.rel (%p636) target = $region76
      $region75: #{transformer_forward.1} parent=11 // pred_region
        _
      $region76: #{transformer_forward.1} parent=11 // pred_fallthru
        _
      // Predicated region
      $region77: #{transformer_forward.1} parent=11 // pred_check
        %p639 = pneg %p440
      $region78: #{transformer_forward.1} parent=11 // pred_check_branch
        %641 = sbr.rel (%p639) target = $region80
      $region79: #{transformer_forward.1} parent=11 // pred_region
        _
      $region80: #{transformer_forward.1} parent=11 // pred_fallthru
        _
      // Predicated region
      $region81: #{transformer_forward.1} parent=11 // pred_check
        %p642 = pneg %p461
      $region82: #{transformer_forward.1} parent=11 // pred_check_branch
        %644 = sbr.rel (%p642) target = $region84
      $region83: #{transformer_forward.1} parent=11 // pred_region
        _
      $region84: #{transformer_forward.1} parent=11 // pred_fallthru
        _
      // Predicated region
      $region85: #{transformer_forward.1} parent=11 // pred_check
        %p645 = pneg %p482
      $region86: #{transformer_forward.1} parent=11 // pred_check_branch
        %647 = sbr.rel (%p645) target = $region88
      $region87: #{transformer_forward.1} parent=11 // pred_region
        _
      $region88: #{transformer_forward.1} parent=11 // pred_fallthru
        _
      // Predicated region
      $region89: #{transformer_forward.1} parent=11 // pred_check
        %p648 = pneg %p503
      $region90: #{transformer_forward.1} parent=11 // pred_check_branch
        %650 = sbr.rel (%p648) target = $region92
      $region91: #{transformer_forward.1} parent=11 // pred_region
        _
      $region92: #{transformer_forward.1} parent=11 // pred_fallthru
        _
      // Predicated region
      $region93: #{transformer_forward.1} parent=11 // pred_check
        %p651 = pneg %p524
      $region94: #{transformer_forward.1} parent=11 // pred_check_branch
        %653 = sbr.rel (%p651) target = $region96
      $region95: #{transformer_forward.1} parent=11 // pred_region
        _
      $region96: #{transformer_forward.1} parent=11 // pred_fallthru
        _
    $region12: #{transformer_forward.1} parent=5 // pred_fallthru
      _
    %p654 = scmp.lt.s32.totalorder %s31, 2
    // Predicated region
    $region97: #{transformer_forward.1} parent=5 // pred_check
      %p655 = pneg %p654
    $region98: #{transformer_forward.1} parent=5 // pred_check_branch
      %657 = sbr.rel (%p655) target = $region100
    $region99: #{transformer_forward.1} parent=5 // pred_region
      // Predicated region
      $region101: #{transformer_forward.1} parent=99 // pred_check
        %p658 = pneg %p51
      $region102: #{transformer_forward.1} parent=99 // pred_check_branch
        %660 = sbr.rel (%p658) target = $region104
      $region103: #{transformer_forward.1} parent=99 // pred_region
        %p661 = scmp.lt.s32.totalorder %s31, 1
        %s662 = scalar_select %p661, %s31, 1
        %s663 = smul.addr %s662, 8
        %s664 = scalar_lea.vmem %s0, %s663
      $region104: #{transformer_forward.1} parent=99 // pred_fallthru
        _
      // Predicated region
      $region105: #{transformer_forward.1} parent=99 // pred_check
        %p665 = pneg %p98
      $region106: #{transformer_forward.1} parent=99 // pred_check_branch
        %667 = sbr.rel (%p665) target = $region108
      $region107: #{transformer_forward.1} parent=99 // pred_region
        %p668 = scmp.lt.s32.totalorder %s31, 1
        %s669 = scalar_select %p668, %s31, 1
        %s670 = scalar_lea.vmem %s2, %s669
      $region108: #{transformer_forward.1} parent=99 // pred_fallthru
        _
    $region100: #{transformer_forward.1} parent=5 // pred_fallthru
      _
    %p671 = scmp.le.s32.totalorder 1, %s31
    %p672 = scmp.lt.s32.totalorder %s31, 3
    %p673 = pnand %p671, %p672
    %p674 = pneg %p673
    // Predicated region
    $region109: #{transformer_forward.1} parent=5 // pred_check
      _
    $region110: #{transformer_forward.1} parent=5 // pred_check_branch
      %676 = sbr.rel (%p673) target = $region112
    $region111: #{transformer_forward.1} parent=5 // pred_region
      %s677 = ssub.s32 %s31, 1
      %p678 = scmp.lt.s32.totalorder %s36, 1
      %s679 = scalar_select %p678, %s36, 1
      %s680 = smul.addr %s679, 8
      %s681 = scalar_lea.vmem %s0, %s680
      %p682 = pneg %p57
      %p683 = pneg %p54
      %p684 = pneg %p78
      %p685 = pneg %p75
      %p686 = scmp.lt.s32.totalorder %s36, 1
      %s687 = scalar_select %p686, %s36, 1
      %s688 = scalar_lea.vmem %s2, %s687
      %p689 = pneg %p104
      %p690 = pneg %p101
      %p691 = pneg %p125
      %p692 = pneg %p122
      %p693 = pneg %p146
      %p694 = pneg %p143
      %p695 = pneg %p167
      %p696 = pneg %p164
      %p697 = pneg %p188
      %p698 = pneg %p185
      %p699 = pneg %p209
      %p700 = pneg %p206
      %p701 = pneg %p230
      %p702 = pneg %p227
      %p703 = pneg %p251
      %p704 = pneg %p248
      %p705 = pneg %p272
      %p706 = pneg %p269
      %p707 = pneg %p293
      %p708 = pneg %p290
      %p709 = pneg %p314
      %p710 = pneg %p311
      %p711 = pneg %p335
      %p712 = pneg %p332
      %p713 = pneg %p356
      %p714 = pneg %p353
      %p715 = pneg %p377
      %p716 = pneg %p374
      %p717 = pneg %p398
      %p718 = pneg %p395
      %p719 = pneg %p419
      %p720 = pneg %p416
      %p721 = pneg %p440
      %p722 = pneg %p437
      %p723 = pneg %p461
      %p724 = pneg %p458
      %p725 = pneg %p482
      %p726 = pneg %p479
      %p727 = pneg %p503
      %p728 = pneg %p500
      %p729 = pneg %p524
      %p730 = pneg %p521
      %p731 = pneg %p550
      %p732 = pneg %p547
      %p733 = scmp.lt.s32.totalorder %s36, 1
      %s734 = scalar_select %p733, %s36, 1
      %s735 = smul.addr %s734, 8
      %s736 = scalar_lea.vmem %s23, %s735
      %p737 = pneg %p576
      %p738 = pneg %p573
      %p739 = scmp.lt.s32.totalorder %s36, 1
      %s740 = scalar_select %p739, %s36, 1
      %s741 = smul.addr %s740, 8
      %s742 = scalar_lea.vmem %s24, %s741
      %p743 = scmp.lt.s32.totalorder %s36, 1
      %s744 = scalar_select %p743, %s36, 1
      %s745 = smul.addr %s744, 8
      %s746 = scalar_lea.vmem %s0, %s745
      %p747 = scmp.lt.s32.totalorder %s36, 1
      %s748 = scalar_select %p747, %s36, 1
      %s749 = scalar_lea.vmem %s2, %s748
      %p750 = scmp.lt.s32.totalorder %s36, 1
      %s751 = scalar_select %p750, %s36, 1
      %s752 = smul.addr %s751, 8
      %s753 = scalar_lea.vmem %s23, %s752
      %p754 = scmp.lt.s32.totalorder %s36, 1
      %s755 = scalar_select %p754, %s36, 1
      %s756 = smul.addr %s755, 8
      %s757 = scalar_lea.vmem %s24, %s756
      %v758 = vld [vmem:[%s746] sm:$0xff]
      %v759 = vld [vmem:[%s3] sm:$0xff]
      %v760 = vld [vmem:[%s3 + $0x8] sm:$0xff]
      %v761 = vld [vmem:[%s4] sm:$0x1]
      %v763 = vlaneseq
      %v764 = vshrl.u32 %v763, 7
      %v765 = vsub.s32 0, %v764
      %v766 = vrot.slane %v761, %v765
      %vm768 = vcmask 130048
      %v770 = vsel %vm768, %v758, 0
      %772 = vmatprep.subr.mxu0 0.0
      %773 = vmatpush1.msra.mxu0 %v759
      %774 = vmatprep.subr.mxu0 0.0
      %775 = vmatpush1.msra.mxu0 %v760
      %776 = vmatprep.subr.mxu0 0.0
      %777 = vmatpush1.msra.mxu0 0.0
      %778 = vmatprep.subr.mxu0 0.0
      %779 = vmatpush1.msra.mxu0 0.0
      %780 = vmatprep.subr.mxu0 0.0
      %781 = vmatpush1.msra.mxu0 0.0
      %782 = vmatprep.subr.mxu0 0.0
      %783 = vmatpush1.msra.mxu0 0.0
      %784 = vmatprep.subr.mxu0 0.0
      %785 = vmatpush1.msra.mxu0 0.0
      %786 = vmatprep.subr.mxu0 0.0
      %787 = vmatpush1.msra.mxu0 0.0
      %788 = vmatprep.subr.mxu0 0.0
      %789 = vmatpush1.msra.mxu0 0.0
      %790 = vmatprep.subr.mxu0 0.0
      %791 = vmatpush1.msra.mxu0 0.0
      %792 = vmatprep.subr.mxu0 0.0
      %793 = vmatpush1.msra.mxu0 0.0
      %794 = vmatprep.subr.mxu0 0.0
      %795 = vmatpush1.msra.mxu0 0.0
      %796 = vmatprep.subr.mxu0 0.0
      %797 = vmatpush1.msra.mxu0 0.0
      %798 = vmatprep.subr.mxu0 0.0
      %799 = vmatpush1.msra.mxu0 0.0
      %800 = vmatprep.subr.mxu0 0.0
      %801 = vmatpush1.msra.mxu0 0.0
      %802 = vmatprep.subr.mxu0 0.0
      %803 = vmatpush1.msra.mxu0 0.0
      %804 = vmatprep.subr.mxu0 0.0
      %805 = vmatpush1.msra.mxu0 0.0
      %806 = vmatprep.subr.mxu0 0.0
      %807 = vmatpush1.msra.mxu0 0.0
      %808 = vmatprep.subr.mxu0 0.0
      %809 = vmatpush1.msra.mxu0 0.0
      %810 = vmatprep.subr.mxu0 0.0
      %811 = vmatpush1.msra.mxu0 0.0
      %812 = vmatprep.subr.mxu0 0.0
      %813 = vmatpush1.msra.mxu0 0.0
      %814 = vmatprep.subr.mxu0 0.0
      %815 = vmatpush1.msra.mxu0 0.0
      %816 = vmatprep.subr.mxu0 0.0
      %817 = vmatpush1.msra.mxu0 0.0
      %818 = vmatprep.subr.mxu0 0.0
      %819 = vmatpush1.msra.mxu0 0.0
      %820 = vmatprep.subr.mxu0 0.0
      %821 = vmatpush1.msra.mxu0 0.0
      %822 = vmatprep.subr.mxu0 0.0
      %823 = vmatpush1.msra.mxu0 0.0
      %824 = vmatprep.subr.mxu0 0.0
      %825 = vmatpush1.msra.mxu0 0.0
      %826 = vmatprep.subr.mxu0 0.0
      %827 = vmatpush1.msra.mxu0 0.0
      %828 = vmatprep.subr.mxu0 0.0
      %829 = vmatpush1.msra.mxu0 0.0
      %830 = vmatprep.subr.mxu0 0.0
      %831 = vmatpush1.msra.mxu0 0.0
      %832 = vmatprep.subr.mxu0 0.0
      %833 = vmatpush1.msra.mxu0 0.0
      %834 = vmatprep.subr.mxu0 0.0
      %835 = vmatpush1.msra.mxu0 0.0
      %836 = vmatprep.mubr.f32.mxu0 0.0
      %837 = vmatmul.mubr.f32.gmra.mrb[0].mxu0 %v770
      %v838 = vpop.f32.mrb[0].mxu0
      %v839 = vadd.f32 %v766, %v838
      %v840 = vpop.f32.mrb[0].mxu0
      %841 = vdwg.mxu0
      %v842 = vmul.f32 %v839, 5.656854
      %v843 = vld [vmem:[%s1] sm:$0xff]
      %v844 = vadd.f32 %v842, %v843
      %v845 = vld [vmem:[%s749] sm:$0x1]
      %v846 = vld [vmem:[%s5] sm:$0xff]
      %v847 = vld [vmem:[%s5 + $0x8] sm:$0xff]
      %v848 = vld [vmem:[%s5 + $0x10] sm:$0xff]
      %v849 = vld [vmem:[%s5 + $0x18] sm:$0xff]
      %v850 = vld [vmem:[%s5 + $0x20] sm:$0xff]
      %v851 = vld [vmem:[%s5 + $0x28] sm:$0xff]
      %v852 = vld [vmem:[%s5 + $0x30] sm:$0xff]
      %v853 = vld [vmem:[%s5 + $0x38] sm:$0xff]
      %v854 = vld [vmem:[%s5 + $0x40] sm:$0xff]
      %v855 = vld [vmem:[%s5 + $0x48] sm:$0xff]
      %v856 = vld [vmem:[%s5 + $0x50] sm:$0xff]
      %v857 = vld [vmem:[%s5 + $0x58] sm:$0xff]
      %v858 = vld [vmem:[%s5 + $0x60] sm:$0xff]
      %v859 = vld [vmem:[%s5 + $0x68] sm:$0xff]
      %v860 = vld [vmem:[%s5 + $0x70] sm:$0xff]
      %v861 = vld [vmem:[%s5 + $0x78] sm:$0xff]
      %v862 = vld [vmem:[%s8] sm:$0x1]
      %v863 = vld [vmem:[%s8 + $0x1] sm:$0x1]
      %v864 = vld [vmem:[%s8 + $0x2] sm:$0x1]
      %v865 = vld [vmem:[%s8 + $0x3] sm:$0x1]
      %v870 = vlaneseq
      %v871 = vshrl.u32 %v870, 7
      %v872 = vsub.s32 0, %v871
      %v873 = vrot.slane %v862, %v872
      %v874 = vlaneseq
      %v875 = vshrl.u32 %v874, 7
      %v876 = vsub.s32 0, %v875
      %v877 = vrot.slane %v863, %v876
      %v878 = vlaneseq
      %v879 = vshrl.u32 %v878, 7
      %v880 = vsub.s32 0, %v879
      %v881 = vrot.slane %v864, %v880
      %v882 = vlaneseq
      %v883 = vshrl.u32 %v882, 7
      %v884 = vsub.s32 0, %v883
      %v885 = vrot.slane %v865, %v884
      %vm890 = vcmask 261120
      %v892 = vsel %vm890, %v844, 0
      %894 = vmatprep.subr.mxu0 0.0
      %895 = vmatpush1.msra.mxu0 %v846
      %896 = vmatprep.subr.mxu0 0.0
      %897 = vmatpush1.msra.mxu0 %v847
      %898 = vmatprep.subr.mxu0 0.0
      %899 = vmatpush1.msra.mxu0 %v848
      %900 = vmatprep.subr.mxu0 0.0
      %901 = vmatpush1.msra.mxu0 %v849
      %902 = vmatprep.subr.mxu0 0.0
      %903 = vmatpush1.msra.mxu0 0.0
      %904 = vmatprep.subr.mxu0 0.0
      %905 = vmatpush1.msra.mxu0 0.0
      %906 = vmatprep.subr.mxu0 0.0
      %907 = vmatpush1.msra.mxu0 0.0
      %908 = vmatprep.subr.mxu0 0.0
      %909 = vmatpush1.msra.mxu0 0.0
      %910 = vmatprep.subr.mxu0 0.0
      %911 = vmatpush1.msra.mxu0 0.0
      %912 = vmatprep.subr.mxu0 0.0
      %913 = vmatpush1.msra.mxu0 0.0
      %914 = vmatprep.subr.mxu0 0.0
      %915 = vmatpush1.msra.mxu0 0.0
      %916 = vmatprep.subr.mxu0 0.0
      %917 = vmatpush1.msra.mxu0 0.0
      %918 = vmatprep.subr.mxu0 0.0
      %919 = vmatpush1.msra.mxu0 0.0
      %920 = vmatprep.subr.mxu0 0.0
      %921 = vmatpush1.msra.mxu0 0.0
      %922 = vmatprep.subr.mxu0 0.0
      %923 = vmatpush1.msra.mxu0 0.0
      %924 = vmatprep.subr.mxu0 0.0
      %925 = vmatpush1.msra.mxu0 0.0
      %926 = vmatprep.subr.mxu0 0.0
      %927 = vmatpush1.msra.mxu0 0.0
      %928 = vmatprep.subr.mxu0 0.0
      %929 = vmatpush1.msra.mxu0 0.0
      %930 = vmatprep.subr.mxu0 0.0
      %931 = vmatpush1.msra.mxu0 0.0
      %932 = vmatprep.subr.mxu0 0.0
      %933 = vmatpush1.msra.mxu0 0.0
      %934 = vmatprep.subr.mxu0 0.0
      %935 = vmatpush1.msra.mxu0 0.0
      %936 = vmatprep.subr.mxu0 0.0
      %937 = vmatpush1.msra.mxu0 0.0
      %938 = vmatprep.subr.mxu0 0.0
      %939 = vmatpush1.msra.mxu0 0.0
      %940 = vmatprep.subr.mxu0 0.0
      %941 = vmatpush1.msra.mxu0 0.0
      %942 = vmatprep.subr.mxu0 0.0
      %943 = vmatpush1.msra.mxu0 0.0
      %944 = vmatprep.subr.mxu0 0.0
      %945 = vmatpush1.msra.mxu0 0.0
      %946 = vmatprep.subr.mxu0 0.0
      %947 = vmatpush1.msra.mxu0 0.0
      %948 = vmatprep.subr.mxu0 0.0
      %949 = vmatpush1.msra.mxu0 0.0
      %950 = vmatprep.subr.mxu0 0.0
      %951 = vmatpush1.msra.mxu0 0.0
      %952 = vmatprep.subr.mxu0 0.0
      %953 = vmatpush1.msra.mxu0 0.0
      %954 = vmatprep.subr.mxu0 0.0
      %955 = vmatpush1.msra.mxu0 0.0
      %956 = vmatprep.subr.mxu0 0.0
      %957 = vmatpush1.msra.mxu0 0.0
      %958 = vmatprep.mubr.f32.mxu0 0.0
      %959 = vmatmul.mubr.f32.gmra.mrb[0].mxu0 %v892
      %v960 = vpop.f32.mrb[0].mxu0
      %v961 = vadd.f32 %v873, %v960
      %v962 = vpop.f32.mrb[0].mxu0
      %963 = vdwg.mxu0
      %964 = vmatprep.subr.mxu0 0.0
      %965 = vmatpush1.msra.mxu0 %v850
      %966 = vmatprep.subr.mxu0 0.0
      %967 = vmatpush1.msra.mxu0 %v851
      %968 = vmatprep.subr.mxu0 0.0
      %969 = vmatpush1.msra.mxu0 %v852
      %970 = vmatprep.subr.mxu0 0.0
      %971 = vmatpush1.msra.mxu0 %v853
      %972 = vmatprep.subr.mxu0 0.0
      %973 = vmatpush1.msra.mxu0 0.0
      %974 = vmatprep.subr.mxu0 0.0
      %975 = vmatpush1.msra.mxu0 0.0
      %976 = vmatprep.subr.mxu0 0.0
      %977 = vmatpush1.msra.mxu0 0.0
      %978 = vmatprep.subr.mxu0 0.0
      %979 = vmatpush1.msra.mxu0 0.0
      %980 = vmatprep.subr.mxu0 0.0
      %981 = vmatpush1.msra.mxu0 0.0
      %982 = vmatprep.subr.mxu0 0.0
      %983 = vmatpush1.msra.mxu0 0.0
      %984 = vmatprep.subr.mxu0 0.0
      %985 = vmatpush1.msra.mxu0 0.0
      %986 = vmatprep.subr.mxu0 0.0
      %987 = vmatpush1.msra.mxu0 0.0
      %988 = vmatprep.subr.mxu0 0.0
      %989 = vmatpush1.msra.mxu0 0.0
      %990 = vmatprep.subr.mxu0 0.0
      %991 = vmatpush1.msra.mxu0 0.0
      %992 = vmatprep.subr.mxu0 0.0
      %993 = vmatpush1.msra.mxu0 0.0
      %994 = vmatprep.subr.mxu0 0.0
      %995 = vmatpush1.msra.mxu0 0.0
      %996 = vmatprep.subr.mxu0 0.0
      %997 = vmatpush1.msra.mxu0 0.0
      %998 = vmatprep.subr.mxu0 0.0
      %999 = vmatpush1.msra.mxu0 0.0
      %1000 = vmatprep.subr.mxu0 0.0
      %1001 = vmatpush1.msra.mxu0 0.0
      %1002 = vmatprep.subr.mxu0 0.0
      %1003 = vmatpush1.msra.mxu0 0.0
      %1004 = vmatprep.subr.mxu0 0.0
      %1005 = vmatpush1.msra.mxu0 0.0
      %1006 = vmatprep.subr.mxu0 0.0
      %1007 = vmatpush1.msra.mxu0 0.0
      %1008 = vmatprep.subr.mxu0 0.0
      %1009 = vmatpush1.msra.mxu0 0.0
      %1010 = vmatprep.subr.mxu0 0.0
      %1011 = vmatpush1.msra.mxu0 0.0
      %1012 = vmatprep.subr.mxu0 0.0
      %1013 = vmatpush1.msra.mxu0 0.0
      %1014 = vmatprep.subr.mxu0 0.0
      %1015 = vmatpush1.msra.mxu0 0.0
      %1016 = vmatprep.subr.mxu0 0.0
      %1017 = vmatpush1.msra.mxu0 0.0
      %1018 = vmatprep.subr.mxu0 0.0
      %1019 = vmatpush1.msra.mxu0 0.0
      %1020 = vmatprep.subr.mxu0 0.0
      %1021 = vmatpush1.msra.mxu0 0.0
      %1022 = vmatprep.subr.mxu0 0.0
      %1023 = vmatpush1.msra.mxu0 0.0
      %1024 = vmatprep.subr.mxu0 0.0
      %1025 = vmatpush1.msra.mxu0 0.0
      %1026 = vmatprep.subr.mxu0 0.0
      %1027 = vmatpush1.msra.mxu0 0.0
      %1028 = vmatprep.mubr.f32.mxu0 0.0
      %1029 = vmatmul.mubr.f32.gmra.mrb[0].mxu0 %v892
      %v1030 = vpop.f32.mrb[0].mxu0
      %v1031 = vadd.f32 %v877, %v1030
      %v1032 = vpop.f32.mrb[0].mxu0
      %1033 = vdwg.mxu0
      %1034 = vmatprep.subr.mxu0 0.0
      %1035 = vmatpush1.msra.mxu0 %v854
      %1036 = vmatprep.subr.mxu0 0.0
      %1037 = vmatpush1.msra.mxu0 %v855
      %1038 = vmatprep.subr.mxu0 0.0
      %1039 = vmatpush1.msra.mxu0 %v856
      %1040 = vmatprep.subr.mxu0 0.0
      %1041 = vmatpush1.msra.mxu0 %v857
      %1042 = vmatprep.subr.mxu0 0.0
      %1043 = vmatpush1.msra.mxu0 0.0
      %1044 = vmatprep.subr.mxu0 0.0
      %1045 = vmatpush1.msra.mxu0 0.0
      %1046 = vmatprep.subr.mxu0 0.0
      %1047 = vmatpush1.msra.mxu0 0.0
      %1048 = vmatprep.subr.mxu0 0.0
      %1049 = vmatpush1.msra.mxu0 0.0
      %1050 = vmatprep.subr.mxu0 0.0
      %1051 = vmatpush1.msra.mxu0 0.0
      %1052 = vmatprep.subr.mxu0 0.0
      %1053 = vmatpush1.msra.mxu0 0.0
      %1054 = vmatprep.subr.mxu0 0.0
      %1055 = vmatpush1.msra.mxu0 0.0
      %1056 = vmatprep.subr.mxu0 0.0
      %1057 = vmatpush1.msra.mxu0 0.0
      %1058 = vmatprep.subr.mxu0 0.0
      %1059 = vmatpush1.msra.mxu0 0.0
      %1060 = vmatprep.subr.mxu0 0.0
      %1061 = vmatpush1.msra.mxu0 0.0
      %1062 = vmatprep.subr.mxu0 0.0
      %1063 = vmatpush1.msra.mxu0 0.0
      %1064 = vmatprep.subr.mxu0 0.0
      %1065 = vmatpush1.msra.mxu0 0.0
      %1066 = vmatprep.subr.mxu0 0.0
      %1067 = vmatpush1.msra.mxu0 0.0
      %1068 = vmatprep.subr.mxu0 0.0
      %1069 = vmatpush1.msra.mxu0 0.0
      %1070 = vmatprep.subr.mxu0 0.0
      %1071 = vmatpush1.msra.mxu0 0.0
      %1072 = vmatprep.subr.mxu0 0.0
      %1073 = vmatpush1.msra.mxu0 0.0
      %1074 = vmatprep.subr.mxu0 0.0
      %1075 = vmatpush1.msra.mxu0 0.0
      %1076 = vmatprep.subr.mxu0 0.0
      %1077 = vmatpush1.msra.mxu0 0.0
      %1078 = vmatprep.subr.mxu0 0.0
      %1079 = vmatpush1.msra.mxu0 0.0
      %1080 = vmatprep.subr.mxu0 0.0
      %1081 = vmatpush1.msra.mxu0 0.0
      %1082 = vmatprep.subr.mxu0 0.0
      %1083 = vmatpush1.msra.mxu0 0.0
      %1084 = vmatprep.subr.mxu0 0.0
      %1085 = vmatpush1.msra.mxu0 0.0
      %1086 = vmatprep.subr.mxu0 0.0
      %1087 = vmatpush1.msra.mxu0 0.0
      %1088 = vmatprep.subr.mxu0 0.0
      %1089 = vmatpush1.msra.mxu0 0.0
      %1090 = vmatprep.subr.mxu0 0.0
      %1091 = vmatpush1.msra.mxu0 0.0
      %1092 = vmatprep.subr.mxu0 0.0
      %1093 = vmatpush1.msra.mxu0 0.0
      %1094 = vmatprep.subr.mxu0 0.0
      %1095 = vmatpush1.msra.mxu0 0.0
      %1096 = vmatprep.subr.mxu0 0.0
      %1097 = vmatpush1.msra.mxu0 0.0
      %1098 = vmatprep.mubr.f32.mxu0 0.0
      %1099 = vmatmul.mubr.f32.gmra.mrb[0].mxu0 %v892
      %v1100 = vpop.f32.mrb[0].mxu0
      %v1101 = vadd.f32 %v881, %v1100
      %v1102 = vpop.f32.mrb[0].mxu0
      %1103 = vdwg.mxu0
      %1104 = vmatprep.subr.mxu0 0.0
      %1105 = vmatpush1.msra.mxu0 %v858
      %1106 = vmatprep.subr.mxu0 0.0
      %1107 = vmatpush1.msra.mxu0 %v859
      %1108 = vmatprep.subr.mxu0 0.0
      %1109 = vmatpush1.msra.mxu0 %v860
      %1110 = vmatprep.subr.mxu0 0.0
      %1111 = vmatpush1.msra.mxu0 %v861
      %1112 = vmatprep.subr.mxu0 0.0
      %1113 = vmatpush1.msra.mxu0 0.0
      %1114 = vmatprep.subr.mxu0 0.0
      %1115 = vmatpush1.msra.mxu0 0.0
      %1116 = vmatprep.subr.mxu0 0.0
      %1117 = vmatpush1.msra.mxu0 0.0
      %1118 = vmatprep.subr.mxu0 0.0
      %1119 = vmatpush1.msra.mxu0 0.0
      %1120 = vmatprep.subr.mxu0 0.0
      %1121 = vmatpush1.msra.mxu0 0.0
      %1122 = vmatprep.subr.mxu0 0.0
      %1123 = vmatpush1.msra.mxu0 0.0
      %1124 = vmatprep.subr.mxu0 0.0
      %1125 = vmatpush1.msra.mxu0 0.0
      %1126 = vmatprep.subr.mxu0 0.0
      %1127 = vmatpush1.msra.mxu0 0.0
      %1128 = vmatprep.subr.mxu0 0.0
      %1129 = vmatpush1.msra.mxu0 0.0
      %1130 = vmatprep.subr.mxu0 0.0
      %1131 = vmatpush1.msra.mxu0 0.0
      %1132 = vmatprep.subr.mxu0 0.0
      %1133 = vmatpush1.msra.mxu0 0.0
      %1134 = vmatprep.subr.mxu0 0.0
      %1135 = vmatpush1.msra.mxu0 0.0
      %1136 = vmatprep.subr.mxu0 0.0
      %1137 = vmatpush1.msra.mxu0 0.0
      %1138 = vmatprep.subr.mxu0 0.0
      %1139 = vmatpush1.msra.mxu0 0.0
      %1140 = vmatprep.subr.mxu0 0.0
      %1141 = vmatpush1.msra.mxu0 0.0
      %1142 = vmatprep.subr.mxu0 0.0
      %1143 = vmatpush1.msra.mxu0 0.0
      %1144 = vmatprep.subr.mxu0 0.0
      %1145 = vmatpush1.msra.mxu0 0.0
      %1146 = vmatprep.subr.mxu0 0.0
      %1147 = vmatpush1.msra.mxu0 0.0
      %1148 = vmatprep.subr.mxu0 0.0
      %1149 = vmatpush1.msra.mxu0 0.0
      %1150 = vmatprep.subr.mxu0 0.0
      %1151 = vmatpush1.msra.mxu0 0.0
      %1152 = vmatprep.subr.mxu0 0.0
      %1153 = vmatpush1.msra.mxu0 0.0
      %1154 = vmatprep.subr.mxu0 0.0
      %1155 = vmatpush1.msra.mxu0 0.0
      %1156 = vmatprep.subr.mxu0 0.0
      %1157 = vmatpush1.msra.mxu0 0.0
      %1158 = vmatprep.subr.mxu0 0.0
      %1159 = vmatpush1.msra.mxu0 0.0
      %1160 = vmatprep.subr.mxu0 0.0
      %1161 = vmatpush1.msra.mxu0 0.0
      %1162 = vmatprep.subr.mxu0 0.0
      %1163 = vmatpush1.msra.mxu0 0.0
      %1164 = vmatprep.subr.mxu0 0.0
      %1165 = vmatpush1.msra.mxu0 0.0
      %1166 = vmatprep.subr.mxu0 0.0
      %1167 = vmatpush1.msra.mxu0 0.0
      %1168 = vmatprep.mubr.f32.mxu0 0.0
      %1169 = vmatmul.mubr.f32.gmra.mrb[0].mxu0 %v892
      %v1170 = vpop.f32.mrb[0].mxu0
      %v1171 = vadd.f32 %v885, %v1170
      %v1172 = vpop.f32.mrb[0].mxu0
      %1173 = vdwg.mxu0
      %v1174 = vld [vmem:[%s6] sm:$0xff]
      %v1175 = vld [vmem:[%s6 + $0x8] sm:$0xff]
      %v1176 = vld [vmem:[%s6 + $0x10] sm:$0xff]
      %v1177 = vld [vmem:[%s6 + $0x18] sm:$0xff]
      %v1178 = vld [vmem:[%s6 + $0x20] sm:$0xff]
      %v1179 = vld [vmem:[%s6 + $0x28] sm:$0xff]
      %v1180 = vld [vmem:[%s6 + $0x30] sm:$0xff]
      %v1181 = vld [vmem:[%s6 + $0x38] sm:$0xff]
      %v1182 = vld [vmem:[%s6 + $0x40] sm:$0xff]
      %v1183 = vld [vmem:[%s6 + $0x48] sm:$0xff]
      %v1184 = vld [vmem:[%s6 + $0x50] sm:$0xff]
      %v1185 = vld [vmem:[%s6 + $0x58] sm:$0xff]
      %v1186 = vld [vmem:[%s6 + $0x60] sm:$0xff]
      %v1187 = vld [vmem:[%s6 + $0x68] sm:$0xff]
      %v1188 = vld [vmem:[%s6 + $0x70] sm:$0xff]
      %v1189 = vld [vmem:[%s6 + $0x78] sm:$0xff]
      %v1190 = vld [vmem:[%s9] sm:$0x1]
      %v1191 = vld [vmem:[%s9 + $0x1] sm:$0x1]
      %v1192 = vld [vmem:[%s9 + $0x2] sm:$0x1]
      %v1193 = vld [vmem:[%s9 + $0x3] sm:$0x1]
      %v1198 = vlaneseq
      %v1199 = vshrl.u32 %v1198, 7
      %v1200 = vsub.s32 0, %v1199
      %v1201 = vrot.slane %v1190, %v1200
      %v1202 = vlaneseq
      %v1203 = vshrl.u32 %v1202, 7
      %v1204 = vsub.s32 0, %v1203
      %v1205 = vrot.slane %v1191, %v1204
      %v1206 = vlaneseq
      %v1207 = vshrl.u32 %v1206, 7
      %v1208 = vsub.s32 0, %v1207
      %v1209 = vrot.slane %v1192, %v1208
      %v1210 = vlaneseq
      %v1211 = vshrl.u32 %v1210, 7
      %v1212 = vsub.s32 0, %v1211
      %v1213 = vrot.slane %v1193, %v1212
      %1218 = vmatprep.subr.mxu0 0.0
      %1219 = vmatpush1.msra.mxu0 %v1174
      %1220 = vmatprep.subr.mxu0 0.0
      %1221 = vmatpush1.msra.mxu0 %v1175
      %1222 = vmatprep.subr.mxu0 0.0
      %1223 = vmatpush1.msra.mxu0 %v1176
      %1224 = vmatprep.subr.mxu0 0.0
      %1225 = vmatpush1.msra.mxu0 %v1177
      %1226 = vmatprep.subr.mxu0 0.0
      %1227 = vmatpush1.msra.mxu0 0.0
      %1228 = vmatprep.subr.mxu0 0.0
      %1229 = vmatpush1.msra.mxu0 0.0
      %1230 = vmatprep.subr.mxu0 0.0
      %1231 = vmatpush1.msra.mxu0 0.0
      %1232 = vmatprep.subr.mxu0 0.0
      %1233 = vmatpush1.msra.mxu0 0.0
      %1234 = vmatprep.subr.mxu0 0.0
      %1235 = vmatpush1.msra.mxu0 0.0
      %1236 = vmatprep.subr.mxu0 0.0
      %1237 = vmatpush1.msra.mxu0 0.0
      %1238 = vmatprep.subr.mxu0 0.0
      %1239 = vmatpush1.msra.mxu0 0.0
      %1240 = vmatprep.subr.mxu0 0.0
      %1241 = vmatpush1.msra.mxu0 0.0
      %1242 = vmatprep.subr.mxu0 0.0
      %1243 = vmatpush1.msra.mxu0 0.0
      %1244 = vmatprep.subr.mxu0 0.0
      %1245 = vmatpush1.msra.mxu0 0.0
      %1246 = vmatprep.subr.mxu0 0.0
      %1247 = vmatpush1.msra.mxu0 0.0
      %1248 = vmatprep.subr.mxu0 0.0
      %1249 = vmatpush1.msra.mxu0 0.0
      %1250 = vmatprep.subr.mxu0 0.0
      %1251 = vmatpush1.msra.mxu0 0.0
      %1252 = vmatprep.subr.mxu0 0.0
      %1253 = vmatpush1.msra.mxu0 0.0
      %1254 = vmatprep.subr.mxu0 0.0
      %1255 = vmatpush1.msra.mxu0 0.0
      %1256 = vmatprep.subr.mxu0 0.0
      %1257 = vmatpush1.msra.mxu0 0.0
      %1258 = vmatprep.subr.mxu0 0.0
      %1259 = vmatpush1.msra.mxu0 0.0
      %1260 = vmatprep.subr.mxu0 0.0
      %1261 = vmatpush1.msra.mxu0 0.0
      %1262 = vmatprep.subr.mxu0 0.0
      %1263 = vmatpush1.msra.mxu0 0.0
      %1264 = vmatprep.subr.mxu0 0.0
      %1265 = vmatpush1.msra.mxu0 0.0
      %1266 = vmatprep.subr.mxu0 0.0
      %1267 = vmatpush1.msra.mxu0 0.0
      %1268 = vmatprep.subr.mxu0 0.0
      %1269 = vmatpush1.msra.mxu0 0.0
      %1270 = vmatprep.subr.mxu0 0.0
      %1271 = vmatpush1.msra.mxu0 0.0
      %1272 = vmatprep.subr.mxu0 0.0
      %1273 = vmatpush1.msra.mxu0 0.0
      %1274 = vmatprep.subr.mxu0 0.0
      %1275 = vmatpush1.msra.mxu0 0.0
      %1276 = vmatprep.subr.mxu0 0.0
      %1277 = vmatpush1.msra.mxu0 0.0
      %1278 = vmatprep.subr.mxu0 0.0
      %1279 = vmatpush1.msra.mxu0 0.0
      %1280 = vmatprep.subr.mxu0 0.0
      %1281 = vmatpush1.msra.mxu0 0.0
      %1282 = vmatprep.mubr.f32.mxu0 0.0
      %1283 = vmatmul.mubr.f32.gmra.mrb[0].mxu0 %v892
      %v1284 = vpop.f32.mrb[0].mxu0
      %v1285 = vadd.f32 %v1201, %v1284
      %v1286 = vpop.f32.mrb[0].mxu0
      %1287 = vdwg.mxu0
      %1288 = vmatprep.subr.mxu0 0.0
      %1289 = vmatpush1.msra.mxu0 %v1178
      %1290 = vmatprep.subr.mxu0 0.0
      %1291 = vmatpush1.msra.mxu0 %v1179
      %1292 = vmatprep.subr.mxu0 0.0
      %1293 = vmatpush1.msra.mxu0 %v1180
      %1294 = vmatprep.subr.mxu0 0.0
      %1295 = vmatpush1.msra.mxu0 %v1181
      %1296 = vmatprep.subr.mxu0 0.0
      %1297 = vmatpush1.msra.mxu0 0.0
      %1298 = vmatprep.subr.mxu0 0.0
      %1299 = vmatpush1.msra.mxu0 0.0
      %1300 = vmatprep.subr.mxu0 0.0
      %1301 = vmatpush1.msra.mxu0 0.0
      %1302 = vmatprep.subr.mxu0 0.0
      %1303 = vmatpush1.msra.mxu0 0.0
      %1304 = vmatprep.subr.mxu0 0.0
      %1305 = vmatpush1.msra.mxu0 0.0
      %1306 = vmatprep.subr.mxu0 0.0
      %1307 = vmatpush1.msra.mxu0 0.0
      %1308 = vmatprep.subr.mxu0 0.0
      %1309 = vmatpush1.msra.mxu0 0.0
      %1310 = vmatprep.subr.mxu0 0.0
      %1311 = vmatpush1.msra.mxu0 0.0
      %1312 = vmatprep.subr.mxu0 0.0
      %1313 = vmatpush1.msra.mxu0 0.0
      %1314 = vmatprep.subr.mxu0 0.0
      %1315 = vmatpush1.msra.mxu0 0.0
      %1316 = vmatprep.subr.mxu0 0.0
      %1317 = vmatpush1.msra.mxu0 0.0
      %1318 = vmatprep.subr.mxu0 0.0
      %1319 = vmatpush1.msra.mxu0 0.0
      %1320 = vmatprep.subr.mxu0 0.0
      %1321 = vmatpush1.msra.mxu0 0.0
      %1322 = vmatprep.subr.mxu0 0.0
      %1323 = vmatpush1.msra.mxu0 0.0
      %1324 = vmatprep.subr.mxu0 0.0
      %1325 = vmatpush1.msra.mxu0 0.0
      %1326 = vmatprep.subr.mxu0 0.0
      %1327 = vmatpush1.msra.mxu0 0.0
      %1328 = vmatprep.subr.mxu0 0.0
      %1329 = vmatpush1.msra.mxu0 0.0
      %1330 = vmatprep.subr.mxu0 0.0
      %1331 = vmatpush1.msra.mxu0 0.0
      %1332 = vmatprep.subr.mxu0 0.0
      %1333 = vmatpush1.msra.mxu0 0.0
      %1334 = vmatprep.subr.mxu0 0.0
      %1335 = vmatpush1.msra.mxu0 0.0
      %1336 = vmatprep.subr.mxu0 0.0
      %1337 = vmatpush1.msra.mxu0 0.0
      %1338 = vmatprep.subr.mxu0 0.0
      %1339 = vmatpush1.msra.mxu0 0.0
      %1340 = vmatprep.subr.mxu0 0.0
      %1341 = vmatpush1.msra.mxu0 0.0
      %1342 = vmatprep.subr.mxu0 0.0
      %1343 = vmatpush1.msra.mxu0 0.0
      %1344 = vmatprep.subr.mxu0 0.0
      %1345 = vmatpush1.msra.mxu0 0.0
      %1346 = vmatprep.subr.mxu0 0.0
      %1347 = vmatpush1.msra.mxu0 0.0
      %1348 = vmatprep.subr.mxu0 0.0
      %1349 = vmatpush1.msra.mxu0 0.0
      %1350 = vmatprep.subr.mxu0 0.0
      %1351 = vmatpush1.msra.mxu0 0.0
      %1352 = vmatprep.mubr.f32.mxu0 0.0
      %1353 = vmatmul.mubr.f32.gmra.mrb[0].mxu0 %v892
      %v1354 = vpop.f32.mrb[0].mxu0
      %v1355 = vadd.f32 %v1205, %v1354
      %v1356 = vpop.f32.mrb[0].mxu0
      %1357 = vdwg.mxu0
      %1358 = vmatprep.subr.mxu0 0.0
      %1359 = vmatpush1.msra.mxu0 %v1182
      %1360 = vmatprep.subr.mxu0 0.0
      %1361 = vmatpush1.msra.mxu0 %v1183
      %1362 = vmatprep.subr.mxu0 0.0
      %1363 = vmatpush1.msra.mxu0 %v1184
      %1364 = vmatprep.subr.mxu0 0.0
      %1365 = vmatpush1.msra.mxu0 %v1185
      %1366 = vmatprep.subr.mxu0 0.0
      %1367 = vmatpush1.msra.mxu0 0.0
      %1368 = vmatprep.subr.mxu0 0.0
      %1369 = vmatpush1.msra.mxu0 0.0
      %1370 = vmatprep.subr.mxu0 0.0
      %1371 = vmatpush1.msra.mxu0 0.0
      %1372 = vmatprep.subr.mxu0 0.0
      %1373 = vmatpush1.msra.mxu0 0.0
      %1374 = vmatprep.subr.mxu0 0.0
      %1375 = vmatpush1.msra.mxu0 0.0
      %1376 = vmatprep.subr.mxu0 0.0
      %1377 = vmatpush1.msra.mxu0 0.0
      %1378 = vmatprep.subr.mxu0 0.0
      %1379 = vmatpush1.msra.mxu0 0.0
      %1380 = vmatprep.subr.mxu0 0.0
      %1381 = vmatpush1.msra.mxu0 0.0
      %1382 = vmatprep.subr.mxu0 0.0
      %1383 = vmatpush1.msra.mxu0 0.0
      %1384 = vmatprep.subr.mxu0 0.0
      %1385 = vmatpush1.msra.mxu0 0.0
      %1386 = vmatprep.subr.mxu0 0.0
      %1387 = vmatpush1.msra.mxu0 0.0
      %1388 = vmatprep.subr.mxu0 0.0
      %1389 = vmatpush1.msra.mxu0 0.0
      %1390 = vmatprep.subr.mxu0 0.0
      %1391 = vmatpush1.msra.mxu0 0.0
      %1392 = vmatprep.subr.mxu0 0.0
      %1393 = vmatpush1.msra.mxu0 0.0
      %1394 = vmatprep.subr.mxu0 0.0
      %1395 = vmatpush1.msra.mxu0 0.0
      %1396 = vmatprep.subr.mxu0 0.0
      %1397 = vmatpush1.msra.mxu0 0.0
      %1398 = vmatprep.subr.mxu0 0.0
      %1399 = vmatpush1.msra.mxu0 0.0
      %1400 = vmatprep.subr.mxu0 0.0
      %1401 = vmatpush1.msra.mxu0 0.0
      %1402 = vmatprep.subr.mxu0 0.0
      %1403 = vmatpush1.msra.mxu0 0.0
      %1404 = vmatprep.subr.mxu0 0.0
      %1405 = vmatpush1.msra.mxu0 0.0
      %1406 = vmatprep.subr.mxu0 0.0
      %1407 = vmatpush1.msra.mxu0 0.0
      %1408 = vmatprep.subr.mxu0 0.0
      %1409 = vmatpush1.msra.mxu0 0.0
      %1410 = vmatprep.subr.mxu0 0.0
      %1411 = vmatpush1.msra.mxu0 0.0
      %1412 = vmatprep.subr.mxu0 0.0
      %1413 = vmatpush1.msra.mxu0 0.0
      %1414 = vmatprep.subr.mxu0 0.0
      %1415 = vmatpush1.msra.mxu0 0.0
      %1416 = vmatprep.subr.mxu0 0.0
      %1417 = vmatpush1.msra.mxu0 0.0
      %1418 = vmatprep.subr.mxu0 0.0
      %1419 = vmatpush1.msra.mxu0 0.0
      %1420 = vmatprep.subr.mxu0 0.0
      %1421 = vmatpush1.msra.mxu0 0.0
      %1422 = vmatprep.mubr.f32.mxu0 0.0
      %1423 = vmatmul.mubr.f32.gmra.mrb[0].mxu0 %v892
      %v1424 = vpop.f32.mrb[0].mxu0
      %v1425 = vadd.f32 %v1209, %v1424
      %v1426 = vpop.f32.mrb[0].mxu0
      %1427 = vdwg.mxu0
      %1428 = vmatprep.subr.mxu0 0.0
      %1429 = vmatpush1.msra.mxu0 %v1186
      %1430 = vmatprep.subr.mxu0 0.0
      %1431 = vmatpush1.msra.mxu0 %v1187
      %1432 = vmatprep.subr.mxu0 0.0
      %1433 = vmatpush1.msra.mxu0 %v1188
      %1434 = vmatprep.subr.mxu0 0.0
      %1435 = vmatpush1.msra.mxu0 %v1189
      %1436 = vmatprep.subr.mxu0 0.0
      %1437 = vmatpush1.msra.mxu0 0.0
      %1438 = vmatprep.subr.mxu0 0.0
      %1439 = vmatpush1.msra.mxu0 0.0
      %1440 = vmatprep.subr.mxu0 0.0
      %1441 = vmatpush1.msra.mxu0 0.0
      %1442 = vmatprep.subr.mxu0 0.0
      %1443 = vmatpush1.msra.mxu0 0.0
      %1444 = vmatprep.subr.mxu0 0.0
      %1445 = vmatpush1.msra.mxu0 0.0
      %1446 = vmatprep.subr.mxu0 0.0
      %1447 = vmatpush1.msra.mxu0 0.0
      %1448 = vmatprep.subr.mxu0 0.0
      %1449 = vmatpush1.msra.mxu0 0.0
      %1450 = vmatprep.subr.mxu0 0.0
      %1451 = vmatpush1.msra.mxu0 0.0
      %1452 = vmatprep.subr.mxu0 0.0
      %1453 = vmatpush1.msra.mxu0 0.0
      %1454 = vmatprep.subr.mxu0 0.0
      %1455 = vmatpush1.msra.mxu0 0.0
      %1456 = vmatprep.subr.mxu0 0.0
      %1457 = vmatpush1.msra.mxu0 0.0
      %1458 = vmatprep.subr.mxu0 0.0
      %1459 = vmatpush1.msra.mxu0 0.0
      %1460 = vmatprep.subr.mxu0 0.0
      %1461 = vmatpush1.msra.mxu0 0.0
      %1462 = vmatprep.subr.mxu0 0.0
      %1463 = vmatpush1.msra.mxu0 0.0
      %1464 = vmatprep.subr.mxu0 0.0
      %1465 = vmatpush1.msra.mxu0 0.0
      %1466 = vmatprep.subr.mxu0 0.0
      %1467 = vmatpush1.msra.mxu0 0.0
      %1468 = vmatprep.subr.mxu0 0.0
      %1469 = vmatpush1.msra.mxu0 0.0
      %1470 = vmatprep.subr.mxu0 0.0
      %1471 = vmatpush1.msra.mxu0 0.0
      %1472 = vmatprep.subr.mxu0 0.0
      %1473 = vmatpush1.msra.mxu0 0.0
      %1474 = vmatprep.subr.mxu0 0.0
      %1475 = vmatpush1.msra.mxu0 0.0
      %1476 = vmatprep.subr.mxu0 0.0
      %1477 = vmatpush1.msra.mxu0 0.0
      %1478 = vmatprep.subr.mxu0 0.0
      %1479 = vmatpush1.msra.mxu0 0.0
      %1480 = vmatprep.subr.mxu0 0.0
      %1481 = vmatpush1.msra.mxu0 0.0
      %1482 = vmatprep.subr.mxu0 0.0
      %1483 = vmatpush1.msra.mxu0 0.0
      %1484 = vmatprep.subr.mxu0 0.0
      %1485 = vmatpush1.msra.mxu0 0.0
      %1486 = vmatprep.subr.mxu0 0.0
      %1487 = vmatpush1.msra.mxu0 0.0
      %1488 = vmatprep.subr.mxu0 0.0
      %1489 = vmatpush1.msra.mxu0 0.0
      %1490 = vmatprep.subr.mxu0 0.0
      %1491 = vmatpush1.msra.mxu0 0.0
      %1492 = vmatprep.mubr.f32.mxu0 0.0
      %1493 = vmatmul.mubr.f32.gmra.mrb[0].mxu0 %v892
      %v1494 = vpop.f32.mrb[0].mxu0
      %v1495 = vadd.f32 %v1213, %v1494
      %v1496 = vpop.f32.mrb[0].mxu0
      %1497 = vdwg.mxu0
      %v1498 = vld [vmem:[%s7] sm:$0xff]
      %v1499 = vld [vmem:[%s7 + $0x8] sm:$0xff]
      %v1500 = vld [vmem:[%s7 + $0x10] sm:$0xff]
      %v1501 = vld [vmem:[%s7 + $0x18] sm:$0xff]
      %v1502 = vld [vmem:[%s7 + $0x20] sm:$0xff]
      %v1503 = vld [vmem:[%s7 + $0x28] sm:$0xff]
      %v1504 = vld [vmem:[%s7 + $0x30] sm:$0xff]
      %v1505 = vld [vmem:[%s7 + $0x38] sm:$0xff]
      %v1506 = vld [vmem:[%s7 + $0x40] sm:$0xff]
      %v1507 = vld [vmem:[%s7 + $0x48] sm:$0xff]
      %v1508 = vld [vmem:[%s7 + $0x50] sm:$0xff]
      %v1509 = vld [vmem:[%s7 + $0x58] sm:$0xff]
      %v1510 = vld [vmem:[%s7 + $0x60] sm:$0xff]
      %v1511 = vld [vmem:[%s7 + $0x68] sm:$0xff]
      %v1512 = vld [vmem:[%s7 + $0x70] sm:$0xff]
      %v1513 = vld [vmem:[%s7 + $0x78] sm:$0xff]
      %v1514 = vld [vmem:[%s10] sm:$0x1]
      %v1515 = vld [vmem:[%s10 + $0x1] sm:$0x1]
      %v1516 = vld [vmem:[%s10 + $0x2] sm:$0x1]
      %v1517 = vld [vmem:[%s10 + $0x3] sm:$0x1]
      %v1522 = vlaneseq
      %v1523 = vshrl.u32 %v1522, 7
      %v1524 = vsub.s32 0, %v1523
      %v1525 = vrot.slane %v1514, %v1524
      %v1526 = vlaneseq
      %v1527 = vshrl.u32 %v1526, 7
      %v1528 = vsub.s32 0, %v1527
      %v1529 = vrot.slane %v1515, %v1528
      %v1530 = vlaneseq
      %v1531 = vshrl.u32 %v1530, 7
      %v1532 = vsub.s32 0, %v1531
      %v1533 = vrot.slane %v1516, %v1532
      %v1534 = vlaneseq
      %v1535 = vshrl.u32 %v1534, 7
      %v1536 = vsub.s32 0, %v1535
      %v1537 = vrot.slane %v1517, %v1536
      %1542 = vmatprep.subr.mxu0 0.0
      %1543 = vmatpush1.msra.mxu0 %v1498
      %1544 = vmatprep.subr.mxu0 0.0
      %1545 = vmatpush1.msra.mxu0 %v1499
      %1546 = vmatprep.subr.mxu0 0.0
      %1547 = vmatpush1.msra.mxu0 %v1500
      %1548 = vmatprep.subr.mxu0 0.0
      %1549 = vmatpush1.msra.mxu0 %v1501
      %1550 = vmatprep.subr.mxu0 0.0
      %1551 = vmatpush1.msra.mxu0 0.0
      %1552 = vmatprep.subr.mxu0 0.0
      %1553 = vmatpush1.msra.mxu0 0.0
      %1554 = vmatprep.subr.mxu0 0.0
      %1555 = vmatpush1.msra.mxu0 0.0
      %1556 = vmatprep.subr.mxu0 0.0
      %1557 = vmatpush1.msra.mxu0 0.0
      %1558 = vmatprep.subr.mxu0 0.0
      %1559 = vmatpush1.msra.mxu0 0.0
      %1560 = vmatprep.subr.mxu0 0.0
      %1561 = vmatpush1.msra.mxu0 0.0
      %1562 = vmatprep.subr.mxu0 0.0
      %1563 = vmatpush1.msra.mxu0 0.0
      %1564 = vmatprep.subr.mxu0 0.0
      %1565 = vmatpush1.msra.mxu0 0.0
      %1566 = vmatprep.subr.mxu0 0.0
      %1567 = vmatpush1.msra.mxu0 0.0
      %1568 = vmatprep.subr.mxu0 0.0
      %1569 = vmatpush1.msra.mxu0 0.0
      %1570 = vmatprep.subr.mxu0 0.0
      %1571 = vmatpush1.msra.mxu0 0.0
      %1572 = vmatprep.subr.mxu0 0.0
      %1573 = vmatpush1.msra.mxu0 0.0
      %1574 = vmatprep.subr.mxu0 0.0
      %1575 = vmatpush1.msra.mxu0 0.0
      %1576 = vmatprep.subr.mxu0 0.0
      %1577 = vmatpush1.msra.mxu0 0.0
      %1578 = vmatprep.subr.mxu0 0.0
      %1579 = vmatpush1.msra.mxu0 0.0
      %1580 = vmatprep.subr.mxu0 0.0
      %1581 = vmatpush1.msra.mxu0 0.0
      %1582 = vmatprep.subr.mxu0 0.0
      %1583 = vmatpush1.msra.mxu0 0.0
      %1584 = vmatprep.subr.mxu0 0.0
      %1585 = vmatpush1.msra.mxu0 0.0
      %1586 = vmatprep.subr.mxu0 0.0
      %1587 = vmatpush1.msra.mxu0 0.0
      %1588 = vmatprep.subr.mxu0 0.0
      %1589 = vmatpush1.msra.mxu0 0.0
      %1590 = vmatprep.subr.mxu0 0.0
      %1591 = vmatpush1.msra.mxu0 0.0
      %1592 = vmatprep.subr.mxu0 0.0
      %1593 = vmatpush1.msra.mxu0 0.0
      %1594 = vmatprep.subr.mxu0 0.0
      %1595 = vmatpush1.msra.mxu0 0.0
      %1596 = vmatprep.subr.mxu0 0.0
      %1597 = vmatpush1.msra.mxu0 0.0
      %1598 = vmatprep.subr.mxu0 0.0
      %1599 = vmatpush1.msra.mxu0 0.0
      %1600 = vmatprep.subr.mxu0 0.0
      %1601 = vmatpush1.msra.mxu0 0.0
      %1602 = vmatprep.subr.mxu0 0.0
      %1603 = vmatpush1.msra.mxu0 0.0
      %1604 = vmatprep.subr.mxu0 0.0
      %1605 = vmatpush1.msra.mxu0 0.0
      %1606 = vmatprep.mubr.f32.mxu0 0.0
      %1607 = vmatmul.mubr.f32.gmra.mrb[0].mxu0 %v892
      %v1608 = vpop.f32.mrb[0].mxu0
      %v1609 = vadd.f32 %v1525, %v1608
      %v1610 = vpop.f32.mrb[0].mxu0
      %1611 = vdwg.mxu0
      %1612 = vmatprep.subr.mxu0 0.0
      %1613 = vmatpush1.msra.mxu0 %v1502
      %1614 = vmatprep.subr.mxu0 0.0
      %1615 = vmatpush1.msra.mxu0 %v1503
      %1616 = vmatprep.subr.mxu0 0.0
      %1617 = vmatpush1.msra.mxu0 %v1504
      %1618 = vmatprep.subr.mxu0 0.0
      %1619 = vmatpush1.msra.mxu0 %v1505
      %1620 = vmatprep.subr.mxu0 0.0
      %1621 = vmatpush1.msra.mxu0 0.0
      %1622 = vmatprep.subr.mxu0 0.0
      %1623 = vmatpush1.msra.mxu0 0.0
      %1624 = vmatprep.subr.mxu0 0.0
      %1625 = vmatpush1.msra.mxu0 0.0
      %1626 = vmatprep.subr.mxu0 0.0
      %1627 = vmatpush1.msra.mxu0 0.0
      %1628 = vmatprep.subr.mxu0 0.0
      %1629 = vmatpush1.msra.mxu0 0.0
      %1630 = vmatprep.subr.mxu0 0.0
      %1631 = vmatpush1.msra.mxu0 0.0
      %1632 = vmatprep.subr.mxu0 0.0
      %1633 = vmatpush1.msra.mxu0 0.0
      %1634 = vmatprep.subr.mxu0 0.0
      %1635 = vmatpush1.msra.mxu0 0.0
      %1636 = vmatprep.subr.mxu0 0.0
      %1637 = vmatpush1.msra.mxu0 0.0
      %1638 = vmatprep.subr.mxu0 0.0
      %1639 = vmatpush1.msra.mxu0 0.0
      %1640 = vmatprep.subr.mxu0 0.0
      %1641 = vmatpush1.msra.mxu0 0.0
      %1642 = vmatprep.subr.mxu0 0.0
      %1643 = vmatpush1.msra.mxu0 0.0
      %1644 = vmatprep.subr.mxu0 0.0
      %1645 = vmatpush1.msra.mxu0 0.0
      %1646 = vmatprep.subr.mxu0 0.0
      %1647 = vmatpush1.msra.mxu0 0.0
      %1648 = vmatprep.subr.mxu0 0.0
      %1649 = vmatpush1.msra.mxu0 0.0
      %1650 = vmatprep.subr.mxu0 0.0
      %1651 = vmatpush1.msra.mxu0 0.0
      %1652 = vmatprep.subr.mxu0 0.0
      %1653 = vmatpush1.msra.mxu0 0.0
      %1654 = vmatprep.subr.mxu0 0.0
      %1655 = vmatpush1.msra.mxu0 0.0
      %1656 = vmatprep.subr.mxu0 0.0
      %1657 = vmatpush1.msra.mxu0 0.0
      %1658 = vmatprep.subr.mxu0 0.0
      %1659 = vmatpush1.msra.mxu0 0.0
      %1660 = vmatprep.subr.mxu0 0.0
      %1661 = vmatpush1.msra.mxu0 0.0
      %1662 = vmatprep.subr.mxu0 0.0
      %1663 = vmatpush1.msra.mxu0 0.0
      %1664 = vmatprep.subr.mxu0 0.0
      %1665 = vmatpush1.msra.mxu0 0.0
      %1666 = vmatprep.subr.mxu0 0.0
      %1667 = vmatpush1.msra.mxu0 0.0
      %1668 = vmatprep.subr.mxu0 0.0
      %1669 = vmatpush1.msra.mxu0 0.0
      %1670 = vmatprep.subr.mxu0 0.0
      %1671 = vmatpush1.msra.mxu0 0.0
      %1672 = vmatprep.subr.mxu0 0.0
      %1673 = vmatpush1.msra.mxu0 0.0
      %1674 = vmatprep.subr.mxu0 0.0
      %1675 = vmatpush1.msra.mxu0 0.0
      %1676 = vmatprep.mubr.f32.mxu0 0.0
      %1677 = vmatmul.mubr.f32.gmra.mrb[0].mxu0 %v892
      %v1678 = vpop.f32.mrb[0].mxu0
      %v1679 = vadd.f32 %v1529, %v1678
      %v1680 = vpop.f32.mrb[0].mxu0
      %1681 = vdwg.mxu0
      %1682 = vmatprep.subr.mxu0 0.0
      %1683 = vmatpush1.msra.mxu0 %v1506
      %1684 = vmatprep.subr.mxu0 0.0
      %1685 = vmatpush1.msra.mxu0 %v1507
      %1686 = vmatprep.subr.mxu0 0.0
      %1687 = vmatpush1.msra.mxu0 %v1508
      %1688 = vmatprep.subr.mxu0 0.0
      %1689 = vmatpush1.msra.mxu0 %v1509
      %1690 = vmatprep.subr.mxu0 0.0
      %1691 = vmatpush1.msra.mxu0 0.0
      %1692 = vmatprep.subr.mxu0 0.0
      %1693 = vmatpush1.msra.mxu0 0.0
      %1694 = vmatprep.subr.mxu0 0.0
      %1695 = vmatpush1.msra.mxu0 0.0
      %1696 = vmatprep.subr.mxu0 0.0
      %1697 = vmatpush1.msra.mxu0 0.0
      %1698 = vmatprep.subr.mxu0 0.0
      %1699 = vmatpush1.msra.mxu0 0.0
      %1700 = vmatprep.subr.mxu0 0.0
      %1701 = vmatpush1.msra.mxu0 0.0
      %1702 = vmatprep.subr.mxu0 0.0
      %1703 = vmatpush1.msra.mxu0 0.0
      %1704 = vmatprep.subr.mxu0 0.0
      %1705 = vmatpush1.msra.mxu0 0.0
      %1706 = vmatprep.subr.mxu0 0.0
      %1707 = vmatpush1.msra.mxu0 0.0
      %1708 = vmatprep.subr.mxu0 0.0
      %1709 = vmatpush1.msra.mxu0 0.0
      %1710 = vmatprep.subr.mxu0 0.0
      %1711 = vmatpush1.msra.mxu0 0.0
      %1712 = vmatprep.subr.mxu0 0.0
      %1713 = vmatpush1.msra.mxu0 0.0
      %1714 = vmatprep.subr.mxu0 0.0
      %1715 = vmatpush1.msra.mxu0 0.0
      %1716 = vmatprep.subr.mxu0 0.0
      %1717 = vmatpush1.msra.mxu0 0.0
      %1718 = vmatprep.subr.mxu0 0.0
      %1719 = vmatpush1.msra.mxu0 0.0
      %1720 = vmatprep.subr.mxu0 0.0
      %1721 = vmatpush1.msra.mxu0 0.0
      %1722 = vmatprep.subr.mxu0 0.0
      %1723 = vmatpush1.msra.mxu0 0.0
      %1724 = vmatprep.subr.mxu0 0.0
      %1725 = vmatpush1.msra.mxu0 0.0
      %1726 = vmatprep.subr.mxu0 0.0
      %1727 = vmatpush1.msra.mxu0 0.0
      %1728 = vmatprep.subr.mxu0 0.0
      %1729 = vmatpush1.msra.mxu0 0.0
      %1730 = vmatprep.subr.mxu0 0.0
      %1731 = vmatpush1.msra.mxu0 0.0
      %1732 = vmatprep.subr.mxu0 0.0
      %1733 = vmatpush1.msra.mxu0 0.0
      %1734 = vmatprep.subr.mxu0 0.0
      %1735 = vmatpush1.msra.mxu0 0.0
      %1736 = vmatprep.subr.mxu0 0.0
      %1737 = vmatpush1.msra.mxu0 0.0
      %1738 = vmatprep.subr.mxu0 0.0
      %1739 = vmatpush1.msra.mxu0 0.0
      %1740 = vmatprep.subr.mxu0 0.0
      %1741 = vmatpush1.msra.mxu0 0.0
      %1742 = vmatprep.subr.mxu0 0.0
      %1743 = vmatpush1.msra.mxu0 0.0
      %1744 = vmatprep.subr.mxu0 0.0
      %1745 = vmatpush1.msra.mxu0 0.0
      %1746 = vmatprep.mubr.f32.mxu0 0.0
      %1747 = vmatmul.mubr.f32.gmra.mrb[0].mxu0 %v892
      %v1748 = vpop.f32.mrb[0].mxu0
      %v1749 = vadd.f32 %v1533, %v1748
      %v1750 = vpop.f32.mrb[0].mxu0
      %1751 = vdwg.mxu0
      %1752 = vmatprep.subr.mxu0 0.0
      %1753 = vmatpush1.msra.mxu0 %v1510
      %1754 = vmatprep.subr.mxu0 0.0
      %1755 = vmatpush1.msra.mxu0 %v1511
      %1756 = vmatprep.subr.mxu0 0.0
      %1757 = vmatpush1.msra.mxu0 %v1512
      %1758 = vmatprep.subr.mxu0 0.0
      %1759 = vmatpush1.msra.mxu0 %v1513
      %1760 = vmatprep.subr.mxu0 0.0
      %1761 = vmatpush1.msra.mxu0 0.0
      %1762 = vmatprep.subr.mxu0 0.0
      %1763 = vmatpush1.msra.mxu0 0.0
      %1764 = vmatprep.subr.mxu0 0.0
      %1765 = vmatpush1.msra.mxu0 0.0
      %1766 = vmatprep.subr.mxu0 0.0
      %1767 = vmatpush1.msra.mxu0 0.0
      %1768 = vmatprep.subr.mxu0 0.0
      %1769 = vmatpush1.msra.mxu0 0.0
      %1770 = vmatprep.subr.mxu0 0.0
      %1771 = vmatpush1.msra.mxu0 0.0
      %1772 = vmatprep.subr.mxu0 0.0
      %1773 = vmatpush1.msra.mxu0 0.0
      %1774 = vmatprep.subr.mxu0 0.0
      %1775 = vmatpush1.msra.mxu0 0.0
      %1776 = vmatprep.subr.mxu0 0.0
      %1777 = vmatpush1.msra.mxu0 0.0
      %1778 = vmatprep.subr.mxu0 0.0
      %1779 = vmatpush1.msra.mxu0 0.0
      %1780 = vmatprep.subr.mxu0 0.0
      %1781 = vmatpush1.msra.mxu0 0.0
      %1782 = vmatprep.subr.mxu0 0.0
      %1783 = vmatpush1.msra.mxu0 0.0
      %1784 = vmatprep.subr.mxu0 0.0
      %1785 = vmatpush1.msra.mxu0 0.0
      %1786 = vmatprep.subr.mxu0 0.0
      %1787 = vmatpush1.msra.mxu0 0.0
      %1788 = vmatprep.subr.mxu0 0.0
      %1789 = vmatpush1.msra.mxu0 0.0
      %1790 = vmatprep.subr.mxu0 0.0
      %1791 = vmatpush1.msra.mxu0 0.0
      %1792 = vmatprep.subr.mxu0 0.0
      %1793 = vmatpush1.msra.mxu0 0.0
      %1794 = vmatprep.subr.mxu0 0.0
      %1795 = vmatpush1.msra.mxu0 0.0
      %1796 = vmatprep.subr.mxu0 0.0
      %1797 = vmatpush1.msra.mxu0 0.0
      %1798 = vmatprep.subr.mxu0 0.0
      %1799 = vmatpush1.msra.mxu0 0.0
      %1800 = vmatprep.subr.mxu0 0.0
      %1801 = vmatpush1.msra.mxu0 0.0
      %1802 = vmatprep.subr.mxu0 0.0
      %1803 = vmatpush1.msra.mxu0 0.0
      %1804 = vmatprep.subr.mxu0 0.0
      %1805 = vmatpush1.msra.mxu0 0.0
      %1806 = vmatprep.subr.mxu0 0.0
      %1807 = vmatpush1.msra.mxu0 0.0
      %1808 = vmatprep.subr.mxu0 0.0
      %1809 = vmatpush1.msra.mxu0 0.0
      %1810 = vmatprep.subr.mxu0 0.0
      %1811 = vmatpush1.msra.mxu0 0.0
      %1812 = vmatprep.subr.mxu0 0.0
      %1813 = vmatpush1.msra.mxu0 0.0
      %1814 = vmatprep.subr.mxu0 0.0
      %1815 = vmatpush1.msra.mxu0 0.0
      %1816 = vmatprep.mubr.f32.mxu0 0.0
      %1817 = vmatmul.mubr.f32.gmra.mrb[0].mxu0 %v892
      %v1818 = vpop.f32.mrb[0].mxu0
      %v1819 = vadd.f32 %v1537, %v1818
      %v1820 = vpop.f32.mrb[0].mxu0
      %1821 = vdwg.mxu0
      %vm1822 = vcmask 64512
      %v1824 = vsel %vm1822, %v961, 0
      %v1827 = vsel %vm1822, %v1285, 0
      %1829 = vmatprep.subr.mxu0 0.0
      %1830 = vmatpush1.xpose.msra.mxu0 %v1827
      %1831 = vmatprep.subr.mxu0 0.0
      %1832 = vmatpush1.xpose.msra.mxu0 0.0
      %1833 = vmatprep.subr.mxu0 0.0
      %1834 = vmatpush1.xpose.msra.mxu0 0.0
      %1835 = vmatprep.subr.mxu0 0.0
      %1836 = vmatpush1.xpose.msra.mxu0 0.0
      %1837 = vmatprep.subr.mxu0 0.0
      %1838 = vmatpush1.xpose.msra.mxu0 0.0
      %1839 = vmatprep.subr.mxu0 0.0
      %1840 = vmatpush1.xpose.msra.mxu0 0.0
      %1841 = vmatprep.subr.mxu0 0.0
      %1842 = vmatpush1.xpose.msra.mxu0 0.0
      %1843 = vmatprep.subr.mxu0 0.0
      %1844 = vmatpush1.xpose.msra.mxu0 0.0
      %1845 = vmatprep.subr.mxu0 0.0
      %1846 = vmatpush1.xpose.msra.mxu0 0.0
      %1847 = vmatprep.subr.mxu0 0.0
      %1848 = vmatpush1.xpose.msra.mxu0 0.0
      %1849 = vmatprep.subr.mxu0 0.0
      %1850 = vmatpush1.xpose.msra.mxu0 0.0
      %1851 = vmatprep.subr.mxu0 0.0
      %1852 = vmatpush1.xpose.msra.mxu0 0.0
      %1853 = vmatprep.subr.mxu0 0.0
      %1854 = vmatpush1.xpose.msra.mxu0 0.0
      %1855 = vmatprep.subr.mxu0 0.0
      %1856 = vmatpush1.xpose.msra.mxu0 0.0
      %1857 = vmatprep.subr.mxu0 0.0
      %1858 = vmatpush1.xpose.msra.mxu0 0.0
      %1859 = vmatprep.subr.mxu0 0.0
      %1860 = vmatpush1.xpose.msra.mxu0 0.0
      %1861 = vmatprep.subr.mxu0 0.0
      %1862 = vmatpush1.xpose.msra.mxu0 0.0
      %1863 = vmatprep.subr.mxu0 0.0
      %1864 = vmatpush1.xpose.msra.mxu0 0.0
      %1865 = vmatprep.subr.mxu0 0.0
      %1866 = vmatpush1.xpose.msra.mxu0 0.0
      %1867 = vmatprep.subr.mxu0 0.0
      %1868 = vmatpush1.xpose.msra.mxu0 0.0
      %1869 = vmatprep.subr.mxu0 0.0
      %1870 = vmatpush1.xpose.msra.mxu0 0.0
      %1871 = vmatprep.subr.mxu0 0.0
      %1872 = vmatpush1.xpose.msra.mxu0 0.0
      %1873 = vmatprep.subr.mxu0 0.0
      %1874 = vmatpush1.xpose.msra.mxu0 0.0
      %1875 = vmatprep.subr.mxu0 0.0
      %1876 = vmatpush1.xpose.msra.mxu0 0.0
      %1877 = vmatprep.subr.mxu0 0.0
      %1878 = vmatpush1.xpose.msra.mxu0 0.0
      %1879 = vmatprep.subr.mxu0 0.0
      %1880 = vmatpush1.xpose.msra.mxu0 0.0
      %1881 = vmatprep.subr.mxu0 0.0
      %1882 = vmatpush1.xpose.msra.mxu0 0.0
      %1883 = vmatprep.subr.mxu0 0.0
      %1884 = vmatpush1.xpose.msra.mxu0 0.0
      %1885 = vmatprep.subr.mxu0 0.0
      %1886 = vmatpush1.xpose.msra.mxu0 0.0
      %1887 = vmatprep.subr.mxu0 0.0
      %1888 = vmatpush1.xpose.msra.mxu0 0.0
      %1889 = vmatprep.subr.mxu0 0.0
      %1890 = vmatpush1.xpose.msra.mxu0 0.0
      %1891 = vmatprep.subr.mxu0 0.0
      %1892 = vmatpush1.xpose.msra.mxu0 0.0
      %1893 = vmatprep.mubr.f32.mxu0 0.0
      %1894 = vmatmul.mubr.f32.gmra.mrb[0].mxu0 %v1824
      %v1895 = vpop.f32.mrb[0].mxu0
      %v1896 = vadd.f32 0.0, %v1895
      %v1897 = vpop.f32.mrb[0].mxu0
      %1898 = vdwg.mxu0
      %v1900 = vsel %vm1822, %v1031, 0
      %v1903 = vsel %vm1822, %v1355, 0
      %1905 = vmatprep.subr.mxu0 0.0
      %1906 = vmatpush1.xpose.msra.mxu0 %v1903
      %1907 = vmatprep.subr.mxu0 0.0
      %1908 = vmatpush1.xpose.msra.mxu0 0.0
      %1909 = vmatprep.subr.mxu0 0.0
      %1910 = vmatpush1.xpose.msra.mxu0 0.0
      %1911 = vmatprep.subr.mxu0 0.0
      %1912 = vmatpush1.xpose.msra.mxu0 0.0
      %1913 = vmatprep.subr.mxu0 0.0
      %1914 = vmatpush1.xpose.msra.mxu0 0.0
      %1915 = vmatprep.subr.mxu0 0.0
      %1916 = vmatpush1.xpose.msra.mxu0 0.0
      %1917 = vmatprep.subr.mxu0 0.0
      %1918 = vmatpush1.xpose.msra.mxu0 0.0
      %1919 = vmatprep.subr.mxu0 0.0
      %1920 = vmatpush1.xpose.msra.mxu0 0.0
      %1921 = vmatprep.subr.mxu0 0.0
      %1922 = vmatpush1.xpose.msra.mxu0 0.0
      %1923 = vmatprep.subr.mxu0 0.0
      %1924 = vmatpush1.xpose.msra.mxu0 0.0
      %1925 = vmatprep.subr.mxu0 0.0
      %1926 = vmatpush1.xpose.msra.mxu0 0.0
      %1927 = vmatprep.subr.mxu0 0.0
      %1928 = vmatpush1.xpose.msra.mxu0 0.0
      %1929 = vmatprep.subr.mxu0 0.0
      %1930 = vmatpush1.xpose.msra.mxu0 0.0
      %1931 = vmatprep.subr.mxu0 0.0
      %1932 = vmatpush1.xpose.msra.mxu0 0.0
      %1933 = vmatprep.subr.mxu0 0.0
      %1934 = vmatpush1.xpose.msra.mxu0 0.0
      %1935 = vmatprep.subr.mxu0 0.0
      %1936 = vmatpush1.xpose.msra.mxu0 0.0
      %1937 = vmatprep.subr.mxu0 0.0
      %1938 = vmatpush1.xpose.msra.mxu0 0.0
      %1939 = vmatprep.subr.mxu0 0.0
      %1940 = vmatpush1.xpose.msra.mxu0 0.0
      %1941 = vmatprep.subr.mxu0 0.0
      %1942 = vmatpush1.xpose.msra.mxu0 0.0
      %1943 = vmatprep.subr.mxu0 0.0
      %1944 = vmatpush1.xpose.msra.mxu0 0.0
      %1945 = vmatprep.subr.mxu0 0.0
      %1946 = vmatpush1.xpose.msra.mxu0 0.0
      %1947 = vmatprep.subr.mxu0 0.0
      %1948 = vmatpush1.xpose.msra.mxu0 0.0
      %1949 = vmatprep.subr.mxu0 0.0
      %1950 = vmatpush1.xpose.msra.mxu0 0.0
      %1951 = vmatprep.subr.mxu0 0.0
      %1952 = vmatpush1.xpose.msra.mxu0 0.0
      %1953 = vmatprep.subr.mxu0 0.0
      %1954 = vmatpush1.xpose.msra.mxu0 0.0
      %1955 = vmatprep.subr.mxu0 0.0
      %1956 = vmatpush1.xpose.msra.mxu0 0.0
      %1957 = vmatprep.subr.mxu0 0.0
      %1958 = vmatpush1.xpose.msra.mxu0 0.0
      %1959 = vmatprep.subr.mxu0 0.0
      %1960 = vmatpush1.xpose.msra.mxu0 0.0
      %1961 = vmatprep.subr.mxu0 0.0
      %1962 = vmatpush1.xpose.msra.mxu0 0.0
      %1963 = vmatprep.subr.mxu0 0.0
      %1964 = vmatpush1.xpose.msra.mxu0 0.0
      %1965 = vmatprep.subr.mxu0 0.0
      %1966 = vmatpush1.xpose.msra.mxu0 0.0
      %1967 = vmatprep.subr.mxu0 0.0
      %1968 = vmatpush1.xpose.msra.mxu0 0.0
      %1969 = vmatprep.mubr.f32.mxu0 0.0
      %1970 = vmatmul.mubr.f32.gmra.mrb[0].mxu0 %v1900
      %v1971 = vpop.f32.mrb[0].mxu0
      %v1972 = vadd.f32 0.0, %v1971
      %v1973 = vpop.f32.mrb[0].mxu0
      %1974 = vdwg.mxu0
      %v1976 = vsel %vm1822, %v1101, 0
      %v1979 = vsel %vm1822, %v1425, 0
      %1981 = vmatprep.subr.mxu0 0.0
      %1982 = vmatpush1.xpose.msra.mxu0 %v1979
      %1983 = vmatprep.subr.mxu0 0.0
      %1984 = vmatpush1.xpose.msra.mxu0 0.0
      %1985 = vmatprep.subr.mxu0 0.0
      %1986 = vmatpush1.xpose.msra.mxu0 0.0
      %1987 = vmatprep.subr.mxu0 0.0
      %1988 = vmatpush1.xpose.msra.mxu0 0.0
      %1989 = vmatprep.subr.mxu0 0.0
      %1990 = vmatpush1.xpose.msra.mxu0 0.0
      %1991 = vmatprep.subr.mxu0 0.0
      %1992 = vmatpush1.xpose.msra.mxu0 0.0
      %1993 = vmatprep.subr.mxu0 0.0
      %1994 = vmatpush1.xpose.msra.mxu0 0.0
      %1995 = vmatprep.subr.mxu0 0.0
      %1996 = vmatpush1.xpose.msra.mxu0 0.0
      %1997 = vmatprep.subr.mxu0 0.0
      %1998 = vmatpush1.xpose.msra.mxu0 0.0
      %1999 = vmatprep.subr.mxu0 0.0
      %2000 = vmatpush1.xpose.msra.mxu0 0.0
      %2001 = vmatprep.subr.mxu0 0.0
      %2002 = vmatpush1.xpose.msra.mxu0 0.0
      %2003 = vmatprep.subr.mxu0 0.0
      %2004 = vmatpush1.xpose.msra.mxu0 0.0
      %2005 = vmatprep.subr.mxu0 0.0
      %2006 = vmatpush1.xpose.msra.mxu0 0.0
      %2007 = vmatprep.subr.mxu0 0.0
      %2008 = vmatpush1.xpose.msra.mxu0 0.0
      %2009 = vmatprep.subr.mxu0 0.0
      %2010 = vmatpush1.xpose.msra.mxu0 0.0
      %2011 = vmatprep.subr.mxu0 0.0
      %2012 = vmatpush1.xpose.msra.mxu0 0.0
      %2013 = vmatprep.subr.mxu0 0.0
      %2014 = vmatpush1.xpose.msra.mxu0 0.0
      %2015 = vmatprep.subr.mxu0 0.0
      %2016 = vmatpush1.xpose.msra.mxu0 0.0
      %2017 = vmatprep.subr.mxu0 0.0
      %2018 = vmatpush1.xpose.msra.mxu0 0.0
      %2019 = vmatprep.subr.mxu0 0.0
      %2020 = vmatpush1.xpose.msra.mxu0 0.0
      %2021 = vmatprep.subr.mxu0 0.0
      %2022 = vmatpush1.xpose.msra.mxu0 0.0
      %2023 = vmatprep.subr.mxu0 0.0
      %2024 = vmatpush1.xpose.msra.mxu0 0.0
      %2025 = vmatprep.subr.mxu0 0.0
      %2026 = vmatpush1.xpose.msra.mxu0 0.0
      %2027 = vmatprep.subr.mxu0 0.0
      %2028 = vmatpush1.xpose.msra.mxu0 0.0
      %2029 = vmatprep.subr.mxu0 0.0
      %2030 = vmatpush1.xpose.msra.mxu0 0.0
      %2031 = vmatprep.subr.mxu0 0.0
      %2032 = vmatpush1.xpose.msra.mxu0 0.0
      %2033 = vmatprep.subr.mxu0 0.0
      %2034 = vmatpush1.xpose.msra.mxu0 0.0
      %2035 = vmatprep.subr.mxu0 0.0
      %2036 = vmatpush1.xpose.msra.mxu0 0.0
      %2037 = vmatprep.subr.mxu0 0.0
      %2038 = vmatpush1.xpose.msra.mxu0 0.0
      %2039 = vmatprep.subr.mxu0 0.0
      %2040 = vmatpush1.xpose.msra.mxu0 0.0
      %2041 = vmatprep.subr.mxu0 0.0
      %2042 = vmatpush1.xpose.msra.mxu0 0.0
      %2043 = vmatprep.subr.mxu0 0.0
      %2044 = vmatpush1.xpose.msra.mxu0 0.0
      %2045 = vmatprep.mubr.f32.mxu0 0.0
      %2046 = vmatmul.mubr.f32.gmra.mrb[0].mxu0 %v1976
      %v2047 = vpop.f32.mrb[0].mxu0
      %v2048 = vadd.f32 0.0, %v2047
      %v2049 = vpop.f32.mrb[0].mxu0
      %2050 = vdwg.mxu0
      %v2052 = vsel %vm1822, %v1171, 0
      %v2055 = vsel %vm1822, %v1495, 0
      %2057 = vmatprep.subr.mxu0 0.0
      %2058 = vmatpush1.xpose.msra.mxu0 %v2055
      %2059 = vmatprep.subr.mxu0 0.0
      %2060 = vmatpush1.xpose.msra.mxu0 0.0
      %2061 = vmatprep.subr.mxu0 0.0
      %2062 = vmatpush1.xpose.msra.mxu0 0.0
      %2063 = vmatprep.subr.mxu0 0.0
      %2064 = vmatpush1.xpose.msra.mxu0 0.0
      %2065 = vmatprep.subr.mxu0 0.0
      %2066 = vmatpush1.xpose.msra.mxu0 0.0
      %2067 = vmatprep.subr.mxu0 0.0
      %2068 = vmatpush1.xpose.msra.mxu0 0.0
      %2069 = vmatprep.subr.mxu0 0.0
      %2070 = vmatpush1.xpose.msra.mxu0 0.0
      %2071 = vmatprep.subr.mxu0 0.0
      %2072 = vmatpush1.xpose.msra.mxu0 0.0
      %2073 = vmatprep.subr.mxu0 0.0
      %2074 = vmatpush1.xpose.msra.mxu0 0.0
      %2075 = vmatprep.subr.mxu0 0.0
      %2076 = vmatpush1.xpose.msra.mxu0 0.0
      %2077 = vmatprep.subr.mxu0 0.0
      %2078 = vmatpush1.xpose.msra.mxu0 0.0
      %2079 = vmatprep.subr.mxu0 0.0
      %2080 = vmatpush1.xpose.msra.mxu0 0.0
      %2081 = vmatprep.subr.mxu0 0.0
      %2082 = vmatpush1.xpose.msra.mxu0 0.0
      %2083 = vmatprep.subr.mxu0 0.0
      %2084 = vmatpush1.xpose.msra.mxu0 0.0
      %2085 = vmatprep.subr.mxu0 0.0
      %2086 = vmatpush1.xpose.msra.mxu0 0.0
      %2087 = vmatprep.subr.mxu0 0.0
      %2088 = vmatpush1.xpose.msra.mxu0 0.0
      %2089 = vmatprep.subr.mxu0 0.0
      %2090 = vmatpush1.xpose.msra.mxu0 0.0
      %2091 = vmatprep.subr.mxu0 0.0
      %2092 = vmatpush1.xpose.msra.mxu0 0.0
      %2093 = vmatprep.subr.mxu0 0.0
      %2094 = vmatpush1.xpose.msra.mxu0 0.0
      %2095 = vmatprep.subr.mxu0 0.0
      %2096 = vmatpush1.xpose.msra.mxu0 0.0
      %2097 = vmatprep.subr.mxu0 0.0
      %2098 = vmatpush1.xpose.msra.mxu0 0.0
      %2099 = vmatprep.subr.mxu0 0.0
      %2100 = vmatpush1.xpose.msra.mxu0 0.0
      %2101 = vmatprep.subr.mxu0 0.0
      %2102 = vmatpush1.xpose.msra.mxu0 0.0
      %2103 = vmatprep.subr.mxu0 0.0
      %2104 = vmatpush1.xpose.msra.mxu0 0.0
      %2105 = vmatprep.subr.mxu0 0.0
      %2106 = vmatpush1.xpose.msra.mxu0 0.0
      %2107 = vmatprep.subr.mxu0 0.0
      %2108 = vmatpush1.xpose.msra.mxu0 0.0
      %2109 = vmatprep.subr.mxu0 0.0
      %2110 = vmatpush1.xpose.msra.mxu0 0.0
      %2111 = vmatprep.subr.mxu0 0.0
      %2112 = vmatpush1.xpose.msra.mxu0 0.0
      %2113 = vmatprep.subr.mxu0 0.0
      %2114 = vmatpush1.xpose.msra.mxu0 0.0
      %2115 = vmatprep.subr.mxu0 0.0
      %2116 = vmatpush1.xpose.msra.mxu0 0.0
      %2117 = vmatprep.subr.mxu0 0.0
      %2118 = vmatpush1.xpose.msra.mxu0 0.0
      %2119 = vmatprep.subr.mxu0 0.0
      %2120 = vmatpush1.xpose.msra.mxu0 0.0
      %2121 = vmatprep.mubr.f32.mxu0 0.0
      %2122 = vmatmul.mubr.f32.gmra.mrb[0].mxu0 %v2052
      %v2123 = vpop.f32.mrb[0].mxu0
      %v2124 = vadd.f32 0.0, %v2123
      %v2125 = vpop.f32.mrb[0].mxu0
      %2126 = vdwg.mxu0
      %v2127 = vmul.f32 %v1896, 0.35355338
      %v2128 = vmul.f32 %v1972, 0.35355338
      %v2129 = vmul.f32 %v2048, 0.35355338
      %v2130 = vmul.f32 %v2124, 0.35355338
      %v2132 = vlaneseq
      %v2133 = vshrl.u32 %v2132, 7
      %v2134 = vsub.s32 0, %v2133
      %v2135 = vrot.slane %v845, %v2134
      %v2137 = vadd.f32 %v2127, %v2135
      %v2138 = vadd.f32 %v2128, %v2135
      %v2139 = vadd.f32 %v2129, %v2135
      %v2140 = vadd.f32 %v2130, %v2135
      %v2141 = vsel %vm1822, %v2137, -inf
      %2142 = vmax.xlane.f32.xlu0 %v2141
      %v2143 = vpop.xlane.xlu0 %2142
      %v2144 = vsel %vm1822, %v2138, -inf
      %2145 = vmax.xlane.f32.xlu0 %v2144
      %v2146 = vpop.xlane.xlu0 %2145
      %v2147 = vsel %vm1822, %v2139, -inf
      %2148 = vmax.xlane.f32.xlu0 %v2147
      %v2149 = vpop.xlane.xlu0 %2148
      %v2150 = vsel %vm1822, %v2140, -inf
      %2151 = vmax.xlane.f32.xlu0 %v2150
      %v2152 = vpop.xlane.xlu0 %2151
      %v2153 = vsub.f32 %v2137, %v2143
      %v2154 = vsub.f32 %v2138, %v2146
      %v2155 = vsub.f32 %v2139, %v2149
      %v2156 = vsub.f32 %v2140, %v2152
      %v2157 = vmul.f32 %v2153, 1.442695
      %v2158 = vpow.pop %v2157
      %v2159 = vmul.f32 %v2154, 1.442695
      %v2160 = vpow.pop %v2159
      %v2161 = vmul.f32 %v2155, 1.442695
      %v2162 = vpow.pop %v2161
      %v2163 = vmul.f32 %v2156, 1.442695
      %v2164 = vpow.pop %v2163
      %v2165 = vsel %vm1822, %v2158, 0.0
      %2166 = vadd.xlane.f32.xlu0 %v2165
      %v2167 = vpop.xlane.xlu0 %2166
      %v2168 = vsel %vm1822, %v2160, 0.0
      %2169 = vadd.xlane.f32.xlu0 %v2168
      %v2170 = vpop.xlane.xlu0 %2169
      %v2171 = vsel %vm1822, %v2162, 0.0
      %2172 = vadd.xlane.f32.xlu0 %v2171
      %v2173 = vpop.xlane.xlu0 %2172
      %v2174 = vsel %vm1822, %v2164, 0.0
      %2175 = vadd.xlane.f32.xlu0 %v2174
      %v2176 = vpop.xlane.xlu0 %2175
      %v2177 = vrcp.pop %v2167
      %v2178 = vmul.f32 %v2158, %v2177
      %v2179 = vrcp.pop %v2170
      %v2180 = vmul.f32 %v2160, %v2179
      %v2181 = vrcp.pop %v2173
      %v2182 = vmul.f32 %v2162, %v2181
      %v2183 = vrcp.pop %v2176
      %v2184 = vmul.f32 %v2164, %v2183
      %v2186 = vsel %vm1822, %v2178, 0
      %2188 = vmatprep.subr.mxu0 0.0
      %2189 = vmatpush1.msra.mxu0 %v1609
      %2190 = vmatprep.subr.mxu0 0.0
      %2191 = vmatpush1.msra.mxu0 0.0
      %2192 = vmatprep.subr.mxu0 0.0
      %2193 = vmatpush1.msra.mxu0 0.0
      %2194 = vmatprep.subr.mxu0 0.0
      %2195 = vmatpush1.msra.mxu0 0.0
      %2196 = vmatprep.subr.mxu0 0.0
      %2197 = vmatpush1.msra.mxu0 0.0
      %2198 = vmatprep.subr.mxu0 0.0
      %2199 = vmatpush1.msra.mxu0 0.0
      %2200 = vmatprep.subr.mxu0 0.0
      %2201 = vmatpush1.msra.mxu0 0.0
      %2202 = vmatprep.subr.mxu0 0.0
      %2203 = vmatpush1.msra.mxu0 0.0
      %2204 = vmatprep.subr.mxu0 0.0
      %2205 = vmatpush1.msra.mxu0 0.0
      %2206 = vmatprep.subr.mxu0 0.0
      %2207 = vmatpush1.msra.mxu0 0.0
      %2208 = vmatprep.subr.mxu0 0.0
      %2209 = vmatpush1.msra.mxu0 0.0
      %2210 = vmatprep.subr.mxu0 0.0
      %2211 = vmatpush1.msra.mxu0 0.0
      %2212 = vmatprep.subr.mxu0 0.0
      %2213 = vmatpush1.msra.mxu0 0.0
      %2214 = vmatprep.subr.mxu0 0.0
      %2215 = vmatpush1.msra.mxu0 0.0
      %2216 = vmatprep.subr.mxu0 0.0
      %2217 = vmatpush1.msra.mxu0 0.0
      %2218 = vmatprep.subr.mxu0 0.0
      %2219 = vmatpush1.msra.mxu0 0.0
      %2220 = vmatprep.subr.mxu0 0.0
      %2221 = vmatpush1.msra.mxu0 0.0
      %2222 = vmatprep.subr.mxu0 0.0
      %2223 = vmatpush1.msra.mxu0 0.0
      %2224 = vmatprep.subr.mxu0 0.0
      %2225 = vmatpush1.msra.mxu0 0.0
      %2226 = vmatprep.subr.mxu0 0.0
      %2227 = vmatpush1.msra.mxu0 0.0
      %2228 = vmatprep.subr.mxu0 0.0
      %2229 = vmatpush1.msra.mxu0 0.0
      %2230 = vmatprep.subr.mxu0 0.0
      %2231 = vmatpush1.msra.mxu0 0.0
      %2232 = vmatprep.subr.mxu0 0.0
      %2233 = vmatpush1.msra.mxu0 0.0
      %2234 = vmatprep.subr.mxu0 0.0
      %2235 = vmatpush1.msra.mxu0 0.0
      %2236 = vmatprep.subr.mxu0 0.0
      %2237 = vmatpush1.msra.mxu0 0.0
      %2238 = vmatprep.subr.mxu0 0.0
      %2239 = vmatpush1.msra.mxu0 0.0
      %2240 = vmatprep.subr.mxu0 0.0
      %2241 = vmatpush1.msra.mxu0 0.0
      %2242 = vmatprep.subr.mxu0 0.0
      %2243 = vmatpush1.msra.mxu0 0.0
      %2244 = vmatprep.subr.mxu0 0.0
      %2245 = vmatpush1.msra.mxu0 0.0
      %2246 = vmatprep.subr.mxu0 0.0
      %2247 = vmatpush1.msra.mxu0 0.0
      %2248 = vmatprep.subr.mxu0 0.0
      %2249 = vmatpush1.msra.mxu0 0.0
      %2250 = vmatprep.subr.mxu0 0.0
      %2251 = vmatpush1.msra.mxu0 0.0
      %2252 = vmatprep.mubr.f32.mxu0 0.0
      %2253 = vmatmul.mubr.f32.gmra.mrb[0].mxu0 %v2186
      %v2254 = vpop.f32.mrb[0].mxu0
      %v2255 = vadd.f32 0.0, %v2254
      %v2256 = vpop.f32.mrb[0].mxu0
      %2257 = vdwg.mxu0
      %v2259 = vsel %vm1822, %v2180, 0
      %2261 = vmatprep.subr.mxu0 0.0
      %2262 = vmatpush1.msra.mxu0 %v1679
      %2263 = vmatprep.subr.mxu0 0.0
      %2264 = vmatpush1.msra.mxu0 0.0
      %2265 = vmatprep.subr.mxu0 0.0
      %2266 = vmatpush1.msra.mxu0 0.0
      %2267 = vmatprep.subr.mxu0 0.0
      %2268 = vmatpush1.msra.mxu0 0.0
      %2269 = vmatprep.subr.mxu0 0.0
      %2270 = vmatpush1.msra.mxu0 0.0
      %2271 = vmatprep.subr.mxu0 0.0
      %2272 = vmatpush1.msra.mxu0 0.0
      %2273 = vmatprep.subr.mxu0 0.0
      %2274 = vmatpush1.msra.mxu0 0.0
      %2275 = vmatprep.subr.mxu0 0.0
      %2276 = vmatpush1.msra.mxu0 0.0
      %2277 = vmatprep.subr.mxu0 0.0
      %2278 = vmatpush1.msra.mxu0 0.0
      %2279 = vmatprep.subr.mxu0 0.0
      %2280 = vmatpush1.msra.mxu0 0.0
      %2281 = vmatprep.subr.mxu0 0.0
      %2282 = vmatpush1.msra.mxu0 0.0
      %2283 = vmatprep.subr.mxu0 0.0
      %2284 = vmatpush1.msra.mxu0 0.0
      %2285 = vmatprep.subr.mxu0 0.0
      %2286 = vmatpush1.msra.mxu0 0.0
      %2287 = vmatprep.subr.mxu0 0.0
      %2288 = vmatpush1.msra.mxu0 0.0
      %2289 = vmatprep.subr.mxu0 0.0
      %2290 = vmatpush1.msra.mxu0 0.0
      %2291 = vmatprep.subr.mxu0 0.0
      %2292 = vmatpush1.msra.mxu0 0.0
      %2293 = vmatprep.subr.mxu0 0.0
      %2294 = vmatpush1.msra.mxu0 0.0
      %2295 = vmatprep.subr.mxu0 0.0
      %2296 = vmatpush1.msra.mxu0 0.0
      %2297 = vmatprep.subr.mxu0 0.0
      %2298 = vmatpush1.msra.mxu0 0.0
      %2299 = vmatprep.subr.mxu0 0.0
      %2300 = vmatpush1.msra.mxu0 0.0
      %2301 = vmatprep.subr.mxu0 0.0
      %2302 = vmatpush1.msra.mxu0 0.0
      %2303 = vmatprep.subr.mxu0 0.0
      %2304 = vmatpush1.msra.mxu0 0.0
      %2305 = vmatprep.subr.mxu0 0.0
      %2306 = vmatpush1.msra.mxu0 0.0
      %2307 = vmatprep.subr.mxu0 0.0
      %2308 = vmatpush1.msra.mxu0 0.0
      %2309 = vmatprep.subr.mxu0 0.0
      %2310 = vmatpush1.msra.mxu0 0.0
      %2311 = vmatprep.subr.mxu0 0.0
      %2312 = vmatpush1.msra.mxu0 0.0
      %2313 = vmatprep.subr.mxu0 0.0
      %2314 = vmatpush1.msra.mxu0 0.0
      %2315 = vmatprep.subr.mxu0 0.0
      %2316 = vmatpush1.msra.mxu0 0.0
      %2317 = vmatprep.subr.mxu0 0.0
      %2318 = vmatpush1.msra.mxu0 0.0
      %2319 = vmatprep.subr.mxu0 0.0
      %2320 = vmatpush1.msra.mxu0 0.0
      %2321 = vmatprep.subr.mxu0 0.0
      %2322 = vmatpush1.msra.mxu0 0.0
      %2323 = vmatprep.subr.mxu0 0.0
      %2324 = vmatpush1.msra.mxu0 0.0
      %2325 = vmatprep.mubr.f32.mxu0 0.0
      %2326 = vmatmul.mubr.f32.gmra.mrb[0].mxu0 %v2259
      %v2327 = vpop.f32.mrb[0].mxu0
      %v2328 = vadd.f32 0.0, %v2327
      %v2329 = vpop.f32.mrb[0].mxu0
      %2330 = vdwg.mxu0
      %v2332 = vsel %vm1822, %v2182, 0
      %2334 = vmatprep.subr.mxu0 0.0
      %2335 = vmatpush1.msra.mxu0 %v1749
      %2336 = vmatprep.subr.mxu0 0.0
      %2337 = vmatpush1.msra.mxu0 0.0
      %2338 = vmatprep.subr.mxu0 0.0
      %2339 = vmatpush1.msra.mxu0 0.0
      %2340 = vmatprep.subr.mxu0 0.0
      %2341 = vmatpush1.msra.mxu0 0.0
      %2342 = vmatprep.subr.mxu0 0.0
      %2343 = vmatpush1.msra.mxu0 0.0
      %2344 = vmatprep.subr.mxu0 0.0
      %2345 = vmatpush1.msra.mxu0 0.0
      %2346 = vmatprep.subr.mxu0 0.0
      %2347 = vmatpush1.msra.mxu0 0.0
      %2348 = vmatprep.subr.mxu0 0.0
      %2349 = vmatpush1.msra.mxu0 0.0
      %2350 = vmatprep.subr.mxu0 0.0
      %2351 = vmatpush1.msra.mxu0 0.0
      %2352 = vmatprep.subr.mxu0 0.0
      %2353 = vmatpush1.msra.mxu0 0.0
      %2354 = vmatprep.subr.mxu0 0.0
      %2355 = vmatpush1.msra.mxu0 0.0
      %2356 = vmatprep.subr.mxu0 0.0
      %2357 = vmatpush1.msra.mxu0 0.0
      %2358 = vmatprep.subr.mxu0 0.0
      %2359 = vmatpush1.msra.mxu0 0.0
      %2360 = vmatprep.subr.mxu0 0.0
      %2361 = vmatpush1.msra.mxu0 0.0
      %2362 = vmatprep.subr.mxu0 0.0
      %2363 = vmatpush1.msra.mxu0 0.0
      %2364 = vmatprep.subr.mxu0 0.0
      %2365 = vmatpush1.msra.mxu0 0.0
      %2366 = vmatprep.subr.mxu0 0.0
      %2367 = vmatpush1.msra.mxu0 0.0
      %2368 = vmatprep.subr.mxu0 0.0
      %2369 = vmatpush1.msra.mxu0 0.0
      %2370 = vmatprep.subr.mxu0 0.0
      %2371 = vmatpush1.msra.mxu0 0.0
      %2372 = vmatprep.subr.mxu0 0.0
      %2373 = vmatpush1.msra.mxu0 0.0
      %2374 = vmatprep.subr.mxu0 0.0
      %2375 = vmatpush1.msra.mxu0 0.0
      %2376 = vmatprep.subr.mxu0 0.0
      %2377 = vmatpush1.msra.mxu0 0.0
      %2378 = vmatprep.subr.mxu0 0.0
      %2379 = vmatpush1.msra.mxu0 0.0
      %2380 = vmatprep.subr.mxu0 0.0
      %2381 = vmatpush1.msra.mxu0 0.0
      %2382 = vmatprep.subr.mxu0 0.0
      %2383 = vmatpush1.msra.mxu0 0.0
      %2384 = vmatprep.subr.mxu0 0.0
      %2385 = vmatpush1.msra.mxu0 0.0
      %2386 = vmatprep.subr.mxu0 0.0
      %2387 = vmatpush1.msra.mxu0 0.0
      %2388 = vmatprep.subr.mxu0 0.0
      %2389 = vmatpush1.msra.mxu0 0.0
      %2390 = vmatprep.subr.mxu0 0.0
      %2391 = vmatpush1.msra.mxu0 0.0
      %2392 = vmatprep.subr.mxu0 0.0
      %2393 = vmatpush1.msra.mxu0 0.0
      %2394 = vmatprep.subr.mxu0 0.0
      %2395 = vmatpush1.msra.mxu0 0.0
      %2396 = vmatprep.subr.mxu0 0.0
      %2397 = vmatpush1.msra.mxu0 0.0
      %2398 = vmatprep.mubr.f32.mxu0 0.0
      %2399 = vmatmul.mubr.f32.gmra.mrb[0].mxu0 %v2332
      %v2400 = vpop.f32.mrb[0].mxu0
      %v2401 = vadd.f32 0.0, %v2400
      %v2402 = vpop.f32.mrb[0].mxu0
      %2403 = vdwg.mxu0
      %v2405 = vsel %vm1822, %v2184, 0
      %2407 = vmatprep.subr.mxu0 0.0
      %2408 = vmatpush1.msra.mxu0 %v1819
      %2409 = vmatprep.subr.mxu0 0.0
      %2410 = vmatpush1.msra.mxu0 0.0
      %2411 = vmatprep.subr.mxu0 0.0
      %2412 = vmatpush1.msra.mxu0 0.0
      %2413 = vmatprep.subr.mxu0 0.0
      %2414 = vmatpush1.msra.mxu0 0.0
      %2415 = vmatprep.subr.mxu0 0.0
      %2416 = vmatpush1.msra.mxu0 0.0
      %2417 = vmatprep.subr.mxu0 0.0
      %2418 = vmatpush1.msra.mxu0 0.0
      %2419 = vmatprep.subr.mxu0 0.0
      %2420 = vmatpush1.msra.mxu0 0.0
      %2421 = vmatprep.subr.mxu0 0.0
      %2422 = vmatpush1.msra.mxu0 0.0
      %2423 = vmatprep.subr.mxu0 0.0
      %2424 = vmatpush1.msra.mxu0 0.0
      %2425 = vmatprep.subr.mxu0 0.0
      %2426 = vmatpush1.msra.mxu0 0.0
      %2427 = vmatprep.subr.mxu0 0.0
      %2428 = vmatpush1.msra.mxu0 0.0
      %2429 = vmatprep.subr.mxu0 0.0
      %2430 = vmatpush1.msra.mxu0 0.0
      %2431 = vmatprep.subr.mxu0 0.0
      %2432 = vmatpush1.msra.mxu0 0.0
      %2433 = vmatprep.subr.mxu0 0.0
      %2434 = vmatpush1.msra.mxu0 0.0
      %2435 = vmatprep.subr.mxu0 0.0
      %2436 = vmatpush1.msra.mxu0 0.0
      %2437 = vmatprep.subr.mxu0 0.0
      %2438 = vmatpush1.msra.mxu0 0.0
      %2439 = vmatprep.subr.mxu0 0.0
      %2440 = vmatpush1.msra.mxu0 0.0
      %2441 = vmatprep.subr.mxu0 0.0
      %2442 = vmatpush1.msra.mxu0 0.0
      %2443 = vmatprep.subr.mxu0 0.0
      %2444 = vmatpush1.msra.mxu0 0.0
      %2445 = vmatprep.subr.mxu0 0.0
      %2446 = vmatpush1.msra.mxu0 0.0
      %2447 = vmatprep.subr.mxu0 0.0
      %2448 = vmatpush1.msra.mxu0 0.0
      %2449 = vmatprep.subr.mxu0 0.0
      %2450 = vmatpush1.msra.mxu0 0.0
      %2451 = vmatprep.subr.mxu0 0.0
      %2452 = vmatpush1.msra.mxu0 0.0
      %2453 = vmatprep.subr.mxu0 0.0
      %2454 = vmatpush1.msra.mxu0 0.0
      %2455 = vmatprep.subr.mxu0 0.0
      %2456 = vmatpush1.msra.mxu0 0.0
      %2457 = vmatprep.subr.mxu0 0.0
      %2458 = vmatpush1.msra.mxu0 0.0
      %2459 = vmatprep.subr.mxu0 0.0
      %2460 = vmatpush1.msra.mxu0 0.0
      %2461 = vmatprep.subr.mxu0 0.0
      %2462 = vmatpush1.msra.mxu0 0.0
      %2463 = vmatprep.subr.mxu0 0.0
      %2464 = vmatpush1.msra.mxu0 0.0
      %2465 = vmatprep.subr.mxu0 0.0
      %2466 = vmatpush1.msra.mxu0 0.0
      %2467 = vmatprep.subr.mxu0 0.0
      %2468 = vmatpush1.msra.mxu0 0.0
      %2469 = vmatprep.subr.mxu0 0.0
      %2470 = vmatpush1.msra.mxu0 0.0
      %2471 = vmatprep.mubr.f32.mxu0 0.0
      %2472 = vmatmul.mubr.f32.gmra.mrb[0].mxu0 %v2405
      %v2473 = vpop.f32.mrb[0].mxu0
      %v2474 = vadd.f32 0.0, %v2473
      %v2475 = vpop.f32.mrb[0].mxu0
      %2476 = vdwg.mxu0
      %v2477 = vld [vmem:[%s11] sm:$0xff]
      %v2478 = vld [vmem:[%s11 + $0x8] sm:$0xff]
      %v2479 = vld [vmem:[%s11 + $0x10] sm:$0xff]
      %v2480 = vld [vmem:[%s11 + $0x18] sm:$0xff]
      %v2482 = vsel %vm1822, %v2255, 0
      %2484 = vmatprep.subr.mxu0 0.0
      %2485 = vmatpush1.msra.mxu0 %v2477
      %2486 = vmatprep.subr.mxu0 0.0
      %2487 = vmatpush1.msra.mxu0 0.0
      %2488 = vmatprep.subr.mxu0 0.0
      %2489 = vmatpush1.msra.mxu0 0.0
      %2490 = vmatprep.subr.mxu0 0.0
      %2491 = vmatpush1.msra.mxu0 0.0
      %2492 = vmatprep.subr.mxu0 0.0
      %2493 = vmatpush1.msra.mxu0 0.0
      %2494 = vmatprep.subr.mxu0 0.0
      %2495 = vmatpush1.msra.mxu0 0.0
      %2496 = vmatprep.subr.mxu0 0.0
      %2497 = vmatpush1.msra.mxu0 0.0
      %2498 = vmatprep.subr.mxu0 0.0
      %2499 = vmatpush1.msra.mxu0 0.0
      %2500 = vmatprep.subr.mxu0 0.0
      %2501 = vmatpush1.msra.mxu0 0.0
      %2502 = vmatprep.subr.mxu0 0.0
      %2503 = vmatpush1.msra.mxu0 0.0
      %2504 = vmatprep.subr.mxu0 0.0
      %2505 = vmatpush1.msra.mxu0 0.0
      %2506 = vmatprep.subr.mxu0 0.0
      %2507 = vmatpush1.msra.mxu0 0.0
      %2508 = vmatprep.subr.mxu0 0.0
      %2509 = vmatpush1.msra.mxu0 0.0
      %2510 = vmatprep.subr.mxu0 0.0
      %2511 = vmatpush1.msra.mxu0 0.0
      %2512 = vmatprep.subr.mxu0 0.0
      %2513 = vmatpush1.msra.mxu0 0.0
      %2514 = vmatprep.subr.mxu0 0.0
      %2515 = vmatpush1.msra.mxu0 0.0
      %2516 = vmatprep.subr.mxu0 0.0
      %2517 = vmatpush1.msra.mxu0 0.0
      %2518 = vmatprep.subr.mxu0 0.0
      %2519 = vmatpush1.msra.mxu0 0.0
      %2520 = vmatprep.subr.mxu0 0.0
      %2521 = vmatpush1.msra.mxu0 0.0
      %2522 = vmatprep.subr.mxu0 0.0
      %2523 = vmatpush1.msra.mxu0 0.0
      %2524 = vmatprep.subr.mxu0 0.0
      %2525 = vmatpush1.msra.mxu0 0.0
      %2526 = vmatprep.subr.mxu0 0.0
      %2527 = vmatpush1.msra.mxu0 0.0
      %2528 = vmatprep.subr.mxu0 0.0
      %2529 = vmatpush1.msra.mxu0 0.0
      %2530 = vmatprep.subr.mxu0 0.0
      %2531 = vmatpush1.msra.mxu0 0.0
      %2532 = vmatprep.subr.mxu0 0.0
      %2533 = vmatpush1.msra.mxu0 0.0
      %2534 = vmatprep.subr.mxu0 0.0
      %2535 = vmatpush1.msra.mxu0 0.0
      %2536 = vmatprep.subr.mxu0 0.0
      %2537 = vmatpush1.msra.mxu0 0.0
      %2538 = vmatprep.subr.mxu0 0.0
      %2539 = vmatpush1.msra.mxu0 0.0
      %2540 = vmatprep.subr.mxu0 0.0
      %2541 = vmatpush1.msra.mxu0 0.0
      %2542 = vmatprep.subr.mxu0 0.0
      %2543 = vmatpush1.msra.mxu0 0.0
      %2544 = vmatprep.subr.mxu0 0.0
      %2545 = vmatpush1.msra.mxu0 0.0
      %2546 = vmatprep.subr.mxu0 0.0
      %2547 = vmatpush1.msra.mxu0 0.0
      %2548 = vmatprep.mubr.f32.mxu0 0.0
      %2549 = vmatmul.mubr.f32.gmra.mrb[0].mxu0 %v2482
      %v2550 = vpop.f32.mrb[0].mxu0
      %v2551 = vadd.f32 0.0, %v2550
      %v2552 = vpop.f32.mrb[0].mxu0
      %2553 = vdwg.mxu0
      %v2555 = vsel %vm1822, %v2328, 0
      %2557 = vmatprep.subr.mxu0 0.0
      %2558 = vmatpush1.msra.mxu0 %v2478
      %2559 = vmatprep.subr.mxu0 0.0
      %2560 = vmatpush1.msra.mxu0 0.0
      %2561 = vmatprep.subr.mxu0 0.0
      %2562 = vmatpush1.msra.mxu0 0.0
      %2563 = vmatprep.subr.mxu0 0.0
      %2564 = vmatpush1.msra.mxu0 0.0
      %2565 = vmatprep.subr.mxu0 0.0
      %2566 = vmatpush1.msra.mxu0 0.0
      %2567 = vmatprep.subr.mxu0 0.0
      %2568 = vmatpush1.msra.mxu0 0.0
      %2569 = vmatprep.subr.mxu0 0.0
      %2570 = vmatpush1.msra.mxu0 0.0
      %2571 = vmatprep.subr.mxu0 0.0
      %2572 = vmatpush1.msra.mxu0 0.0
      %2573 = vmatprep.subr.mxu0 0.0
      %2574 = vmatpush1.msra.mxu0 0.0
      %2575 = vmatprep.subr.mxu0 0.0
      %2576 = vmatpush1.msra.mxu0 0.0
      %2577 = vmatprep.subr.mxu0 0.0
      %2578 = vmatpush1.msra.mxu0 0.0
      %2579 = vmatprep.subr.mxu0 0.0
      %2580 = vmatpush1.msra.mxu0 0.0
      %2581 = vmatprep.subr.mxu0 0.0
      %2582 = vmatpush1.msra.mxu0 0.0
      %2583 = vmatprep.subr.mxu0 0.0
      %2584 = vmatpush1.msra.mxu0 0.0
      %2585 = vmatprep.subr.mxu0 0.0
      %2586 = vmatpush1.msra.mxu0 0.0
      %2587 = vmatprep.subr.mxu0 0.0
      %2588 = vmatpush1.msra.mxu0 0.0
      %2589 = vmatprep.subr.mxu0 0.0
      %2590 = vmatpush1.msra.mxu0 0.0
      %2591 = vmatprep.subr.mxu0 0.0
      %2592 = vmatpush1.msra.mxu0 0.0
      %2593 = vmatprep.subr.mxu0 0.0
      %2594 = vmatpush1.msra.mxu0 0.0
      %2595 = vmatprep.subr.mxu0 0.0
      %2596 = vmatpush1.msra.mxu0 0.0
      %2597 = vmatprep.subr.mxu0 0.0
      %2598 = vmatpush1.msra.mxu0 0.0
      %2599 = vmatprep.subr.mxu0 0.0
      %2600 = vmatpush1.msra.mxu0 0.0
      %2601 = vmatprep.subr.mxu0 0.0
      %2602 = vmatpush1.msra.mxu0 0.0
      %2603 = vmatprep.subr.mxu0 0.0
      %2604 = vmatpush1.msra.mxu0 0.0
      %2605 = vmatprep.subr.mxu0 0.0
      %2606 = vmatpush1.msra.mxu0 0.0
      %2607 = vmatprep.subr.mxu0 0.0
      %2608 = vmatpush1.msra.mxu0 0.0
      %2609 = vmatprep.subr.mxu0 0.0
      %2610 = vmatpush1.msra.mxu0 0.0
      %2611 = vmatprep.subr.mxu0 0.0
      %2612 = vmatpush1.msra.mxu0 0.0
      %2613 = vmatprep.subr.mxu0 0.0
      %2614 = vmatpush1.msra.mxu0 0.0
      %2615 = vmatprep.subr.mxu0 0.0
      %2616 = vmatpush1.msra.mxu0 0.0
      %2617 = vmatprep.subr.mxu0 0.0
      %2618 = vmatpush1.msra.mxu0 0.0
      %2619 = vmatprep.subr.mxu0 0.0
      %2620 = vmatpush1.msra.mxu0 0.0
      %2621 = vmatprep.mubr.f32.mxu0 0.0
      %2622 = vmatmul.mubr.f32.gmra.mrb[0].mxu0 %v2555
      %v2623 = vpop.f32.mrb[0].mxu0
      %v2624 = vadd.f32 0.0, %v2623
      %v2625 = vpop.f32.mrb[0].mxu0
      %2626 = vdwg.mxu0
      %v2628 = vsel %vm1822, %v2401, 0
      %2630 = vmatprep.subr.mxu0 0.0
      %2631 = vmatpush1.msra.mxu0 %v2479
      %2632 = vmatprep.subr.mxu0 0.0
      %2633 = vmatpush1.msra.mxu0 0.0
      %2634 = vmatprep.subr.mxu0 0.0
      %2635 = vmatpush1.msra.mxu0 0.0
      %2636 = vmatprep.subr.mxu0 0.0
      %2637 = vmatpush1.msra.mxu0 0.0
      %2638 = vmatprep.subr.mxu0 0.0
      %2639 = vmatpush1.msra.mxu0 0.0
      %2640 = vmatprep.subr.mxu0 0.0
      %2641 = vmatpush1.msra.mxu0 0.0
      %2642 = vmatprep.subr.mxu0 0.0
      %2643 = vmatpush1.msra.mxu0 0.0
      %2644 = vmatprep.subr.mxu0 0.0
      %2645 = vmatpush1.msra.mxu0 0.0
      %2646 = vmatprep.subr.mxu0 0.0
      %2647 = vmatpush1.msra.mxu0 0.0
      %2648 = vmatprep.subr.mxu0 0.0
      %2649 = vmatpush1.msra.mxu0 0.0
      %2650 = vmatprep.subr.mxu0 0.0
      %2651 = vmatpush1.msra.mxu0 0.0
      %2652 = vmatprep.subr.mxu0 0.0
      %2653 = vmatpush1.msra.mxu0 0.0
      %2654 = vmatprep.subr.mxu0 0.0
      %2655 = vmatpush1.msra.mxu0 0.0
      %2656 = vmatprep.subr.mxu0 0.0
      %2657 = vmatpush1.msra.mxu0 0.0
      %2658 = vmatprep.subr.mxu0 0.0
      %2659 = vmatpush1.msra.mxu0 0.0
      %2660 = vmatprep.subr.mxu0 0.0
      %2661 = vmatpush1.msra.mxu0 0.0
      %2662 = vmatprep.subr.mxu0 0.0
      %2663 = vmatpush1.msra.mxu0 0.0
      %2664 = vmatprep.subr.mxu0 0.0
      %2665 = vmatpush1.msra.mxu0 0.0
      %2666 = vmatprep.subr.mxu0 0.0
      %2667 = vmatpush1.msra.mxu0 0.0
      %2668 = vmatprep.subr.mxu0 0.0
      %2669 = vmatpush1.msra.mxu0 0.0
      %2670 = vmatprep.subr.mxu0 0.0
      %2671 = vmatpush1.msra.mxu0 0.0
      %2672 = vmatprep.subr.mxu0 0.0
      %2673 = vmatpush1.msra.mxu0 0.0
      %2674 = vmatprep.subr.mxu0 0.0
      %2675 = vmatpush1.msra.mxu0 0.0
      %2676 = vmatprep.subr.mxu0 0.0
      %2677 = vmatpush1.msra.mxu0 0.0
      %2678 = vmatprep.subr.mxu0 0.0
      %2679 = vmatpush1.msra.mxu0 0.0
      %2680 = vmatprep.subr.mxu0 0.0
      %2681 = vmatpush1.msra.mxu0 0.0
      %2682 = vmatprep.subr.mxu0 0.0
      %2683 = vmatpush1.msra.mxu0 0.0
      %2684 = vmatprep.subr.mxu0 0.0
      %2685 = vmatpush1.msra.mxu0 0.0
      %2686 = vmatprep.subr.mxu0 0.0
      %2687 = vmatpush1.msra.mxu0 0.0
      %2688 = vmatprep.subr.mxu0 0.0
      %2689 = vmatpush1.msra.mxu0 0.0
      %2690 = vmatprep.subr.mxu0 0.0
      %2691 = vmatpush1.msra.mxu0 0.0
      %2692 = vmatprep.subr.mxu0 0.0
      %2693 = vmatpush1.msra.mxu0 0.0
      %2694 = vmatprep.mubr.f32.mxu0 0.0
      %2695 = vmatmul.mubr.f32.gmra.mrb[0].mxu0 %v2628
      %v2696 = vpop.f32.mrb[0].mxu0
      %v2697 = vadd.f32 0.0, %v2696
      %v2698 = vpop.f32.mrb[0].mxu0
      %2699 = vdwg.mxu0
      %v2701 = vsel %vm1822, %v2474, 0
      %2703 = vmatprep.subr.mxu0 0.0
      %2704 = vmatpush1.msra.mxu0 %v2480
      %2705 = vmatprep.subr.mxu0 0.0
      %2706 = vmatpush1.msra.mxu0 0.0
      %2707 = vmatprep.subr.mxu0 0.0
      %2708 = vmatpush1.msra.mxu0 0.0
      %2709 = vmatprep.subr.mxu0 0.0
      %2710 = vmatpush1.msra.mxu0 0.0
      %2711 = vmatprep.subr.mxu0 0.0
      %2712 = vmatpush1.msra.mxu0 0.0
      %2713 = vmatprep.subr.mxu0 0.0
      %2714 = vmatpush1.msra.mxu0 0.0
      %2715 = vmatprep.subr.mxu0 0.0
      %2716 = vmatpush1.msra.mxu0 0.0
      %2717 = vmatprep.subr.mxu0 0.0
      %2718 = vmatpush1.msra.mxu0 0.0
      %2719 = vmatprep.subr.mxu0 0.0
      %2720 = vmatpush1.msra.mxu0 0.0
      %2721 = vmatprep.subr.mxu0 0.0
      %2722 = vmatpush1.msra.mxu0 0.0
      %2723 = vmatprep.subr.mxu0 0.0
      %2724 = vmatpush1.msra.mxu0 0.0
      %2725 = vmatprep.subr.mxu0 0.0
      %2726 = vmatpush1.msra.mxu0 0.0
      %2727 = vmatprep.subr.mxu0 0.0
      %2728 = vmatpush1.msra.mxu0 0.0
      %2729 = vmatprep.subr.mxu0 0.0
      %2730 = vmatpush1.msra.mxu0 0.0
      %2731 = vmatprep.subr.mxu0 0.0
      %2732 = vmatpush1.msra.mxu0 0.0
      %2733 = vmatprep.subr.mxu0 0.0
      %2734 = vmatpush1.msra.mxu0 0.0
      %2735 = vmatprep.subr.mxu0 0.0
      %2736 = vmatpush1.msra.mxu0 0.0
      %2737 = vmatprep.subr.mxu0 0.0
      %2738 = vmatpush1.msra.mxu0 0.0
      %2739 = vmatprep.subr.mxu0 0.0
      %2740 = vmatpush1.msra.mxu0 0.0
      %2741 = vmatprep.subr.mxu0 0.0
      %2742 = vmatpush1.msra.mxu0 0.0
      %2743 = vmatprep.subr.mxu0 0.0
      %2744 = vmatpush1.msra.mxu0 0.0
      %2745 = vmatprep.subr.mxu0 0.0
      %2746 = vmatpush1.msra.mxu0 0.0
      %2747 = vmatprep.subr.mxu0 0.0
      %2748 = vmatpush1.msra.mxu0 0.0
      %2749 = vmatprep.subr.mxu0 0.0
      %2750 = vmatpush1.msra.mxu0 0.0
      %2751 = vmatprep.subr.mxu0 0.0
      %2752 = vmatpush1.msra.mxu0 0.0
      %2753 = vmatprep.subr.mxu0 0.0
      %2754 = vmatpush1.msra.mxu0 0.0
      %2755 = vmatprep.subr.mxu0 0.0
      %2756 = vmatpush1.msra.mxu0 0.0
      %2757 = vmatprep.subr.mxu0 0.0
      %2758 = vmatpush1.msra.mxu0 0.0
      %2759 = vmatprep.subr.mxu0 0.0
      %2760 = vmatpush1.msra.mxu0 0.0
      %2761 = vmatprep.subr.mxu0 0.0
      %2762 = vmatpush1.msra.mxu0 0.0
      %2763 = vmatprep.subr.mxu0 0.0
      %2764 = vmatpush1.msra.mxu0 0.0
      %2765 = vmatprep.subr.mxu0 0.0
      %2766 = vmatpush1.msra.mxu0 0.0
      %2767 = vmatprep.mubr.f32.mxu0 0.0
      %2768 = vmatmul.mubr.f32.gmra.mrb[0].mxu0 %v2701
      %v2769 = vpop.f32.mrb[0].mxu0
      %v2770 = vadd.f32 0.0, %v2769
      %v2771 = vpop.f32.mrb[0].mxu0
      %2772 = vdwg.mxu0
      %v2773 = vsel %vm890, %v2551, 0.0
      %v2774 = vsel %vm890, %v2624, 0.0
      %v2775 = vadd.f32 %v2773, %v2774
      %v2776 = vsel %vm890, %v2697, 0.0
      %v2777 = vadd.f32 %v2775, %v2776
      %v2778 = vsel %vm890, %v2770, 0.0
      %v2779 = vadd.f32 %v2777, %v2778
      %v2780 = vld [vmem:[%s12] sm:$0x1]
      %v2782 = vlaneseq
      %v2783 = vshrl.u32 %v2782, 7
      %v2784 = vsub.s32 0, %v2783
      %v2785 = vrot.slane %v2780, %v2784
      %v2787 = vadd.f32 %v2779, %v2785
      %v2788 = vadd.f32 %v844, %v2787
      %v2789 = vld [vmem:[%s13] sm:$0x1]
      %v2790 = vld [vmem:[%s14] sm:$0x1]
      %v2791 = vsel %vm890, %v2788, 0.0
      %2792 = vadd.xlane.f32.xlu0 %v2791
      %v2793 = vpop.xlane.xlu0 %2792
      %v2794 = vrcp.pop 32.0
      %v2795 = vmul.f32 %v2793, %v2794
      %v2796 = vsub.f32 %v2788, %v2795
      %v2797 = vmul.f32 %v2796, %v2796
      %v2798 = vsel %vm890, %v2797, 0.0
      %2799 = vadd.xlane.f32.xlu0 %v2798
      %v2800 = vpop.xlane.xlu0 %2799
      %v2801 = vmul.f32 %v2800, %v2794
      %v2802 = vadd.f32 %v2801, 1e-05
      %v2803 = vrsqrt.pop %v2802
      %v2804 = vmul.f32 %v2796, %v2803
      %v2806 = vlaneseq
      %v2807 = vshrl.u32 %v2806, 7
      %v2808 = vsub.s32 0, %v2807
      %v2809 = vrot.slane %v2789, %v2808
      %v2811 = vmul.f32 %v2804, %v2809
      %v2813 = vlaneseq
      %v2814 = vshrl.u32 %v2813, 7
      %v2815 = vsub.s32 0, %v2814
      %v2816 = vrot.slane %v2790, %v2815
      %v2818 = vadd.f32 %v2811, %v2816
      %v2819 = vld [vmem:[%s15] sm:$0xff]
      %v2820 = vld [vmem:[%s15 + $0x8] sm:$0xff]
      %v2821 = vld [vmem:[%s15 + $0x10] sm:$0xff]
      %v2822 = vld [vmem:[%s15 + $0x18] sm:$0xff]
      %v2823 = vld [vmem:[%s16] sm:$0x1]
      %v2825 = vlaneseq
      %v2826 = vshrl.u32 %v2825, 7
      %v2827 = vsub.s32 0, %v2826
      %v2828 = vrot.slane %v2823, %v2827
      %v2831 = vsel %vm890, %v2818, 0
      %2833 = vmatprep.subr.mxu0 0.0
      %2834 = vmatpush1.msra.mxu0 %v2819
      %2835 = vmatprep.subr.mxu0 0.0
      %2836 = vmatpush1.msra.mxu0 %v2820
      %2837 = vmatprep.subr.mxu0 0.0
      %2838 = vmatpush1.msra.mxu0 %v2821
      %2839 = vmatprep.subr.mxu0 0.0
      %2840 = vmatpush1.msra.mxu0 %v2822
      %2841 = vmatprep.subr.mxu0 0.0
      %2842 = vmatpush1.msra.mxu0 0.0
      %2843 = vmatprep.subr.mxu0 0.0
      %2844 = vmatpush1.msra.mxu0 0.0
      %2845 = vmatprep.subr.mxu0 0.0
      %2846 = vmatpush1.msra.mxu0 0.0
      %2847 = vmatprep.subr.mxu0 0.0
      %2848 = vmatpush1.msra.mxu0 0.0
      %2849 = vmatprep.subr.mxu0 0.0
      %2850 = vmatpush1.msra.mxu0 0.0
      %2851 = vmatprep.subr.mxu0 0.0
      %2852 = vmatpush1.msra.mxu0 0.0
      %2853 = vmatprep.subr.mxu0 0.0
      %2854 = vmatpush1.msra.mxu0 0.0
      %2855 = vmatprep.subr.mxu0 0.0
      %2856 = vmatpush1.msra.mxu0 0.0
      %2857 = vmatprep.subr.mxu0 0.0
      %2858 = vmatpush1.msra.mxu0 0.0
      %2859 = vmatprep.subr.mxu0 0.0
      %2860 = vmatpush1.msra.mxu0 0.0
      %2861 = vmatprep.subr.mxu0 0.0
      %2862 = vmatpush1.msra.mxu0 0.0
      %2863 = vmatprep.subr.mxu0 0.0
      %2864 = vmatpush1.msra.mxu0 0.0
      %2865 = vmatprep.subr.mxu0 0.0
      %2866 = vmatpush1.msra.mxu0 0.0
      %2867 = vmatprep.subr.mxu0 0.0
      %2868 = vmatpush1.msra.mxu0 0.0
      %2869 = vmatprep.subr.mxu0 0.0
      %2870 = vmatpush1.msra.mxu0 0.0
      %2871 = vmatprep.subr.mxu0 0.0
      %2872 = vmatpush1.msra.mxu0 0.0
      %2873 = vmatprep.subr.mxu0 0.0
      %2874 = vmatpush1.msra.mxu0 0.0
      %2875 = vmatprep.subr.mxu0 0.0
      %2876 = vmatpush1.msra.mxu0 0.0
      %2877 = vmatprep.subr.mxu0 0.0
      %2878 = vmatpush1.msra.mxu0 0.0
      %2879 = vmatprep.subr.mxu0 0.0
      %2880 = vmatpush1.msra.mxu0 0.0
      %2881 = vmatprep.subr.mxu0 0.0
      %2882 = vmatpush1.msra.mxu0 0.0
      %2883 = vmatprep.subr.mxu0 0.0
      %2884 = vmatpush1.msra.mxu0 0.0
      %2885 = vmatprep.subr.mxu0 0.0
      %2886 = vmatpush1.msra.mxu0 0.0
      %2887 = vmatprep.subr.mxu0 0.0
      %2888 = vmatpush1.msra.mxu0 0.0
      %2889 = vmatprep.subr.mxu0 0.0
      %2890 = vmatpush1.msra.mxu0 0.0
      %2891 = vmatprep.subr.mxu0 0.0
      %2892 = vmatpush1.msra.mxu0 0.0
      %2893 = vmatprep.subr.mxu0 0.0
      %2894 = vmatpush1.msra.mxu0 0.0
      %2895 = vmatprep.subr.mxu0 0.0
      %2896 = vmatpush1.msra.mxu0 0.0
      %2897 = vmatprep.mubr.f32.mxu0 0.0
      %2898 = vmatmul.mubr.f32.gmra.mrb[0].mxu0 %v2831
      %v2899 = vpop.f32.mrb[0].mxu0
      %v2900 = vadd.f32 %v2828, %v2899
      %v2901 = vpop.f32.mrb[0].mxu0
      %2902 = vdwg.mxu0
      %v2903 = vmax.f32 %v2900, 0.0
      %v2904 = vld [vmem:[%s17] sm:$0xff]
      %v2905 = vld [vmem:[%s17 + $0x8] sm:$0xff]
      %v2906 = vld [vmem:[%s17 + $0x10] sm:$0xff]
      %v2907 = vld [vmem:[%s17 + $0x18] sm:$0xff]
      %v2908 = vld [vmem:[%s17 + $0x20] sm:$0xff]
      %v2909 = vld [vmem:[%s17 + $0x28] sm:$0xff]
      %v2910 = vld [vmem:[%s17 + $0x30] sm:$0xff]
      %v2911 = vld [vmem:[%s17 + $0x38] sm:$0xff]
      %v2912 = vld [vmem:[%s18] sm:$0x1]
      %v2914 = vlaneseq
      %v2915 = vshrl.u32 %v2914, 7
      %v2916 = vsub.s32 0, %v2915
      %v2917 = vrot.slane %v2912, %v2916
      %vm2919 = vcmask 523264
      %v2921 = vsel %vm2919, %v2903, 0
      %2923 = vmatprep.subr.mxu0 0.0
      %2924 = vmatpush1.msra.mxu0 %v2904
      %2925 = vmatprep.subr.mxu0 0.0
      %2926 = vmatpush1.msra.mxu0 %v2905
      %2927 = vmatprep.subr.mxu0 0.0
      %2928 = vmatpush1.msra.mxu0 %v2906
      %2929 = vmatprep.subr.mxu0 0.0
      %2930 = vmatpush1.msra.mxu0 %v2907
      %2931 = vmatprep.subr.mxu0 0.0
      %2932 = vmatpush1.msra.mxu0 %v2908
      %2933 = vmatprep.subr.mxu0 0.0
      %2934 = vmatpush1.msra.mxu0 %v2909
      %2935 = vmatprep.subr.mxu0 0.0
      %2936 = vmatpush1.msra.mxu0 %v2910
      %2937 = vmatprep.subr.mxu0 0.0
      %2938 = vmatpush1.msra.mxu0 %v2911
      %2939 = vmatprep.subr.mxu0 0.0
      %2940 = vmatpush1.msra.mxu0 0.0
      %2941 = vmatprep.subr.mxu0 0.0
      %2942 = vmatpush1.msra.mxu0 0.0
      %2943 = vmatprep.subr.mxu0 0.0
      %2944 = vmatpush1.msra.mxu0 0.0
      %2945 = vmatprep.subr.mxu0 0.0
      %2946 = vmatpush1.msra.mxu0 0.0
      %2947 = vmatprep.subr.mxu0 0.0
      %2948 = vmatpush1.msra.mxu0 0.0
      %2949 = vmatprep.subr.mxu0 0.0
      %2950 = vmatpush1.msra.mxu0 0.0
      %2951 = vmatprep.subr.mxu0 0.0
      %2952 = vmatpush1.msra.mxu0 0.0
      %2953 = vmatprep.subr.mxu0 0.0
      %2954 = vmatpush1.msra.mxu0 0.0
      %2955 = vmatprep.subr.mxu0 0.0
      %2956 = vmatpush1.msra.mxu0 0.0
      %2957 = vmatprep.subr.mxu0 0.0
      %2958 = vmatpush1.msra.mxu0 0.0
      %2959 = vmatprep.subr.mxu0 0.0
      %2960 = vmatpush1.msra.mxu0 0.0
      %2961 = vmatprep.subr.mxu0 0.0
      %2962 = vmatpush1.msra.mxu0 0.0
      %2963 = vmatprep.subr.mxu0 0.0
      %2964 = vmatpush1.msra.mxu0 0.0
      %2965 = vmatprep.subr.mxu0 0.0
      %2966 = vmatpush1.msra.mxu0 0.0
      %2967 = vmatprep.subr.mxu0 0.0
      %2968 = vmatpush1.msra.mxu0 0.0
      %2969 = vmatprep.subr.mxu0 0.0
      %2970 = vmatpush1.msra.mxu0 0.0
      %2971 = vmatprep.subr.mxu0 0.0
      %2972 = vmatpush1.msra.mxu0 0.0
      %2973 = vmatprep.subr.mxu0 0.0
      %2974 = vmatpush1.msra.mxu0 0.0
      %2975 = vmatprep.subr.mxu0 0.0
      %2976 = vmatpush1.msra.mxu0 0.0
      %2977 = vmatprep.subr.mxu0 0.0
      %2978 = vmatpush1.msra.mxu0 0.0
      %2979 = vmatprep.subr.mxu0 0.0
      %2980 = vmatpush1.msra.mxu0 0.0
      %2981 = vmatprep.subr.mxu0 0.0
      %2982 = vmatpush1.msra.mxu0 0.0
      %2983 = vmatprep.subr.mxu0 0.0
      %2984 = vmatpush1.msra.mxu0 0.0
      %2985 = vmatprep.subr.mxu0 0.0
      %2986 = vmatpush1.msra.mxu0 0.0
      %2987 = vmatprep.mubr.f32.mxu0 0.0
      %2988 = vmatmul.mubr.f32.gmra.mrb[0].mxu0 %v2921
      %v2989 = vpop.f32.mrb[0].mxu0
      %v2990 = vadd.f32 %v2917, %v2989
      %v2991 = vpop.f32.mrb[0].mxu0
      %2992 = vdwg.mxu0
      %v2993 = vadd.f32 %v2818, %v2990
      %v2994 = vld [vmem:[%s19] sm:$0x1]
      %v2995 = vld [vmem:[%s20] sm:$0x1]
      %v2996 = vsel %vm890, %v2993, 0.0
      %2997 = vadd.xlane.f32.xlu0 %v2996
      %v2998 = vpop.xlane.xlu0 %2997
      %v2999 = vmul.f32 %v2998, %v2794
      %v3000 = vsub.f32 %v2993, %v2999
      %v3001 = vmul.f32 %v3000, %v3000
      %v3002 = vsel %vm890, %v3001, 0.0
      %3003 = vadd.xlane.f32.xlu0 %v3002
      %v3004 = vpop.xlane.xlu0 %3003
      %v3005 = vmul.f32 %v3004, %v2794
      %v3006 = vadd.f32 %v3005, 1e-05
      %v3007 = vrsqrt.pop %v3006
      %v3008 = vmul.f32 %v3000, %v3007
      %v3010 = vlaneseq
      %v3011 = vshrl.u32 %v3010, 7
      %v3012 = vsub.s32 0, %v3011
      %v3013 = vrot.slane %v2994, %v3012
      %v3015 = vmul.f32 %v3008, %v3013
      %v3017 = vlaneseq
      %v3018 = vshrl.u32 %v3017, 7
      %v3019 = vsub.s32 0, %v3018
      %v3020 = vrot.slane %v2995, %v3019
      %v3022 = vadd.f32 %v3015, %v3020
      %s3023 = scalar_lea.vmem %s5, 128
      %v3024 = vld [vmem:[%s3023] sm:$0xff]
      %v3025 = vld [vmem:[%s3023 + $0x8] sm:$0xff]
      %v3026 = vld [vmem:[%s3023 + $0x10] sm:$0xff]
      %v3027 = vld [vmem:[%s3023 + $0x18] sm:$0xff]
      %v3028 = vld [vmem:[%s3023 + $0x20] sm:$0xff]
      %v3029 = vld [vmem:[%s3023 + $0x28] sm:$0xff]
      %v3030 = vld [vmem:[%s3023 + $0x30] sm:$0xff]
      %v3031 = vld [vmem:[%s3023 + $0x38] sm:$0xff]
      %v3032 = vld [vmem:[%s3023 + $0x40] sm:$0xff]
      %v3033 = vld [vmem:[%s3023 + $0x48] sm:$0xff]
      %v3034 = vld [vmem:[%s3023 + $0x50] sm:$0xff]
      %v3035 = vld [vmem:[%s3023 + $0x58] sm:$0xff]
      %v3036 = vld [vmem:[%s3023 + $0x60] sm:$0xff]
      %v3037 = vld [vmem:[%s3023 + $0x68] sm:$0xff]
      %v3038 = vld [vmem:[%s3023 + $0x70] sm:$0xff]
      %v3039 = vld [vmem:[%s3023 + $0x78] sm:$0xff]
      %s3040 = scalar_lea.vmem %s8, 4
      %v3041 = vld [vmem:[%s3040] sm:$0x1]
      %v3042 = vld [vmem:[%s3040 + $0x1] sm:$0x1]
      %v3043 = vld [vmem:[%s3040 + $0x2] sm:$0x1]
      %v3044 = vld [vmem:[%s3040 + $0x3] sm:$0x1]
      %v3049 = vlaneseq
      %v3050 = vshrl.u32 %v3049, 7
      %v3051 = vsub.s32 0, %v3050
      %v3052 = vrot.slane %v3041, %v3051
      %v3053 = vlaneseq
      %v3054 = vshrl.u32 %v3053, 7
      %v3055 = vsub.s32 0, %v3054
      %v3056 = vrot.slane %v3042, %v3055
      %v3057 = vlaneseq
      %v3058 = vshrl.u32 %v3057, 7
      %v3059 = vsub.s32 0, %v3058
      %v3060 = vrot.slane %v3043, %v3059
      %v3061 = vlaneseq
      %v3062 = vshrl.u32 %v3061, 7
      %v3063 = vsub.s32 0, %v3062
      %v3064 = vrot.slane %v3044, %v3063
      %v3070 = vsel %vm890, %v3022, 0
      %3072 = vmatprep.subr.mxu0 0.0
      %3073 = vmatpush1.msra.mxu0 %v3024
      %3074 = vmatprep.subr.mxu0 0.0
      %3075 = vmatpush1.msra.mxu0 %v3025
      %3076 = vmatprep.subr.mxu0 0.0
      %3077 = vmatpush1.msra.mxu0 %v3026
      %3078 = vmatprep.subr.mxu0 0.0
      %3079 = vmatpush1.msra.mxu0 %v3027
      %3080 = vmatprep.subr.mxu0 0.0
      %3081 = vmatpush1.msra.mxu0 0.0
      %3082 = vmatprep.subr.mxu0 0.0
      %3083 = vmatpush1.msra.mxu0 0.0
      %3084 = vmatprep.subr.mxu0 0.0
      %3085 = vmatpush1.msra.mxu0 0.0
      %3086 = vmatprep.subr.mxu0 0.0
      %3087 = vmatpush1.msra.mxu0 0.0
      %3088 = vmatprep.subr.mxu0 0.0
      %3089 = vmatpush1.msra.mxu0 0.0
      %3090 = vmatprep.subr.mxu0 0.0
      %3091 = vmatpush1.msra.mxu0 0.0
      %3092 = vmatprep.subr.mxu0 0.0
      %3093 = vmatpush1.msra.mxu0 0.0
      %3094 = vmatprep.subr.mxu0 0.0
      %3095 = vmatpush1.msra.mxu0 0.0
      %3096 = vmatprep.subr.mxu0 0.0
      %3097 = vmatpush1.msra.mxu0 0.0
      %3098 = vmatprep.subr.mxu0 0.0
      %3099 = vmatpush1.msra.mxu0 0.0
      %3100 = vmatprep.subr.mxu0 0.0
      %3101 = vmatpush1.msra.mxu0 0.0
      %3102 = vmatprep.subr.mxu0 0.0
      %3103 = vmatpush1.msra.mxu0 0.0
      %3104 = vmatprep.subr.mxu0 0.0
      %3105 = vmatpush1.msra.mxu0 0.0
      %3106 = vmatprep.subr.mxu0 0.0
      %3107 = vmatpush1.msra.mxu0 0.0
      %3108 = vmatprep.subr.mxu0 0.0
      %3109 = vmatpush1.msra.mxu0 0.0
      %3110 = vmatprep.subr.mxu0 0.0
      %3111 = vmatpush1.msra.mxu0 0.0
      %3112 = vmatprep.subr.mxu0 0.0
      %3113 = vmatpush1.msra.mxu0 0.0
      %3114 = vmatprep.subr.mxu0 0.0
      %3115 = vmatpush1.msra.mxu0 0.0
      %3116 = vmatprep.subr.mxu0 0.0
      %3117 = vmatpush1.msra.mxu0 0.0
      %3118 = vmatprep.subr.mxu0 0.0
      %3119 = vmatpush1.msra.mxu0 0.0
      %3120 = vmatprep.subr.mxu0 0.0
      %3121 = vmatpush1.msra.mxu0 0.0
      %3122 = vmatprep.subr.mxu0 0.0
      %3123 = vmatpush1.msra.mxu0 0.0
      %3124 = vmatprep.subr.mxu0 0.0
      %3125 = vmatpush1.msra.mxu0 0.0
      %3126 = vmatprep.subr.mxu0 0.0
      %3127 = vmatpush1.msra.mxu0 0.0
      %3128 = vmatprep.subr.mxu0 0.0
      %3129 = vmatpush1.msra.mxu0 0.0
      %3130 = vmatprep.subr.mxu0 0.0
      %3131 = vmatpush1.msra.mxu0 0.0
      %3132 = vmatprep.subr.mxu0 0.0
      %3133 = vmatpush1.msra.mxu0 0.0
      %3134 = vmatprep.subr.mxu0 0.0
      %3135 = vmatpush1.msra.mxu0 0.0
      %3136 = vmatprep.mubr.f32.mxu0 0.0
      %3137 = vmatmul.mubr.f32.gmra.mrb[0].mxu0 %v3070
      %v3138 = vpop.f32.mrb[0].mxu0
      %v3139 = vadd.f32 %v3052, %v3138
      %v3140 = vpop.f32.mrb[0].mxu0
      %3141 = vdwg.mxu0
      %3142 = vmatprep.subr.mxu0 0.0
      %3143 = vmatpush1.msra.mxu0 %v3028
      %3144 = vmatprep.subr.mxu0 0.0
      %3145 = vmatpush1.msra.mxu0 %v3029
      %3146 = vmatprep.subr.mxu0 0.0
      %3147 = vmatpush1.msra.mxu0 %v3030
      %3148 = vmatprep.subr.mxu0 0.0
      %3149 = vmatpush1.msra.mxu0 %v3031
      %3150 = vmatprep.subr.mxu0 0.0
      %3151 = vmatpush1.msra.mxu0 0.0
      %3152 = vmatprep.subr.mxu0 0.0
      %3153 = vmatpush1.msra.mxu0 0.0
      %3154 = vmatprep.subr.mxu0 0.0
      %3155 = vmatpush1.msra.mxu0 0.0
      %3156 = vmatprep.subr.mxu0 0.0
      %3157 = vmatpush1.msra.mxu0 0.0
      %3158 = vmatprep.subr.mxu0 0.0
      %3159 = vmatpush1.msra.mxu0 0.0
      %3160 = vmatprep.subr.mxu0 0.0
      %3161 = vmatpush1.msra.mxu0 0.0
      %3162 = vmatprep.subr.mxu0 0.0
      %3163 = vmatpush1.msra.mxu0 0.0
      %3164 = vmatprep.subr.mxu0 0.0
      %3165 = vmatpush1.msra.mxu0 0.0
      %3166 = vmatprep.subr.mxu0 0.0
      %3167 = vmatpush1.msra.mxu0 0.0
      %3168 = vmatprep.subr.mxu0 0.0
      %3169 = vmatpush1.msra.mxu0 0.0
      %3170 = vmatprep.subr.mxu0 0.0
      %3171 = vmatpush1.msra.mxu0 0.0
      %3172 = vmatprep.subr.mxu0 0.0
      %3173 = vmatpush1.msra.mxu0 0.0
      %3174 = vmatprep.subr.mxu0 0.0
      %3175 = vmatpush1.msra.mxu0 0.0
      %3176 = vmatprep.subr.mxu0 0.0
      %3177 = vmatpush1.msra.mxu0 0.0
      %3178 = vmatprep.subr.mxu0 0.0
      %3179 = vmatpush1.msra.mxu0 0.0
      %3180 = vmatprep.subr.mxu0 0.0
      %3181 = vmatpush1.msra.mxu0 0.0
      %3182 = vmatprep.subr.mxu0 0.0
      %3183 = vmatpush1.msra.mxu0 0.0
      %3184 = vmatprep.subr.mxu0 0.0
      %3185 = vmatpush1.msra.mxu0 0.0
      %3186 = vmatprep.subr.mxu0 0.0
      %3187 = vmatpush1.msra.mxu0 0.0
      %3188 = vmatprep.subr.mxu0 0.0
      %3189 = vmatpush1.msra.mxu0 0.0
      %3190 = vmatprep.subr.mxu0 0.0
      %3191 = vmatpush1.msra.mxu0 0.0
      %3192 = vmatprep.subr.mxu0 0.0
      %3193 = vmatpush1.msra.mxu0 0.0
      %3194 = vmatprep.subr.mxu0 0.0
      %3195 = vmatpush1.msra.mxu0 0.0
      %3196 = vmatprep.subr.mxu0 0.0
      %3197 = vmatpush1.msra.mxu0 0.0
      %3198 = vmatprep.subr.mxu0 0.0
      %3199 = vmatpush1.msra.mxu0 0.0
      %3200 = vmatprep.subr.mxu0 0.0
      %3201 = vmatpush1.msra.mxu0 0.0
      %3202 = vmatprep.subr.mxu0 0.0
      %3203 = vmatpush1.msra.mxu0 0.0
      %3204 = vmatprep.subr.mxu0 0.0
      %3205 = vmatpush1.msra.mxu0 0.0
      %3206 = vmatprep.mubr.f32.mxu0 0.0
      %3207 = vmatmul.mubr.f32.gmra.mrb[0].mxu0 %v3070
      %v3208 = vpop.f32.mrb[0].mxu0
      %v3209 = vadd.f32 %v3056, %v3208
      %v3210 = vpop.f32.mrb[0].mxu0
      %3211 = vdwg.mxu0
      %3212 = vmatprep.subr.mxu0 0.0
      %3213 = vmatpush1.msra.mxu0 %v3032
      %3214 = vmatprep.subr.mxu0 0.0
      %3215 = vmatpush1.msra.mxu0 %v3033
      %3216 = vmatprep.subr.mxu0 0.0
      %3217 = vmatpush1.msra.mxu0 %v3034
      %3218 = vmatprep.subr.mxu0 0.0
      %3219 = vmatpush1.msra.mxu0 %v3035
      %3220 = vmatprep.subr.mxu0 0.0
      %3221 = vmatpush1.msra.mxu0 0.0
      %3222 = vmatprep.subr.mxu0 0.0
      %3223 = vmatpush1.msra.mxu0 0.0
      %3224 = vmatprep.subr.mxu0 0.0
      %3225 = vmatpush1.msra.mxu0 0.0
      %3226 = vmatprep.subr.mxu0 0.0
      %3227 = vmatpush1.msra.mxu0 0.0
      %3228 = vmatprep.subr.mxu0 0.0
      %3229 = vmatpush1.msra.mxu0 0.0
      %3230 = vmatprep.subr.mxu0 0.0
      %3231 = vmatpush1.msra.mxu0 0.0
      %3232 = vmatprep.subr.mxu0 0.0
      %3233 = vmatpush1.msra.mxu0 0.0
      %3234 = vmatprep.subr.mxu0 0.0
      %3235 = vmatpush1.msra.mxu0 0.0
      %3236 = vmatprep.subr.mxu0 0.0
      %3237 = vmatpush1.msra.mxu0 0.0
      %3238 = vmatprep.subr.mxu0 0.0
      %3239 = vmatpush1.msra.mxu0 0.0
      %3240 = vmatprep.subr.mxu0 0.0
      %3241 = vmatpush1.msra.mxu0 0.0
      %3242 = vmatprep.subr.mxu0 0.0
      %3243 = vmatpush1.msra.mxu0 0.0
      %3244 = vmatprep.subr.mxu0 0.0
      %3245 = vmatpush1.msra.mxu0 0.0
      %3246 = vmatprep.subr.mxu0 0.0
      %3247 = vmatpush1.msra.mxu0 0.0
      %3248 = vmatprep.subr.mxu0 0.0
      %3249 = vmatpush1.msra.mxu0 0.0
      %3250 = vmatprep.subr.mxu0 0.0
      %3251 = vmatpush1.msra.mxu0 0.0
      %3252 = vmatprep.subr.mxu0 0.0
      %3253 = vmatpush1.msra.mxu0 0.0
      %3254 = vmatprep.subr.mxu0 0.0
      %3255 = vmatpush1.msra.mxu0 0.0
      %3256 = vmatprep.subr.mxu0 0.0
      %3257 = vmatpush1.msra.mxu0 0.0
      %3258 = vmatprep.subr.mxu0 0.0
      %3259 = vmatpush1.msra.mxu0 0.0
      %3260 = vmatprep.subr.mxu0 0.0
      %3261 = vmatpush1.msra.mxu0 0.0
      %3262 = vmatprep.subr.mxu0 0.0
      %3263 = vmatpush1.msra.mxu0 0.0
      %3264 = vmatprep.subr.mxu0 0.0
      %3265 = vmatpush1.msra.mxu0 0.0
      %3266 = vmatprep.subr.mxu0 0.0
      %3267 = vmatpush1.msra.mxu0 0.0
      %3268 = vmatprep.subr.mxu0 0.0
      %3269 = vmatpush1.msra.mxu0 0.0
      %3270 = vmatprep.subr.mxu0 0.0
      %3271 = vmatpush1.msra.mxu0 0.0
      %3272 = vmatprep.subr.mxu0 0.0
      %3273 = vmatpush1.msra.mxu0 0.0
      %3274 = vmatprep.subr.mxu0 0.0
      %3275 = vmatpush1.msra.mxu0 0.0
      %3276 = vmatprep.mubr.f32.mxu0 0.0
      %3277 = vmatmul.mubr.f32.gmra.mrb[0].mxu0 %v3070
      %v3278 = vpop.f32.mrb[0].mxu0
      %v3279 = vadd.f32 %v3060, %v3278
      %v3280 = vpop.f32.mrb[0].mxu0
      %3281 = vdwg.mxu0
      %3282 = vmatprep.subr.mxu0 0.0
      %3283 = vmatpush1.msra.mxu0 %v3036
      %3284 = vmatprep.subr.mxu0 0.0
      %3285 = vmatpush1.msra.mxu0 %v3037
      %3286 = vmatprep.subr.mxu0 0.0
      %3287 = vmatpush1.msra.mxu0 %v3038
      %3288 = vmatprep.subr.mxu0 0.0
      %3289 = vmatpush1.msra.mxu0 %v3039
      %3290 = vmatprep.subr.mxu0 0.0
      %3291 = vmatpush1.msra.mxu0 0.0
      %3292 = vmatprep.subr.mxu0 0.0
      %3293 = vmatpush1.msra.mxu0 0.0
      %3294 = vmatprep.subr.mxu0 0.0
      %3295 = vmatpush1.msra.mxu0 0.0
      %3296 = vmatprep.subr.mxu0 0.0
      %3297 = vmatpush1.msra.mxu0 0.0
      %3298 = vmatprep.subr.mxu0 0.0
      %3299 = vmatpush1.msra.mxu0 0.0
      %3300 = vmatprep.subr.mxu0 0.0
      %3301 = vmatpush1.msra.mxu0 0.0
      %3302 = vmatprep.subr.mxu0 0.0
      %3303 = vmatpush1.msra.mxu0 0.0
      %3304 = vmatprep.subr.mxu0 0.0
      %3305 = vmatpush1.msra.mxu0 0.0
      %3306 = vmatprep.subr.mxu0 0.0
      %3307 = vmatpush1.msra.mxu0 0.0
      %3308 = vmatprep.subr.mxu0 0.0
      %3309 = vmatpush1.msra.mxu0 0.0
      %3310 = vmatprep.subr.mxu0 0.0
      %3311 = vmatpush1.msra.mxu0 0.0
      %3312 = vmatprep.subr.mxu0 0.0
      %3313 = vmatpush1.msra.mxu0 0.0
      %3314 = vmatprep.subr.mxu0 0.0
      %3315 = vmatpush1.msra.mxu0 0.0
      %3316 = vmatprep.subr.mxu0 0.0
      %3317 = vmatpush1.msra.mxu0 0.0
      %3318 = vmatprep.subr.mxu0 0.0
      %3319 = vmatpush1.msra.mxu0 0.0
      %3320 = vmatprep.subr.mxu0 0.0
      %3321 = vmatpush1.msra.mxu0 0.0
      %3322 = vmatprep.subr.mxu0 0.0
      %3323 = vmatpush1.msra.mxu0 0.0
      %3324 = vmatprep.subr.mxu0 0.0
      %3325 = vmatpush1.msra.mxu0 0.0
      %3326 = vmatprep.subr.mxu0 0.0
      %3327 = vmatpush1.msra.mxu0 0.0
      %3328 = vmatprep.subr.mxu0 0.0
      %3329 = vmatpush1.msra.mxu0 0.0
      %3330 = vmatprep.subr.mxu0 0.0
      %3331 = vmatpush1.msra.mxu0 0.0
      %3332 = vmatprep.subr.mxu0 0.0
      %3333 = vmatpush1.msra.mxu0 0.0
      %3334 = vmatprep.subr.mxu0 0.0
      %3335 = vmatpush1.msra.mxu0 0.0
      %3336 = vmatprep.subr.mxu0 0.0
      %3337 = vmatpush1.msra.mxu0 0.0
      %3338 = vmatprep.subr.mxu0 0.0
      %3339 = vmatpush1.msra.mxu0 0.0
      %3340 = vmatprep.subr.mxu0 0.0
      %3341 = vmatpush1.msra.mxu0 0.0
      %3342 = vmatprep.subr.mxu0 0.0
      %3343 = vmatpush1.msra.mxu0 0.0
      %3344 = vmatprep.subr.mxu0 0.0
      %3345 = vmatpush1.msra.mxu0 0.0
      %3346 = vmatprep.mubr.f32.mxu0 0.0
      %3347 = vmatmul.mubr.f32.gmra.mrb[0].mxu0 %v3070
      %v3348 = vpop.f32.mrb[0].mxu0
      %v3349 = vadd.f32 %v3064, %v3348
      %v3350 = vpop.f32.mrb[0].mxu0
      %3351 = vdwg.mxu0
      %s3352 = scalar_lea.vmem %s6, 128
      %v3353 = vld [vmem:[%s3352] sm:$0xff]
      %v3354 = vld [vmem:[%s3352 + $0x8] sm:$0xff]
      %v3355 = vld [vmem:[%s3352 + $0x10] sm:$0xff]
      %v3356 = vld [vmem:[%s3352 + $0x18] sm:$0xff]
      %v3357 = vld [vmem:[%s3352 + $0x20] sm:$0xff]
      %v3358 = vld [vmem:[%s3352 + $0x28] sm:$0xff]
      %v3359 = vld [vmem:[%s3352 + $0x30] sm:$0xff]
      %v3360 = vld [vmem:[%s3352 + $0x38] sm:$0xff]
      %v3361 = vld [vmem:[%s3352 + $0x40] sm:$0xff]
      %v3362 = vld [vmem:[%s3352 + $0x48] sm:$0xff]
      %v3363 = vld [vmem:[%s3352 + $0x50] sm:$0xff]
      %v3364 = vld [vmem:[%s3352 + $0x58] sm:$0xff]
      %v3365 = vld [vmem:[%s3352 + $0x60] sm:$0xff]
      %v3366 = vld [vmem:[%s3352 + $0x68] sm:$0xff]
      %v3367 = vld [vmem:[%s3352 + $0x70] sm:$0xff]
      %v3368 = vld [vmem:[%s3352 + $0x78] sm:$0xff]
      %s3369 = scalar_lea.vmem %s9, 4
      %v3370 = vld [vmem:[%s3369] sm:$0x1]
      %v3371 = vld [vmem:[%s3369 + $0x1] sm:$0x1]
      %v3372 = vld [vmem:[%s3369 + $0x2] sm:$0x1]
      %v3373 = vld [vmem:[%s3369 + $0x3] sm:$0x1]
      %v3378 = vlaneseq
      %v3379 = vshrl.u32 %v3378, 7
      %v3380 = vsub.s32 0, %v3379
      %v3381 = vrot.slane %v3370, %v3380
      %v3382 = vlaneseq
      %v3383 = vshrl.u32 %v3382, 7
      %v3384 = vsub.s32 0, %v3383
      %v3385 = vrot.slane %v3371, %v3384
      %v3386 = vlaneseq
      %v3387 = vshrl.u32 %v3386, 7
      %v3388 = vsub.s32 0, %v3387
      %v3389 = vrot.slane %v3372, %v3388
      %v3390 = vlaneseq
      %v3391 = vshrl.u32 %v3390, 7
      %v3392 = vsub.s32 0, %v3391
      %v3393 = vrot.slane %v3373, %v3392
      %3398 = vmatprep.subr.mxu0 0.0
      %3399 = vmatpush1.msra.mxu0 %v3353
      %3400 = vmatprep.subr.mxu0 0.0
      %3401 = vmatpush1.msra.mxu0 %v3354
      %3402 = vmatprep.subr.mxu0 0.0
      %3403 = vmatpush1.msra.mxu0 %v3355
      %3404 = vmatprep.subr.mxu0 0.0
      %3405 = vmatpush1.msra.mxu0 %v3356
      %3406 = vmatprep.subr.mxu0 0.0
      %3407 = vmatpush1.msra.mxu0 0.0
      %3408 = vmatprep.subr.mxu0 0.0
      %3409 = vmatpush1.msra.mxu0 0.0
      %3410 = vmatprep.subr.mxu0 0.0
      %3411 = vmatpush1.msra.mxu0 0.0
      %3412 = vmatprep.subr.mxu0 0.0
      %3413 = vmatpush1.msra.mxu0 0.0
      %3414 = vmatprep.subr.mxu0 0.0
      %3415 = vmatpush1.msra.mxu0 0.0
      %3416 = vmatprep.subr.mxu0 0.0
      %3417 = vmatpush1.msra.mxu0 0.0
      %3418 = vmatprep.subr.mxu0 0.0
      %3419 = vmatpush1.msra.mxu0 0.0
      %3420 = vmatprep.subr.mxu0 0.0
      %3421 = vmatpush1.msra.mxu0 0.0
      %3422 = vmatprep.subr.mxu0 0.0
      %3423 = vmatpush1.msra.mxu0 0.0
      %3424 = vmatprep.subr.mxu0 0.0
      %3425 = vmatpush1.msra.mxu0 0.0
      %3426 = vmatprep.subr.mxu0 0.0
      %3427 = vmatpush1.msra.mxu0 0.0
      %3428 = vmatprep.subr.mxu0 0.0
      %3429 = vmatpush1.msra.mxu0 0.0
      %3430 = vmatprep.subr.mxu0 0.0
      %3431 = vmatpush1.msra.mxu0 0.0
      %3432 = vmatprep.subr.mxu0 0.0
      %3433 = vmatpush1.msra.mxu0 0.0
      %3434 = vmatprep.subr.mxu0 0.0
      %3435 = vmatpush1.msra.mxu0 0.0
      %3436 = vmatprep.subr.mxu0 0.0
      %3437 = vmatpush1.msra.mxu0 0.0
      %3438 = vmatprep.subr.mxu0 0.0
      %3439 = vmatpush1.msra.mxu0 0.0
      %3440 = vmatprep.subr.mxu0 0.0
      %3441 = vmatpush1.msra.mxu0 0.0
      %3442 = vmatprep.subr.mxu0 0.0
      %3443 = vmatpush1.msra.mxu0 0.0
      %3444 = vmatprep.subr.mxu0 0.0
      %3445 = vmatpush1.msra.mxu0 0.0
      %3446 = vmatprep.subr.mxu0 0.0
      %3447 = vmatpush1.msra.mxu0 0.0
      %3448 = vmatprep.subr.mxu0 0.0
      %3449 = vmatpush1.msra.mxu0 0.0
      %3450 = vmatprep.subr.mxu0 0.0
      %3451 = vmatpush1.msra.mxu0 0.0
      %3452 = vmatprep.subr.mxu0 0.0
      %3453 = vmatpush1.msra.mxu0 0.0
      %3454 = vmatprep.subr.mxu0 0.0
      %3455 = vmatpush1.msra.mxu0 0.0
      %3456 = vmatprep.subr.mxu0 0.0
      %3457 = vmatpush1.msra.mxu0 0.0
      %3458 = vmatprep.subr.mxu0 0.0
      %3459 = vmatpush1.msra.mxu0 0.0
      %3460 = vmatprep.subr.mxu0 0.0
      %3461 = vmatpush1.msra.mxu0 0.0
      %3462 = vmatprep.mubr.f32.mxu0 0.0
      %3463 = vmatmul.mubr.f32.gmra.mrb[0].mxu0 %v3070
      %v3464 = vpop.f32.mrb[0].mxu0
      %v3465 = vadd.f32 %v3381, %v3464
      %v3466 = vpop.f32.mrb[0].mxu0
      %3467 = vdwg.mxu0
      %3468 = vmatprep.subr.mxu0 0.0
      %3469 = vmatpush1.msra.mxu0 %v3357
      %3470 = vmatprep.subr.mxu0 0.0
      %3471 = vmatpush1.msra.mxu0 %v3358
      %3472 = vmatprep.subr.mxu0 0.0
      %3473 = vmatpush1.msra.mxu0 %v3359
      %3474 = vmatprep.subr.mxu0 0.0
      %3475 = vmatpush1.msra.mxu0 %v3360
      %3476 = vmatprep.subr.mxu0 0.0
      %3477 = vmatpush1.msra.mxu0 0.0
      %3478 = vmatprep.subr.mxu0 0.0
      %3479 = vmatpush1.msra.mxu0 0.0
      %3480 = vmatprep.subr.mxu0 0.0
      %3481 = vmatpush1.msra.mxu0 0.0
      %3482 = vmatprep.subr.mxu0 0.0
      %3483 = vmatpush1.msra.mxu0 0.0
      %3484 = vmatprep.subr.mxu0 0.0
      %3485 = vmatpush1.msra.mxu0 0.0
      %3486 = vmatprep.subr.mxu0 0.0
      %3487 = vmatpush1.msra.mxu0 0.0
      %3488 = vmatprep.subr.mxu0 0.0
      %3489 = vmatpush1.msra.mxu0 0.0
      %3490 = vmatprep.subr.mxu0 0.0
      %3491 = vmatpush1.msra.mxu0 0.0
      %3492 = vmatprep.subr.mxu0 0.0
      %3493 = vmatpush1.msra.mxu0 0.0
      %3494 = vmatprep.subr.mxu0 0.0
      %3495 = vmatpush1.msra.mxu0 0.0
      %3496 = vmatprep.subr.mxu0 0.0
      %3497 = vmatpush1.msra.mxu0 0.0
      %3498 = vmatprep.subr.mxu0 0.0
      %3499 = vmatpush1.msra.mxu0 0.0
      %3500 = vmatprep.subr.mxu0 0.0
      %3501 = vmatpush1.msra.mxu0 0.0
      %3502 = vmatprep.subr.mxu0 0.0
      %3503 = vmatpush1.msra.mxu0 0.0
      %3504 = vmatprep.subr.mxu0 0.0
      %3505 = vmatpush1.msra.mxu0 0.0
      %3506 = vmatprep.subr.mxu0 0.0
      %3507 = vmatpush1.msra.mxu0 0.0
      %3508 = vmatprep.subr.mxu0 0.0
      %3509 = vmatpush1.msra.mxu0 0.0
      %3510 = vmatprep.subr.mxu0 0.0
      %3511 = vmatpush1.msra.mxu0 0.0
      %3512 = vmatprep.subr.mxu0 0.0
      %3513 = vmatpush1.msra.mxu0 0.0
      %3514 = vmatprep.subr.mxu0 0.0
      %3515 = vmatpush1.msra.mxu0 0.0
      %3516 = vmatprep.subr.mxu0 0.0
      %3517 = vmatpush1.msra.mxu0 0.0
      %3518 = vmatprep.subr.mxu0 0.0
      %3519 = vmatpush1.msra.mxu0 0.0
      %3520 = vmatprep.subr.mxu0 0.0
      %3521 = vmatpush1.msra.mxu0 0.0
      %3522 = vmatprep.subr.mxu0 0.0
      %3523 = vmatpush1.msra.mxu0 0.0
      %3524 = vmatprep.subr.mxu0 0.0
      %3525 = vmatpush1.msra.mxu0 0.0
      %3526 = vmatprep.subr.mxu0 0.0
      %3527 = vmatpush1.msra.mxu0 0.0
      %3528 = vmatprep.subr.mxu0 0.0
      %3529 = vmatpush1.msra.mxu0 0.0
      %3530 = vmatprep.subr.mxu0 0.0
      %3531 = vmatpush1.msra.mxu0 0.0
      %3532 = vmatprep.mubr.f32.mxu0 0.0
      %3533 = vmatmul.mubr.f32.gmra.mrb[0].mxu0 %v3070
      %v3534 = vpop.f32.mrb[0].mxu0
      %v3535 = vadd.f32 %v3385, %v3534
      %v3536 = vpop.f32.mrb[0].mxu0
      %3537 = vdwg.mxu0
      %3538 = vmatprep.subr.mxu0 0.0
      %3539 = vmatpush1.msra.mxu0 %v3361
      %3540 = vmatprep.subr.mxu0 0.0
      %3541 = vmatpush1.msra.mxu0 %v3362
      %3542 = vmatprep.subr.mxu0 0.0
      %3543 = vmatpush1.msra.mxu0 %v3363
      %3544 = vmatprep.subr.mxu0 0.0
      %3545 = vmatpush1.msra.mxu0 %v3364
      %3546 = vmatprep.subr.mxu0 0.0
      %3547 = vmatpush1.msra.mxu0 0.0
      %3548 = vmatprep.subr.mxu0 0.0
      %3549 = vmatpush1.msra.mxu0 0.0
      %3550 = vmatprep.subr.mxu0 0.0
      %3551 = vmatpush1.msra.mxu0 0.0
      %3552 = vmatprep.subr.mxu0 0.0
      %3553 = vmatpush1.msra.mxu0 0.0
      %3554 = vmatprep.subr.mxu0 0.0
      %3555 = vmatpush1.msra.mxu0 0.0
      %3556 = vmatprep.subr.mxu0 0.0
      %3557 = vmatpush1.msra.mxu0 0.0
      %3558 = vmatprep.subr.mxu0 0.0
      %3559 = vmatpush1.msra.mxu0 0.0
      %3560 = vmatprep.subr.mxu0 0.0
      %3561 = vmatpush1.msra.mxu0 0.0
      %3562 = vmatprep.subr.mxu0 0.0
      %3563 = vmatpush1.msra.mxu0 0.0
      %3564 = vmatprep.subr.mxu0 0.0
      %3565 = vmatpush1.msra.mxu0 0.0
      %3566 = vmatprep.subr.mxu0 0.0
      %3567 = vmatpush1.msra.mxu0 0.0
      %3568 = vmatprep.subr.mxu0 0.0
      %3569 = vmatpush1.msra.mxu0 0.0
      %3570 = vmatprep.subr.mxu0 0.0
      %3571 = vmatpush1.msra.mxu0 0.0
      %3572 = vmatprep.subr.mxu0 0.0
      %3573 = vmatpush1.msra.mxu0 0.0
      %3574 = vmatprep.subr.mxu0 0.0
      %3575 = vmatpush1.msra.mxu0 0.0
      %3576 = vmatprep.subr.mxu0 0.0
      %3577 = vmatpush1.msra.mxu0 0.0
      %3578 = vmatprep.subr.mxu0 0.0
      %3579 = vmatpush1.msra.mxu0 0.0
      %3580 = vmatprep.subr.mxu0 0.0
      %3581 = vmatpush1.msra.mxu0 0.0
      %3582 = vmatprep.subr.mxu0 0.0
      %3583 = vmatpush1.msra.mxu0 0.0
      %3584 = vmatprep.subr.mxu0 0.0
      %3585 = vmatpush1.msra.mxu0 0.0
      %3586 = vmatprep.subr.mxu0 0.0
      %3587 = vmatpush1.msra.mxu0 0.0
      %3588 = vmatprep.subr.mxu0 0.0
      %3589 = vmatpush1.msra.mxu0 0.0
      %3590 = vmatprep.subr.mxu0 0.0
      %3591 = vmatpush1.msra.mxu0 0.0
      %3592 = vmatprep.subr.mxu0 0.0
      %3593 = vmatpush1.msra.mxu0 0.0
      %3594 = vmatprep.subr.mxu0 0.0
      %3595 = vmatpush1.msra.mxu0 0.0
      %3596 = vmatprep.subr.mxu0 0.0
      %3597 = vmatpush1.msra.mxu0 0.0
      %3598 = vmatprep.subr.mxu0 0.0
      %3599 = vmatpush1.msra.mxu0 0.0
      %3600 = vmatprep.subr.mxu0 0.0
      %3601 = vmatpush1.msra.mxu0 0.0
      %3602 = vmatprep.mubr.f32.mxu0 0.0
      %3603 = vmatmul.mubr.f32.gmra.mrb[0].mxu0 %v3070
      %v3604 = vpop.f32.mrb[0].mxu0
      %v3605 = vadd.f32 %v3389, %v3604
      %v3606 = vpop.f32.mrb[0].mxu0
      %3607 = vdwg.mxu0
      %3608 = vmatprep.subr.mxu0 0.0
      %3609 = vmatpush1.msra.mxu0 %v3365
      %3610 = vmatprep.subr.mxu0 0.0
      %3611 = vmatpush1.msra.mxu0 %v3366
      %3612 = vmatprep.subr.mxu0 0.0
      %3613 = vmatpush1.msra.mxu0 %v3367
      %3614 = vmatprep.subr.mxu0 0.0
      %3615 = vmatpush1.msra.mxu0 %v3368
      %3616 = vmatprep.subr.mxu0 0.0
      %3617 = vmatpush1.msra.mxu0 0.0
      %3618 = vmatprep.subr.mxu0 0.0
      %3619 = vmatpush1.msra.mxu0 0.0
      %3620 = vmatprep.subr.mxu0 0.0
      %3621 = vmatpush1.msra.mxu0 0.0
      %3622 = vmatprep.subr.mxu0 0.0
      %3623 = vmatpush1.msra.mxu0 0.0
      %3624 = vmatprep.subr.mxu0 0.0
      %3625 = vmatpush1.msra.mxu0 0.0
      %3626 = vmatprep.subr.mxu0 0.0
      %3627 = vmatpush1.msra.mxu0 0.0
      %3628 = vmatprep.subr.mxu0 0.0
      %3629 = vmatpush1.msra.mxu0 0.0
      %3630 = vmatprep.subr.mxu0 0.0
      %3631 = vmatpush1.msra.mxu0 0.0
      %3632 = vmatprep.subr.mxu0 0.0
      %3633 = vmatpush1.msra.mxu0 0.0
      %3634 = vmatprep.subr.mxu0 0.0
      %3635 = vmatpush1.msra.mxu0 0.0
      %3636 = vmatprep.subr.mxu0 0.0
      %3637 = vmatpush1.msra.mxu0 0.0
      %3638 = vmatprep.subr.mxu0 0.0
      %3639 = vmatpush1.msra.mxu0 0.0
      %3640 = vmatprep.subr.mxu0 0.0
      %3641 = vmatpush1.msra.mxu0 0.0
      %3642 = vmatprep.subr.mxu0 0.0
      %3643 = vmatpush1.msra.mxu0 0.0
      %3644 = vmatprep.subr.mxu0 0.0
      %3645 = vmatpush1.msra.mxu0 0.0
      %3646 = vmatprep.subr.mxu0 0.0
      %3647 = vmatpush1.msra.mxu0 0.0
      %3648 = vmatprep.subr.mxu0 0.0
      %3649 = vmatpush1.msra.mxu0 0.0
      %3650 = vmatprep.subr.mxu0 0.0
      %3651 = vmatpush1.msra.mxu0 0.0
      %3652 = vmatprep.subr.mxu0 0.0
      %3653 = vmatpush1.msra.mxu0 0.0
      %3654 = vmatprep.subr.mxu0 0.0
      %3655 = vmatpush1.msra.mxu0 0.0
      %3656 = vmatprep.subr.mxu0 0.0
      %3657 = vmatpush1.msra.mxu0 0.0
      %3658 = vmatprep.subr.mxu0 0.0
      %3659 = vmatpush1.msra.mxu0 0.0
      %3660 = vmatprep.subr.mxu0 0.0
      %3661 = vmatpush1.msra.mxu0 0.0
      %3662 = vmatprep.subr.mxu0 0.0
      %3663 = vmatpush1.msra.mxu0 0.0
      %3664 = vmatprep.subr.mxu0 0.0
      %3665 = vmatpush1.msra.mxu0 0.0
      %3666 = vmatprep.subr.mxu0 0.0
      %3667 = vmatpush1.msra.mxu0 0.0
      %3668 = vmatprep.subr.mxu0 0.0
      %3669 = vmatpush1.msra.mxu0 0.0
      %3670 = vmatprep.subr.mxu0 0.0
      %3671 = vmatpush1.msra.mxu0 0.0
      %3672 = vmatprep.mubr.f32.mxu0 0.0
      %3673 = vmatmul.mubr.f32.gmra.mrb[0].mxu0 %v3070
      %v3674 = vpop.f32.mrb[0].mxu0
      %v3675 = vadd.f32 %v3393, %v3674
      %v3676 = vpop.f32.mrb[0].mxu0
      %3677 = vdwg.mxu0
      %s3678 = scalar_lea.vmem %s7, 128
      %v3679 = vld [vmem:[%s3678] sm:$0xff]
      %v3680 = vld [vmem:[%s3678 + $0x8] sm:$0xff]
      %v3681 = vld [vmem:[%s3678 + $0x10] sm:$0xff]
      %v3682 = vld [vmem:[%s3678 + $0x18] sm:$0xff]
      %v3683 = vld [vmem:[%s3678 + $0x20] sm:$0xff]
      %v3684 = vld [vmem:[%s3678 + $0x28] sm:$0xff]
      %v3685 = vld [vmem:[%s3678 + $0x30] sm:$0xff]
      %v3686 = vld [vmem:[%s3678 + $0x38] sm:$0xff]
      %v3687 = vld [vmem:[%s3678 + $0x40] sm:$0xff]
      %v3688 = vld [vmem:[%s3678 + $0x48] sm:$0xff]
      %v3689 = vld [vmem:[%s3678 + $0x50] sm:$0xff]
      %v3690 = vld [vmem:[%s3678 + $0x58] sm:$0xff]
      %v3691 = vld [vmem:[%s3678 + $0x60] sm:$0xff]
      %v3692 = vld [vmem:[%s3678 + $0x68] sm:$0xff]
      %v3693 = vld [vmem:[%s3678 + $0x70] sm:$0xff]
      %v3694 = vld [vmem:[%s3678 + $0x78] sm:$0xff]
      %s3695 = scalar_lea.vmem %s10, 4
      %v3696 = vld [vmem:[%s3695] sm:$0x1]
      %v3697 = vld [vmem:[%s3695 + $0x1] sm:$0x1]
      %v3698 = vld [vmem:[%s3695 + $0x2] sm:$0x1]
      %v3699 = vld [vmem:[%s3695 + $0x3] sm:$0x1]
      %v3704 = vlaneseq
      %v3705 = vshrl.u32 %v3704, 7
      %v3706 = vsub.s32 0, %v3705
      %v3707 = vrot.slane %v3696, %v3706
      %v3708 = vlaneseq
      %v3709 = vshrl.u32 %v3708, 7
      %v3710 = vsub.s32 0, %v3709
      %v3711 = vrot.slane %v3697, %v3710
      %v3712 = vlaneseq
      %v3713 = vshrl.u32 %v3712, 7
      %v3714 = vsub.s32 0, %v3713
      %v3715 = vrot.slane %v3698, %v3714
      %v3716 = vlaneseq
      %v3717 = vshrl.u32 %v3716, 7
      %v3718 = vsub.s32 0, %v3717
      %v3719 = vrot.slane %v3699, %v3718
      %3724 = vmatprep.subr.mxu0 0.0
      %3725 = vmatpush1.msra.mxu0 %v3679
      %3726 = vmatprep.subr.mxu0 0.0
      %3727 = vmatpush1.msra.mxu0 %v3680
      %3728 = vmatprep.subr.mxu0 0.0
      %3729 = vmatpush1.msra.mxu0 %v3681
      %3730 = vmatprep.subr.mxu0 0.0
      %3731 = vmatpush1.msra.mxu0 %v3682
      %3732 = vmatprep.subr.mxu0 0.0
      %3733 = vmatpush1.msra.mxu0 0.0
      %3734 = vmatprep.subr.mxu0 0.0
      %3735 = vmatpush1.msra.mxu0 0.0
      %3736 = vmatprep.subr.mxu0 0.0
      %3737 = vmatpush1.msra.mxu0 0.0
      %3738 = vmatprep.subr.mxu0 0.0
      %3739 = vmatpush1.msra.mxu0 0.0
      %3740 = vmatprep.subr.mxu0 0.0
      %3741 = vmatpush1.msra.mxu0 0.0
      %3742 = vmatprep.subr.mxu0 0.0
      %3743 = vmatpush1.msra.mxu0 0.0
      %3744 = vmatprep.subr.mxu0 0.0
      %3745 = vmatpush1.msra.mxu0 0.0
      %3746 = vmatprep.subr.mxu0 0.0
      %3747 = vmatpush1.msra.mxu0 0.0
      %3748 = vmatprep.subr.mxu0 0.0
      %3749 = vmatpush1.msra.mxu0 0.0
      %3750 = vmatprep.subr.mxu0 0.0
      %3751 = vmatpush1.msra.mxu0 0.0
      %3752 = vmatprep.subr.mxu0 0.0
      %3753 = vmatpush1.msra.mxu0 0.0
      %3754 = vmatprep.subr.mxu0 0.0
      %3755 = vmatpush1.msra.mxu0 0.0
      %3756 = vmatprep.subr.mxu0 0.0
      %3757 = vmatpush1.msra.mxu0 0.0
      %3758 = vmatprep.subr.mxu0 0.0
      %3759 = vmatpush1.msra.mxu0 0.0
      %3760 = vmatprep.subr.mxu0 0.0
      %3761 = vmatpush1.msra.mxu0 0.0
      %3762 = vmatprep.subr.mxu0 0.0
      %3763 = vmatpush1.msra.mxu0 0.0
      %3764 = vmatprep.subr.mxu0 0.0
      %3765 = vmatpush1.msra.mxu0 0.0
      %3766 = vmatprep.subr.mxu0 0.0
      %3767 = vmatpush1.msra.mxu0 0.0
      %3768 = vmatprep.subr.mxu0 0.0
      %3769 = vmatpush1.msra.mxu0 0.0
      %3770 = vmatprep.subr.mxu0 0.0
      %3771 = vmatpush1.msra.mxu0 0.0
      %3772 = vmatprep.subr.mxu0 0.0
      %3773 = vmatpush1.msra.mxu0 0.0
      %3774 = vmatprep.subr.mxu0 0.0
      %3775 = vmatpush1.msra.mxu0 0.0
      %3776 = vmatprep.subr.mxu0 0.0
      %3777 = vmatpush1.msra.mxu0 0.0
      %3778 = vmatprep.subr.mxu0 0.0
      %3779 = vmatpush1.msra.mxu0 0.0
      %3780 = vmatprep.subr.mxu0 0.0
      %3781 = vmatpush1.msra.mxu0 0.0
      %3782 = vmatprep.subr.mxu0 0.0
      %3783 = vmatpush1.msra.mxu0 0.0
      %3784 = vmatprep.subr.mxu0 0.0
      %3785 = vmatpush1.msra.mxu0 0.0
      %3786 = vmatprep.subr.mxu0 0.0
      %3787 = vmatpush1.msra.mxu0 0.0
      %3788 = vmatprep.mubr.f32.mxu0 0.0
      %3789 = vmatmul.mubr.f32.gmra.mrb[0].mxu0 %v3070
      %v3790 = vpop.f32.mrb[0].mxu0
      %v3791 = vadd.f32 %v3707, %v3790
      %v3792 = vpop.f32.mrb[0].mxu0
      %3793 = vdwg.mxu0
      %3794 = vmatprep.subr.mxu0 0.0
      %3795 = vmatpush1.msra.mxu0 %v3683
      %3796 = vmatprep.subr.mxu0 0.0
      %3797 = vmatpush1.msra.mxu0 %v3684
      %3798 = vmatprep.subr.mxu0 0.0
      %3799 = vmatpush1.msra.mxu0 %v3685
      %3800 = vmatprep.subr.mxu0 0.0
      %3801 = vmatpush1.msra.mxu0 %v3686
      %3802 = vmatprep.subr.mxu0 0.0
      %3803 = vmatpush1.msra.mxu0 0.0
      %3804 = vmatprep.subr.mxu0 0.0
      %3805 = vmatpush1.msra.mxu0 0.0
      %3806 = vmatprep.subr.mxu0 0.0
      %3807 = vmatpush1.msra.mxu0 0.0
      %3808 = vmatprep.subr.mxu0 0.0
      %3809 = vmatpush1.msra.mxu0 0.0
      %3810 = vmatprep.subr.mxu0 0.0
      %3811 = vmatpush1.msra.mxu0 0.0
      %3812 = vmatprep.subr.mxu0 0.0
      %3813 = vmatpush1.msra.mxu0 0.0
      %3814 = vmatprep.subr.mxu0 0.0
      %3815 = vmatpush1.msra.mxu0 0.0
      %3816 = vmatprep.subr.mxu0 0.0
      %3817 = vmatpush1.msra.mxu0 0.0
      %3818 = vmatprep.subr.mxu0 0.0
      %3819 = vmatpush1.msra.mxu0 0.0
      %3820 = vmatprep.subr.mxu0 0.0
      %3821 = vmatpush1.msra.mxu0 0.0
      %3822 = vmatprep.subr.mxu0 0.0
      %3823 = vmatpush1.msra.mxu0 0.0
      %3824 = vmatprep.subr.mxu0 0.0
      %3825 = vmatpush1.msra.mxu0 0.0
      %3826 = vmatprep.subr.mxu0 0.0
      %3827 = vmatpush1.msra.mxu0 0.0
      %3828 = vmatprep.subr.mxu0 0.0
      %3829 = vmatpush1.msra.mxu0 0.0
      %3830 = vmatprep.subr.mxu0 0.0
      %3831 = vmatpush1.msra.mxu0 0.0
      %3832 = vmatprep.subr.mxu0 0.0
      %3833 = vmatpush1.msra.mxu0 0.0
      %3834 = vmatprep.subr.mxu0 0.0
      %3835 = vmatpush1.msra.mxu0 0.0
      %3836 = vmatprep.subr.mxu0 0.0
      %3837 = vmatpush1.msra.mxu0 0.0
      %3838 = vmatprep.subr.mxu0 0.0
      %3839 = vmatpush1.msra.mxu0 0.0
      %3840 = vmatprep.subr.mxu0 0.0
      %3841 = vmatpush1.msra.mxu0 0.0
      %3842 = vmatprep.subr.mxu0 0.0
      %3843 = vmatpush1.msra.mxu0 0.0
      %3844 = vmatprep.subr.mxu0 0.0
      %3845 = vmatpush1.msra.mxu0 0.0
      %3846 = vmatprep.subr.mxu0 0.0
      %3847 = vmatpush1.msra.mxu0 0.0
      %3848 = vmatprep.subr.mxu0 0.0
      %3849 = vmatpush1.msra.mxu0 0.0
      %3850 = vmatprep.subr.mxu0 0.0
      %3851 = vmatpush1.msra.mxu0 0.0
      %3852 = vmatprep.subr.mxu0 0.0
      %3853 = vmatpush1.msra.mxu0 0.0
      %3854 = vmatprep.subr.mxu0 0.0
      %3855 = vmatpush1.msra.mxu0 0.0
      %3856 = vmatprep.subr.mxu0 0.0
      %3857 = vmatpush1.msra.mxu0 0.0
      %3858 = vmatprep.mubr.f32.mxu0 0.0
      %3859 = vmatmul.mubr.f32.gmra.mrb[0].mxu0 %v3070
      %v3860 = vpop.f32.mrb[0].mxu0
      %v3861 = vadd.f32 %v3711, %v3860
      %v3862 = vpop.f32.mrb[0].mxu0
      %3863 = vdwg.mxu0
      %3864 = vmatprep.subr.mxu0 0.0
      %3865 = vmatpush1.msra.mxu0 %v3687
      %3866 = vmatprep.subr.mxu0 0.0
      %3867 = vmatpush1.msra.mxu0 %v3688
      %3868 = vmatprep.subr.mxu0 0.0
      %3869 = vmatpush1.msra.mxu0 %v3689
      %3870 = vmatprep.subr.mxu0 0.0
      %3871 = vmatpush1.msra.mxu0 %v3690
      %3872 = vmatprep.subr.mxu0 0.0
      %3873 = vmatpush1.msra.mxu0 0.0
      %3874 = vmatprep.subr.mxu0 0.0
      %3875 = vmatpush1.msra.mxu0 0.0
      %3876 = vmatprep.subr.mxu0 0.0
      %3877 = vmatpush1.msra.mxu0 0.0
      %3878 = vmatprep.subr.mxu0 0.0
      %3879 = vmatpush1.msra.mxu0 0.0
      %3880 = vmatprep.subr.mxu0 0.0
      %3881 = vmatpush1.msra.mxu0 0.0
      %3882 = vmatprep.subr.mxu0 0.0
      %3883 = vmatpush1.msra.mxu0 0.0
      %3884 = vmatprep.subr.mxu0 0.0
      %3885 = vmatpush1.msra.mxu0 0.0
      %3886 = vmatprep.subr.mxu0 0.0
      %3887 = vmatpush1.msra.mxu0 0.0
      %3888 = vmatprep.subr.mxu0 0.0
      %3889 = vmatpush1.msra.mxu0 0.0
      %3890 = vmatprep.subr.mxu0 0.0
      %3891 = vmatpush1.msra.mxu0 0.0
      %3892 = vmatprep.subr.mxu0 0.0
      %3893 = vmatpush1.msra.mxu0 0.0
      %3894 = vmatprep.subr.mxu0 0.0
      %3895 = vmatpush1.msra.mxu0 0.0
      %3896 = vmatprep.subr.mxu0 0.0
      %3897 = vmatpush1.msra.mxu0 0.0
      %3898 = vmatprep.subr.mxu0 0.0
      %3899 = vmatpush1.msra.mxu0 0.0
      %3900 = vmatprep.subr.mxu0 0.0
      %3901 = vmatpush1.msra.mxu0 0.0
      %3902 = vmatprep.subr.mxu0 0.0
      %3903 = vmatpush1.msra.mxu0 0.0
      %3904 = vmatprep.subr.mxu0 0.0
      %3905 = vmatpush1.msra.mxu0 0.0
      %3906 = vmatprep.subr.mxu0 0.0
      %3907 = vmatpush1.msra.mxu0 0.0
      %3908 = vmatprep.subr.mxu0 0.0
      %3909 = vmatpush1.msra.mxu0 0.0
      %3910 = vmatprep.subr.mxu0 0.0
      %3911 = vmatpush1.msra.mxu0 0.0
      %3912 = vmatprep.subr.mxu0 0.0
      %3913 = vmatpush1.msra.mxu0 0.0
      %3914 = vmatprep.subr.mxu0 0.0
      %3915 = vmatpush1.msra.mxu0 0.0
      %3916 = vmatprep.subr.mxu0 0.0
      %3917 = vmatpush1.msra.mxu0 0.0
      %3918 = vmatprep.subr.mxu0 0.0
      %3919 = vmatpush1.msra.mxu0 0.0
      %3920 = vmatprep.subr.mxu0 0.0
      %3921 = vmatpush1.msra.mxu0 0.0
      %3922 = vmatprep.subr.mxu0 0.0
      %3923 = vmatpush1.msra.mxu0 0.0
      %3924 = vmatprep.subr.mxu0 0.0
      %3925 = vmatpush1.msra.mxu0 0.0
      %3926 = vmatprep.subr.mxu0 0.0
      %3927 = vmatpush1.msra.mxu0 0.0
      %3928 = vmatprep.mubr.f32.mxu0 0.0
      %3929 = vmatmul.mubr.f32.gmra.mrb[0].mxu0 %v3070
      %v3930 = vpop.f32.mrb[0].mxu0
      %v3931 = vadd.f32 %v3715, %v3930
      %v3932 = vpop.f32.mrb[0].mxu0
      %3933 = vdwg.mxu0
      %3934 = vmatprep.subr.mxu0 0.0
      %3935 = vmatpush1.msra.mxu0 %v3691
      %3936 = vmatprep.subr.mxu0 0.0
      %3937 = vmatpush1.msra.mxu0 %v3692
      %3938 = vmatprep.subr.mxu0 0.0
      %3939 = vmatpush1.msra.mxu0 %v3693
      %3940 = vmatprep.subr.mxu0 0.0
      %3941 = vmatpush1.msra.mxu0 %v3694
      %3942 = vmatprep.subr.mxu0 0.0
      %3943 = vmatpush1.msra.mxu0 0.0
      %3944 = vmatprep.subr.mxu0 0.0
      %3945 = vmatpush1.msra.mxu0 0.0
      %3946 = vmatprep.subr.mxu0 0.0
      %3947 = vmatpush1.msra.mxu0 0.0
      %3948 = vmatprep.subr.mxu0 0.0
      %3949 = vmatpush1.msra.mxu0 0.0
      %3950 = vmatprep.subr.mxu0 0.0
      %3951 = vmatpush1.msra.mxu0 0.0
      %3952 = vmatprep.subr.mxu0 0.0
      %3953 = vmatpush1.msra.mxu0 0.0
      %3954 = vmatprep.subr.mxu0 0.0
      %3955 = vmatpush1.msra.mxu0 0.0
      %3956 = vmatprep.subr.mxu0 0.0
      %3957 = vmatpush1.msra.mxu0 0.0
      %3958 = vmatprep.subr.mxu0 0.0
      %3959 = vmatpush1.msra.mxu0 0.0
      %3960 = vmatprep.subr.mxu0 0.0
      %3961 = vmatpush1.msra.mxu0 0.0
      %3962 = vmatprep.subr.mxu0 0.0
      %3963 = vmatpush1.msra.mxu0 0.0
      %3964 = vmatprep.subr.mxu0 0.0
      %3965 = vmatpush1.msra.mxu0 0.0
      %3966 = vmatprep.subr.mxu0 0.0
      %3967 = vmatpush1.msra.mxu0 0.0
      %3968 = vmatprep.subr.mxu0 0.0
      %3969 = vmatpush1.msra.mxu0 0.0
      %3970 = vmatprep.subr.mxu0 0.0
      %3971 = vmatpush1.msra.mxu0 0.0
      %3972 = vmatprep.subr.mxu0 0.0
      %3973 = vmatpush1.msra.mxu0 0.0
      %3974 = vmatprep.subr.mxu0 0.0
      %3975 = vmatpush1.msra.mxu0 0.0
      %3976 = vmatprep.subr.mxu0 0.0
      %3977 = vmatpush1.msra.mxu0 0.0
      %3978 = vmatprep.subr.mxu0 0.0
      %3979 = vmatpush1.msra.mxu0 0.0
      %3980 = vmatprep.subr.mxu0 0.0
      %3981 = vmatpush1.msra.mxu0 0.0
      %3982 = vmatprep.subr.mxu0 0.0
      %3983 = vmatpush1.msra.mxu0 0.0
      %3984 = vmatprep.subr.mxu0 0.0
      %3985 = vmatpush1.msra.mxu0 0.0
      %3986 = vmatprep.subr.mxu0 0.0
      %3987 = vmatpush1.msra.mxu0 0.0
      %3988 = vmatprep.subr.mxu0 0.0
      %3989 = vmatpush1.msra.mxu0 0.0
      %3990 = vmatprep.subr.mxu0 0.0
      %3991 = vmatpush1.msra.mxu0 0.0
      %3992 = vmatprep.subr.mxu0 0.0
      %3993 = vmatpush1.msra.mxu0 0.0
      %3994 = vmatprep.subr.mxu0 0.0
      %3995 = vmatpush1.msra.mxu0 0.0
      %3996 = vmatprep.subr.mxu0 0.0
      %3997 = vmatpush1.msra.mxu0 0.0
      %3998 = vmatprep.mubr.f32.mxu0 0.0
      %3999 = vmatmul.mubr.f32.gmra.mrb[0].mxu0 %v3070
      %v4000 = vpop.f32.mrb[0].mxu0
      %v4001 = vadd.f32 %v3719, %v4000
      %v4002 = vpop.f32.mrb[0].mxu0
      %4003 = vdwg.mxu0
      %v4005 = vsel %vm1822, %v3139, 0
      %v4008 = vsel %vm1822, %v3465, 0
      %4010 = vmatprep.subr.mxu0 0.0
      %4011 = vmatpush1.xpose.msra.mxu0 %v4008
      %4012 = vmatprep.subr.mxu0 0.0
      %4013 = vmatpush1.xpose.msra.mxu0 0.0
      %4014 = vmatprep.subr.mxu0 0.0
      %4015 = vmatpush1.xpose.msra.mxu0 0.0
      %4016 = vmatprep.subr.mxu0 0.0
      %4017 = vmatpush1.xpose.msra.mxu0 0.0
      %4018 = vmatprep.subr.mxu0 0.0
      %4019 = vmatpush1.xpose.msra.mxu0 0.0
      %4020 = vmatprep.subr.mxu0 0.0
      %4021 = vmatpush1.xpose.msra.mxu0 0.0
      %4022 = vmatprep.subr.mxu0 0.0
      %4023 = vmatpush1.xpose.msra.mxu0 0.0
      %4024 = vmatprep.subr.mxu0 0.0
      %4025 = vmatpush1.xpose.msra.mxu0 0.0
      %4026 = vmatprep.subr.mxu0 0.0
      %4027 = vmatpush1.xpose.msra.mxu0 0.0
      %4028 = vmatprep.subr.mxu0 0.0
      %4029 = vmatpush1.xpose.msra.mxu0 0.0
      %4030 = vmatprep.subr.mxu0 0.0
      %4031 = vmatpush1.xpose.msra.mxu0 0.0
      %4032 = vmatprep.subr.mxu0 0.0
      %4033 = vmatpush1.xpose.msra.mxu0 0.0
      %4034 = vmatprep.subr.mxu0 0.0
      %4035 = vmatpush1.xpose.msra.mxu0 0.0
      %4036 = vmatprep.subr.mxu0 0.0
      %4037 = vmatpush1.xpose.msra.mxu0 0.0
      %4038 = vmatprep.subr.mxu0 0.0
      %4039 = vmatpush1.xpose.msra.mxu0 0.0
      %4040 = vmatprep.subr.mxu0 0.0
      %4041 = vmatpush1.xpose.msra.mxu0 0.0
      %4042 = vmatprep.subr.mxu0 0.0
      %4043 = vmatpush1.xpose.msra.mxu0 0.0
      %4044 = vmatprep.subr.mxu0 0.0
      %4045 = vmatpush1.xpose.msra.mxu0 0.0
      %4046 = vmatprep.subr.mxu0 0.0
      %4047 = vmatpush1.xpose.msra.mxu0 0.0
      %4048 = vmatprep.subr.mxu0 0.0
      %4049 = vmatpush1.xpose.msra.mxu0 0.0
      %4050 = vmatprep.subr.mxu0 0.0
      %4051 = vmatpush1.xpose.msra.mxu0 0.0
      %4052 = vmatprep.subr.mxu0 0.0
      %4053 = vmatpush1.xpose.msra.mxu0 0.0
      %4054 = vmatprep.subr.mxu0 0.0
      %4055 = vmatpush1.xpose.msra.mxu0 0.0
      %4056 = vmatprep.subr.mxu0 0.0
      %4057 = vmatpush1.xpose.msra.mxu0 0.0
      %4058 = vmatprep.subr.mxu0 0.0
      %4059 = vmatpush1.xpose.msra.mxu0 0.0
      %4060 = vmatprep.subr.mxu0 0.0
      %4061 = vmatpush1.xpose.msra.mxu0 0.0
      %4062 = vmatprep.subr.mxu0 0.0
      %4063 = vmatpush1.xpose.msra.mxu0 0.0
      %4064 = vmatprep.subr.mxu0 0.0
      %4065 = vmatpush1.xpose.msra.mxu0 0.0
      %4066 = vmatprep.subr.mxu0 0.0
      %4067 = vmatpush1.xpose.msra.mxu0 0.0
      %4068 = vmatprep.subr.mxu0 0.0
      %4069 = vmatpush1.xpose.msra.mxu0 0.0
      %4070 = vmatprep.subr.mxu0 0.0
      %4071 = vmatpush1.xpose.msra.mxu0 0.0
      %4072 = vmatprep.subr.mxu0 0.0
      %4073 = vmatpush1.xpose.msra.mxu0 0.0
      %4074 = vmatprep.mubr.f32.mxu0 0.0
      %4075 = vmatmul.mubr.f32.gmra.mrb[0].mxu0 %v4005
      %v4076 = vpop.f32.mrb[0].mxu0
      %v4077 = vadd.f32 0.0, %v4076
      %v4078 = vpop.f32.mrb[0].mxu0
      %4079 = vdwg.mxu0
      %v4081 = vsel %vm1822, %v3209, 0
      %v4084 = vsel %vm1822, %v3535, 0
      %4086 = vmatprep.subr.mxu0 0.0
      %4087 = vmatpush1.xpose.msra.mxu0 %v4084
      %4088 = vmatprep.subr.mxu0 0.0
      %4089 = vmatpush1.xpose.msra.mxu0 0.0
      %4090 = vmatprep.subr.mxu0 0.0
      %4091 = vmatpush1.xpose.msra.mxu0 0.0
      %4092 = vmatprep.subr.mxu0 0.0
      %4093 = vmatpush1.xpose.msra.mxu0 0.0
      %4094 = vmatprep.subr.mxu0 0.0
      %4095 = vmatpush1.xpose.msra.mxu0 0.0
      %4096 = vmatprep.subr.mxu0 0.0
      %4097 = vmatpush1.xpose.msra.mxu0 0.0
      %4098 = vmatprep.subr.mxu0 0.0
      %4099 = vmatpush1.xpose.msra.mxu0 0.0
      %4100 = vmatprep.subr.mxu0 0.0
      %4101 = vmatpush1.xpose.msra.mxu0 0.0
      %4102 = vmatprep.subr.mxu0 0.0
      %4103 = vmatpush1.xpose.msra.mxu0 0.0
      %4104 = vmatprep.subr.mxu0 0.0
      %4105 = vmatpush1.xpose.msra.mxu0 0.0
      %4106 = vmatprep.subr.mxu0 0.0
      %4107 = vmatpush1.xpose.msra.mxu0 0.0
      %4108 = vmatprep.subr.mxu0 0.0
      %4109 = vmatpush1.xpose.msra.mxu0 0.0
      %4110 = vmatprep.subr.mxu0 0.0
      %4111 = vmatpush1.xpose.msra.mxu0 0.0
      %4112 = vmatprep.subr.mxu0 0.0
      %4113 = vmatpush1.xpose.msra.mxu0 0.0
      %4114 = vmatprep.subr.mxu0 0.0
      %4115 = vmatpush1.xpose.msra.mxu0 0.0
      %4116 = vmatprep.subr.mxu0 0.0
      %4117 = vmatpush1.xpose.msra.mxu0 0.0
      %4118 = vmatprep.subr.mxu0 0.0
      %4119 = vmatpush1.xpose.msra.mxu0 0.0
      %4120 = vmatprep.subr.mxu0 0.0
      %4121 = vmatpush1.xpose.msra.mxu0 0.0
      %4122 = vmatprep.subr.mxu0 0.0
      %4123 = vmatpush1.xpose.msra.mxu0 0.0
      %4124 = vmatprep.subr.mxu0 0.0
      %4125 = vmatpush1.xpose.msra.mxu0 0.0
      %4126 = vmatprep.subr.mxu0 0.0
      %4127 = vmatpush1.xpose.msra.mxu0 0.0
      %4128 = vmatprep.subr.mxu0 0.0
      %4129 = vmatpush1.xpose.msra.mxu0 0.0
      %4130 = vmatprep.subr.mxu0 0.0
      %4131 = vmatpush1.xpose.msra.mxu0 0.0
      %4132 = vmatprep.subr.mxu0 0.0
      %4133 = vmatpush1.xpose.msra.mxu0 0.0
      %4134 = vmatprep.subr.mxu0 0.0
      %4135 = vmatpush1.xpose.msra.mxu0 0.0
      %4136 = vmatprep.subr.mxu0 0.0
      %4137 = vmatpush1.xpose.msra.mxu0 0.0
      %4138 = vmatprep.subr.mxu0 0.0
      %4139 = vmatpush1.xpose.msra.mxu0 0.0
      %4140 = vmatprep.subr.mxu0 0.0
      %4141 = vmatpush1.xpose.msra.mxu0 0.0
      %4142 = vmatprep.subr.mxu0 0.0
      %4143 = vmatpush1.xpose.msra.mxu0 0.0
      %4144 = vmatprep.subr.mxu0 0.0
      %4145 = vmatpush1.xpose.msra.mxu0 0.0
      %4146 = vmatprep.subr.mxu0 0.0
      %4147 = vmatpush1.xpose.msra.mxu0 0.0
      %4148 = vmatprep.subr.mxu0 0.0
      %4149 = vmatpush1.xpose.msra.mxu0 0.0
      %4150 = vmatprep.mubr.f32.mxu0 0.0
      %4151 = vmatmul.mubr.f32.gmra.mrb[0].mxu0 %v4081
      %v4152 = vpop.f32.mrb[0].mxu0
      %v4153 = vadd.f32 0.0, %v4152
      %v4154 = vpop.f32.mrb[0].mxu0
      %4155 = vdwg.mxu0
      %v4157 = vsel %vm1822, %v3279, 0
      %v4160 = vsel %vm1822, %v3605, 0
      %4162 = vmatprep.subr.mxu0 0.0
      %4163 = vmatpush1.xpose.msra.mxu0 %v4160
      %4164 = vmatprep.subr.mxu0 0.0
      %4165 = vmatpush1.xpose.msra.mxu0 0.0
      %4166 = vmatprep.subr.mxu0 0.0
      %4167 = vmatpush1.xpose.msra.mxu0 0.0
      %4168 = vmatprep.subr.mxu0 0.0
      %4169 = vmatpush1.xpose.msra.mxu0 0.0
      %4170 = vmatprep.subr.mxu0 0.0
      %4171 = vmatpush1.xpose.msra.mxu0 0.0
      %4172 = vmatprep.subr.mxu0 0.0
      %4173 = vmatpush1.xpose.msra.mxu0 0.0
      %4174 = vmatprep.subr.mxu0 0.0
      %4175 = vmatpush1.xpose.msra.mxu0 0.0
      %4176 = vmatprep.subr.mxu0 0.0
      %4177 = vmatpush1.xpose.msra.mxu0 0.0
      %4178 = vmatprep.subr.mxu0 0.0
      %4179 = vmatpush1.xpose.msra.mxu0 0.0
      %4180 = vmatprep.subr.mxu0 0.0
      %4181 = vmatpush1.xpose.msra.mxu0 0.0
      %4182 = vmatprep.subr.mxu0 0.0
      %4183 = vmatpush1.xpose.msra.mxu0 0.0
      %4184 = vmatprep.subr.mxu0 0.0
      %4185 = vmatpush1.xpose.msra.mxu0 0.0
      %4186 = vmatprep.subr.mxu0 0.0
      %4187 = vmatpush1.xpose.msra.mxu0 0.0
      %4188 = vmatprep.subr.mxu0 0.0
      %4189 = vmatpush1.xpose.msra.mxu0 0.0
      %4190 = vmatprep.subr.mxu0 0.0
      %4191 = vmatpush1.xpose.msra.mxu0 0.0
      %4192 = vmatprep.subr.mxu0 0.0
      %4193 = vmatpush1.xpose.msra.mxu0 0.0
      %4194 = vmatprep.subr.mxu0 0.0
      %4195 = vmatpush1.xpose.msra.mxu0 0.0
      %4196 = vmatprep.subr.mxu0 0.0
      %4197 = vmatpush1.xpose.msra.mxu0 0.0
      %4198 = vmatprep.subr.mxu0 0.0
      %4199 = vmatpush1.xpose.msra.mxu0 0.0
      %4200 = vmatprep.subr.mxu0 0.0
      %4201 = vmatpush1.xpose.msra.mxu0 0.0
      %4202 = vmatprep.subr.mxu0 0.0
      %4203 = vmatpush1.xpose.msra.mxu0 0.0
      %4204 = vmatprep.subr.mxu0 0.0
      %4205 = vmatpush1.xpose.msra.mxu0 0.0
      %4206 = vmatprep.subr.mxu0 0.0
      %4207 = vmatpush1.xpose.msra.mxu0 0.0
      %4208 = vmatprep.subr.mxu0 0.0
      %4209 = vmatpush1.xpose.msra.mxu0 0.0
      %4210 = vmatprep.subr.mxu0 0.0
      %4211 = vmatpush1.xpose.msra.mxu0 0.0
      %4212 = vmatprep.subr.mxu0 0.0
      %4213 = vmatpush1.xpose.msra.mxu0 0.0
      %4214 = vmatprep.subr.mxu0 0.0
      %4215 = vmatpush1.xpose.msra.mxu0 0.0
      %4216 = vmatprep.subr.mxu0 0.0
      %4217 = vmatpush1.xpose.msra.mxu0 0.0
      %4218 = vmatprep.subr.mxu0 0.0
      %4219 = vmatpush1.xpose.msra.mxu0 0.0
      %4220 = vmatprep.subr.mxu0 0.0
      %4221 = vmatpush1.xpose.msra.mxu0 0.0
      %4222 = vmatprep.subr.mxu0 0.0
      %4223 = vmatpush1.xpose.msra.mxu0 0.0
      %4224 = vmatprep.subr.mxu0 0.0
      %4225 = vmatpush1.xpose.msra.mxu0 0.0
      %4226 = vmatprep.mubr.f32.mxu0 0.0
      %4227 = vmatmul.mubr.f32.gmra.mrb[0].mxu0 %v4157
      %v4228 = vpop.f32.mrb[0].mxu0
      %v4229 = vadd.f32 0.0, %v4228
      %v4230 = vpop.f32.mrb[0].mxu0
      %4231 = vdwg.mxu0
      %v4233 = vsel %vm1822, %v3349, 0
      %v4236 = vsel %vm1822, %v3675, 0
      %4238 = vmatprep.subr.mxu0 0.0
      %4239 = vmatpush1.xpose.msra.mxu0 %v4236
      %4240 = vmatprep.subr.mxu0 0.0
      %4241 = vmatpush1.xpose.msra.mxu0 0.0
      %4242 = vmatprep.subr.mxu0 0.0
      %4243 = vmatpush1.xpose.msra.mxu0 0.0
      %4244 = vmatprep.subr.mxu0 0.0
      %4245 = vmatpush1.xpose.msra.mxu0 0.0
      %4246 = vmatprep.subr.mxu0 0.0
      %4247 = vmatpush1.xpose.msra.mxu0 0.0
      %4248 = vmatprep.subr.mxu0 0.0
      %4249 = vmatpush1.xpose.msra.mxu0 0.0
      %4250 = vmatprep.subr.mxu0 0.0
      %4251 = vmatpush1.xpose.msra.mxu0 0.0
      %4252 = vmatprep.subr.mxu0 0.0
      %4253 = vmatpush1.xpose.msra.mxu0 0.0
      %4254 = vmatprep.subr.mxu0 0.0
      %4255 = vmatpush1.xpose.msra.mxu0 0.0
      %4256 = vmatprep.subr.mxu0 0.0
      %4257 = vmatpush1.xpose.msra.mxu0 0.0
      %4258 = vmatprep.subr.mxu0 0.0
      %4259 = vmatpush1.xpose.msra.mxu0 0.0
      %4260 = vmatprep.subr.mxu0 0.0
      %4261 = vmatpush1.xpose.msra.mxu0 0.0
      %4262 = vmatprep.subr.mxu0 0.0
      %4263 = vmatpush1.xpose.msra.mxu0 0.0
      %4264 = vmatprep.subr.mxu0 0.0
      %4265 = vmatpush1.xpose.msra.mxu0 0.0
      %4266 = vmatprep.subr.mxu0 0.0
      %4267 = vmatpush1.xpose.msra.mxu0 0.0
      %4268 = vmatprep.subr.mxu0 0.0
      %4269 = vmatpush1.xpose.msra.mxu0 0.0
      %4270 = vmatprep.subr.mxu0 0.0
      %4271 = vmatpush1.xpose.msra.mxu0 0.0
      %4272 = vmatprep.subr.mxu0 0.0
      %4273 = vmatpush1.xpose.msra.mxu0 0.0
      %4274 = vmatprep.subr.mxu0 0.0
      %4275 = vmatpush1.xpose.msra.mxu0 0.0
      %4276 = vmatprep.subr.mxu0 0.0
      %4277 = vmatpush1.xpose.msra.mxu0 0.0
      %4278 = vmatprep.subr.mxu0 0.0
      %4279 = vmatpush1.xpose.msra.mxu0 0.0
      %4280 = vmatprep.subr.mxu0 0.0
      %4281 = vmatpush1.xpose.msra.mxu0 0.0
      %4282 = vmatprep.subr.mxu0 0.0
      %4283 = vmatpush1.xpose.msra.mxu0 0.0
      %4284 = vmatprep.subr.mxu0 0.0
      %4285 = vmatpush1.xpose.msra.mxu0 0.0
      %4286 = vmatprep.subr.mxu0 0.0
      %4287 = vmatpush1.xpose.msra.mxu0 0.0
      %4288 = vmatprep.subr.mxu0 0.0
      %4289 = vmatpush1.xpose.msra.mxu0 0.0
      %4290 = vmatprep.subr.mxu0 0.0
      %4291 = vmatpush1.xpose.msra.mxu0 0.0
      %4292 = vmatprep.subr.mxu0 0.0
      %4293 = vmatpush1.xpose.msra.mxu0 0.0
      %4294 = vmatprep.subr.mxu0 0.0
      %4295 = vmatpush1.xpose.msra.mxu0 0.0
      %4296 = vmatprep.subr.mxu0 0.0
      %4297 = vmatpush1.xpose.msra.mxu0 0.0
      %4298 = vmatprep.subr.mxu0 0.0
      %4299 = vmatpush1.xpose.msra.mxu0 0.0
      %4300 = vmatprep.subr.mxu0 0.0
      %4301 = vmatpush1.xpose.msra.mxu0 0.0
      %4302 = vmatprep.mubr.f32.mxu0 0.0
      %4303 = vmatmul.mubr.f32.gmra.mrb[0].mxu0 %v4233
      %v4304 = vpop.f32.mrb[0].mxu0
      %v4305 = vadd.f32 0.0, %v4304
      %v4306 = vpop.f32.mrb[0].mxu0
      %4307 = vdwg.mxu0
      %v4308 = vmul.f32 %v4077, 0.35355338
      %v4309 = vmul.f32 %v4153, 0.35355338
      %v4310 = vmul.f32 %v4229, 0.35355338
      %v4311 = vmul.f32 %v4305, 0.35355338
      %v4312 = vadd.f32 %v4308, %v2135
      %v4313 = vadd.f32 %v4309, %v2135
      %v4314 = vadd.f32 %v4310, %v2135
      %v4315 = vadd.f32 %v4311, %v2135
      %v4316 = vsel %vm1822, %v4312, -inf
      %4317 = vmax.xlane.f32.xlu0 %v4316
      %v4318 = vpop.xlane.xlu0 %4317
      %v4319 = vsel %vm1822, %v4313, -inf
      %4320 = vmax.xlane.f32.xlu0 %v4319
      %v4321 = vpop.xlane.xlu0 %4320
      %v4322 = vsel %vm1822, %v4314, -inf
      %4323 = vmax.xlane.f32.xlu0 %v4322
      %v4324 = vpop.xlane.xlu0 %4323
      %v4325 = vsel %vm1822, %v4315, -inf
      %4326 = vmax.xlane.f32.xlu0 %v4325
      %v4327 = vpop.xlane.xlu0 %4326
      %v4328 = vsub.f32 %v4312, %v4318
      %v4329 = vsub.f32 %v4313, %v4321
      %v4330 = vsub.f32 %v4314, %v4324
      %v4331 = vsub.f32 %v4315, %v4327
      %v4332 = vmul.f32 %v4328, 1.442695
      %v4333 = vpow.pop %v4332
      %v4334 = vmul.f32 %v4329, 1.442695
      %v4335 = vpow.pop %v4334
      %v4336 = vmul.f32 %v4330, 1.442695
      %v4337 = vpow.pop %v4336
      %v4338 = vmul.f32 %v4331, 1.442695
      %v4339 = vpow.pop %v4338
      %v4340 = vsel %vm1822, %v4333, 0.0
      %4341 = vadd.xlane.f32.xlu0 %v4340
      %v4342 = vpop.xlane.xlu0 %4341
      %v4343 = vsel %vm1822, %v4335, 0.0
      %4344 = vadd.xlane.f32.xlu0 %v4343
      %v4345 = vpop.xlane.xlu0 %4344
      %v4346 = vsel %vm1822, %v4337, 0.0
      %4347 = vadd.xlane.f32.xlu0 %v4346
      %v4348 = vpop.xlane.xlu0 %4347
      %v4349 = vsel %vm1822, %v4339, 0.0
      %4350 = vadd.xlane.f32.xlu0 %v4349
      %v4351 = vpop.xlane.xlu0 %4350
      %v4352 = vrcp.pop %v4342
      %v4353 = vmul.f32 %v4333, %v4352
      %v4354 = vrcp.pop %v4345
      %v4355 = vmul.f32 %v4335, %v4354
      %v4356 = vrcp.pop %v4348
      %v4357 = vmul.f32 %v4337, %v4356
      %v4358 = vrcp.pop %v4351
      %v4359 = vmul.f32 %v4339, %v4358
      %v4361 = vsel %vm1822, %v4353, 0
      %4363 = vmatprep.subr.mxu0 0.0
      %4364 = vmatpush1.msra.mxu0 %v3791
      %4365 = vmatprep.subr.mxu0 0.0
      %4366 = vmatpush1.msra.mxu0 0.0
      %4367 = vmatprep.subr.mxu0 0.0
      %4368 = vmatpush1.msra.mxu0 0.0
      %4369 = vmatprep.subr.mxu0 0.0
      %4370 = vmatpush1.msra.mxu0 0.0
      %4371 = vmatprep.subr.mxu0 0.0
      %4372 = vmatpush1.msra.mxu0 0.0
      %4373 = vmatprep.subr.mxu0 0.0
      %4374 = vmatpush1.msra.mxu0 0.0
      %4375 = vmatprep.subr.mxu0 0.0
      %4376 = vmatpush1.msra.mxu0 0.0
      %4377 = vmatprep.subr.mxu0 0.0
      %4378 = vmatpush1.msra.mxu0 0.0
      %4379 = vmatprep.subr.mxu0 0.0
      %4380 = vmatpush1.msra.mxu0 0.0
      %4381 = vmatprep.subr.mxu0 0.0
      %4382 = vmatpush1.msra.mxu0 0.0
      %4383 = vmatprep.subr.mxu0 0.0
      %4384 = vmatpush1.msra.mxu0 0.0
      %4385 = vmatprep.subr.mxu0 0.0
      %4386 = vmatpush1.msra.mxu0 0.0
      %4387 = vmatprep.subr.mxu0 0.0
      %4388 = vmatpush1.msra.mxu0 0.0
      %4389 = vmatprep.subr.mxu0 0.0
      %4390 = vmatpush1.msra.mxu0 0.0
      %4391 = vmatprep.subr.mxu0 0.0
      %4392 = vmatpush1.msra.mxu0 0.0
      %4393 = vmatprep.subr.mxu0 0.0
      %4394 = vmatpush1.msra.mxu0 0.0
      %4395 = vmatprep.subr.mxu0 0.0
      %4396 = vmatpush1.msra.mxu0 0.0
      %4397 = vmatprep.subr.mxu0 0.0
      %4398 = vmatpush1.msra.mxu0 0.0
      %4399 = vmatprep.subr.mxu0 0.0
      %4400 = vmatpush1.msra.mxu0 0.0
      %4401 = vmatprep.subr.mxu0 0.0
      %4402 = vmatpush1.msra.mxu0 0.0
      %4403 = vmatprep.subr.mxu0 0.0
      %4404 = vmatpush1.msra.mxu0 0.0
      %4405 = vmatprep.subr.mxu0 0.0
      %4406 = vmatpush1.msra.mxu0 0.0
      %4407 = vmatprep.subr.mxu0 0.0
      %4408 = vmatpush1.msra.mxu0 0.0
      %4409 = vmatprep.subr.mxu0 0.0
      %4410 = vmatpush1.msra.mxu0 0.0
      %4411 = vmatprep.subr.mxu0 0.0
      %4412 = vmatpush1.msra.mxu0 0.0
      %4413 = vmatprep.subr.mxu0 0.0
      %4414 = vmatpush1.msra.mxu0 0.0
      %4415 = vmatprep.subr.mxu0 0.0
      %4416 = vmatpush1.msra.mxu0 0.0
      %4417 = vmatprep.subr.mxu0 0.0
      %4418 = vmatpush1.msra.mxu0 0.0
      %4419 = vmatprep.subr.mxu0 0.0
      %4420 = vmatpush1.msra.mxu0 0.0
      %4421 = vmatprep.subr.mxu0 0.0
      %4422 = vmatpush1.msra.mxu0 0.0
      %4423 = vmatprep.subr.mxu0 0.0
      %4424 = vmatpush1.msra.mxu0 0.0
      %4425 = vmatprep.subr.mxu0 0.0
      %4426 = vmatpush1.msra.mxu0 0.0
      %4427 = vmatprep.mubr.f32.mxu0 0.0
      %4428 = vmatmul.mubr.f32.gmra.mrb[0].mxu0 %v4361
      %v4429 = vpop.f32.mrb[0].mxu0
      %v4430 = vadd.f32 0.0, %v4429
      %v4431 = vpop.f32.mrb[0].mxu0
      %4432 = vdwg.mxu0
      %v4434 = vsel %vm1822, %v4355, 0
      %4436 = vmatprep.subr.mxu0 0.0
      %4437 = vmatpush1.msra.mxu0 %v3861
      %4438 = vmatprep.subr.mxu0 0.0
      %4439 = vmatpush1.msra.mxu0 0.0
      %4440 = vmatprep.subr.mxu0 0.0
      %4441 = vmatpush1.msra.mxu0 0.0
      %4442 = vmatprep.subr.mxu0 0.0
      %4443 = vmatpush1.msra.mxu0 0.0
      %4444 = vmatprep.subr.mxu0 0.0
      %4445 = vmatpush1.msra.mxu0 0.0
      %4446 = vmatprep.subr.mxu0 0.0
      %4447 = vmatpush1.msra.mxu0 0.0
      %4448 = vmatprep.subr.mxu0 0.0
      %4449 = vmatpush1.msra.mxu0 0.0
      %4450 = vmatprep.subr.mxu0 0.0
      %4451 = vmatpush1.msra.mxu0 0.0
      %4452 = vmatprep.subr.mxu0 0.0
      %4453 = vmatpush1.msra.mxu0 0.0
      %4454 = vmatprep.subr.mxu0 0.0
      %4455 = vmatpush1.msra.mxu0 0.0
      %4456 = vmatprep.subr.mxu0 0.0
      %4457 = vmatpush1.msra.mxu0 0.0
      %4458 = vmatprep.subr.mxu0 0.0
      %4459 = vmatpush1.msra.mxu0 0.0
      %4460 = vmatprep.subr.mxu0 0.0
      %4461 = vmatpush1.msra.mxu0 0.0
      %4462 = vmatprep.subr.mxu0 0.0
      %4463 = vmatpush1.msra.mxu0 0.0
      %4464 = vmatprep.subr.mxu0 0.0
      %4465 = vmatpush1.msra.mxu0 0.0
      %4466 = vmatprep.subr.mxu0 0.0
      %4467 = vmatpush1.msra.mxu0 0.0
      %4468 = vmatprep.subr.mxu0 0.0
      %4469 = vmatpush1.msra.mxu0 0.0
      %4470 = vmatprep.subr.mxu0 0.0
      %4471 = vmatpush1.msra.mxu0 0.0
      %4472 = vmatprep.subr.mxu0 0.0
      %4473 = vmatpush1.msra.mxu0 0.0
      %4474 = vmatprep.subr.mxu0 0.0
      %4475 = vmatpush1.msra.mxu0 0.0
      %4476 = vmatprep.subr.mxu0 0.0
      %4477 = vmatpush1.msra.mxu0 0.0
      %4478 = vmatprep.subr.mxu0 0.0
      %4479 = vmatpush1.msra.mxu0 0.0
      %4480 = vmatprep.subr.mxu0 0.0
      %4481 = vmatpush1.msra.mxu0 0.0
      %4482 = vmatprep.subr.mxu0 0.0
      %4483 = vmatpush1.msra.mxu0 0.0
      %4484 = vmatprep.subr.mxu0 0.0
      %4485 = vmatpush1.msra.mxu0 0.0
      %4486 = vmatprep.subr.mxu0 0.0
      %4487 = vmatpush1.msra.mxu0 0.0
      %4488 = vmatprep.subr.mxu0 0.0
      %4489 = vmatpush1.msra.mxu0 0.0
      %4490 = vmatprep.subr.mxu0 0.0
      %4491 = vmatpush1.msra.mxu0 0.0
      %4492 = vmatprep.subr.mxu0 0.0
      %4493 = vmatpush1.msra.mxu0 0.0
      %4494 = vmatprep.subr.mxu0 0.0
      %4495 = vmatpush1.msra.mxu0 0.0
      %4496 = vmatprep.subr.mxu0 0.0
      %4497 = vmatpush1.msra.mxu0 0.0
      %4498 = vmatprep.subr.mxu0 0.0
      %4499 = vmatpush1.msra.mxu0 0.0
      %4500 = vmatprep.mubr.f32.mxu0 0.0
      %4501 = vmatmul.mubr.f32.gmra.mrb[0].mxu0 %v4434
      %v4502 = vpop.f32.mrb[0].mxu0
      %v4503 = vadd.f32 0.0, %v4502
      %v4504 = vpop.f32.mrb[0].mxu0
      %4505 = vdwg.mxu0
      %v4507 = vsel %vm1822, %v4357, 0
      %4509 = vmatprep.subr.mxu0 0.0
      %4510 = vmatpush1.msra.mxu0 %v3931
      %4511 = vmatprep.subr.mxu0 0.0
      %4512 = vmatpush1.msra.mxu0 0.0
      %4513 = vmatprep.subr.mxu0 0.0
      %4514 = vmatpush1.msra.mxu0 0.0
      %4515 = vmatprep.subr.mxu0 0.0
      %4516 = vmatpush1.msra.mxu0 0.0
      %4517 = vmatprep.subr.mxu0 0.0
      %4518 = vmatpush1.msra.mxu0 0.0
      %4519 = vmatprep.subr.mxu0 0.0
      %4520 = vmatpush1.msra.mxu0 0.0
      %4521 = vmatprep.subr.mxu0 0.0
      %4522 = vmatpush1.msra.mxu0 0.0
      %4523 = vmatprep.subr.mxu0 0.0
      %4524 = vmatpush1.msra.mxu0 0.0
      %4525 = vmatprep.subr.mxu0 0.0
      %4526 = vmatpush1.msra.mxu0 0.0
      %4527 = vmatprep.subr.mxu0 0.0
      %4528 = vmatpush1.msra.mxu0 0.0
      %4529 = vmatprep.subr.mxu0 0.0
      %4530 = vmatpush1.msra.mxu0 0.0
      %4531 = vmatprep.subr.mxu0 0.0
      %4532 = vmatpush1.msra.mxu0 0.0
      %4533 = vmatprep.subr.mxu0 0.0
      %4534 = vmatpush1.msra.mxu0 0.0
      %4535 = vmatprep.subr.mxu0 0.0
      %4536 = vmatpush1.msra.mxu0 0.0
      %4537 = vmatprep.subr.mxu0 0.0
      %4538 = vmatpush1.msra.mxu0 0.0
      %4539 = vmatprep.subr.mxu0 0.0
      %4540 = vmatpush1.msra.mxu0 0.0
      %4541 = vmatprep.subr.mxu0 0.0
      %4542 = vmatpush1.msra.mxu0 0.0
      %4543 = vmatprep.subr.mxu0 0.0
      %4544 = vmatpush1.msra.mxu0 0.0
      %4545 = vmatprep.subr.mxu0 0.0
      %4546 = vmatpush1.msra.mxu0 0.0
      %4547 = vmatprep.subr.mxu0 0.0
      %4548 = vmatpush1.msra.mxu0 0.0
      %4549 = vmatprep.subr.mxu0 0.0
      %4550 = vmatpush1.msra.mxu0 0.0
      %4551 = vmatprep.subr.mxu0 0.0
      %4552 = vmatpush1.msra.mxu0 0.0
      %4553 = vmatprep.subr.mxu0 0.0
      %4554 = vmatpush1.msra.mxu0 0.0
      %4555 = vmatprep.subr.mxu0 0.0
      %4556 = vmatpush1.msra.mxu0 0.0
      %4557 = vmatprep.subr.mxu0 0.0
      %4558 = vmatpush1.msra.mxu0 0.0
      %4559 = vmatprep.subr.mxu0 0.0
      %4560 = vmatpush1.msra.mxu0 0.0
      %4561 = vmatprep.subr.mxu0 0.0
      %4562 = vmatpush1.msra.mxu0 0.0
      %4563 = vmatprep.subr.mxu0 0.0
      %4564 = vmatpush1.msra.mxu0 0.0
      %4565 = vmatprep.subr.mxu0 0.0
      %4566 = vmatpush1.msra.mxu0 0.0
      %4567 = vmatprep.subr.mxu0 0.0
      %4568 = vmatpush1.msra.mxu0 0.0
      %4569 = vmatprep.subr.mxu0 0.0
      %4570 = vmatpush1.msra.mxu0 0.0
      %4571 = vmatprep.subr.mxu0 0.0
      %4572 = vmatpush1.msra.mxu0 0.0
      %4573 = vmatprep.mubr.f32.mxu0 0.0
      %4574 = vmatmul.mubr.f32.gmra.mrb[0].mxu0 %v4507
      %v4575 = vpop.f32.mrb[0].mxu0
      %v4576 = vadd.f32 0.0, %v4575
      %v4577 = vpop.f32.mrb[0].mxu0
      %4578 = vdwg.mxu0
      %v4580 = vsel %vm1822, %v4359, 0
      %4582 = vmatprep.subr.mxu0 0.0
      %4583 = vmatpush1.msra.mxu0 %v4001
      %4584 = vmatprep.subr.mxu0 0.0
      %4585 = vmatpush1.msra.mxu0 0.0
      %4586 = vmatprep.subr.mxu0 0.0
      %4587 = vmatpush1.msra.mxu0 0.0
      %4588 = vmatprep.subr.mxu0 0.0
      %4589 = vmatpush1.msra.mxu0 0.0
      %4590 = vmatprep.subr.mxu0 0.0
      %4591 = vmatpush1.msra.mxu0 0.0
      %4592 = vmatprep.subr.mxu0 0.0
      %4593 = vmatpush1.msra.mxu0 0.0
      %4594 = vmatprep.subr.mxu0 0.0
      %4595 = vmatpush1.msra.mxu0 0.0
      %4596 = vmatprep.subr.mxu0 0.0
      %4597 = vmatpush1.msra.mxu0 0.0
      %4598 = vmatprep.subr.mxu0 0.0
      %4599 = vmatpush1.msra.mxu0 0.0
      %4600 = vmatprep.subr.mxu0 0.0
      %4601 = vmatpush1.msra.mxu0 0.0
      %4602 = vmatprep.subr.mxu0 0.0
      %4603 = vmatpush1.msra.mxu0 0.0
      %4604 = vmatprep.subr.mxu0 0.0
      %4605 = vmatpush1.msra.mxu0 0.0
      %4606 = vmatprep.subr.mxu0 0.0
      %4607 = vmatpush1.msra.mxu0 0.0
      %4608 = vmatprep.subr.mxu0 0.0
      %4609 = vmatpush1.msra.mxu0 0.0
      %4610 = vmatprep.subr.mxu0 0.0
      %4611 = vmatpush1.msra.mxu0 0.0
      %4612 = vmatprep.subr.mxu0 0.0
      %4613 = vmatpush1.msra.mxu0 0.0
      %4614 = vmatprep.subr.mxu0 0.0
      %4615 = vmatpush1.msra.mxu0 0.0
      %4616 = vmatprep.subr.mxu0 0.0
      %4617 = vmatpush1.msra.mxu0 0.0
      %4618 = vmatprep.subr.mxu0 0.0
      %4619 = vmatpush1.msra.mxu0 0.0
      %4620 = vmatprep.subr.mxu0 0.0
      %4621 = vmatpush1.msra.mxu0 0.0
      %4622 = vmatprep.subr.mxu0 0.0
      %4623 = vmatpush1.msra.mxu0 0.0
      %4624 = vmatprep.subr.mxu0 0.0
      %4625 = vmatpush1.msra.mxu0 0.0
      %4626 = vmatprep.subr.mxu0 0.0
      %4627 = vmatpush1.msra.mxu0 0.0
      %4628 = vmatprep.subr.mxu0 0.0
      %4629 = vmatpush1.msra.mxu0 0.0
      %4630 = vmatprep.subr.mxu0 0.0
      %4631 = vmatpush1.msra.mxu0 0.0
      %4632 = vmatprep.subr.mxu0 0.0
      %4633 = vmatpush1.msra.mxu0 0.0
      %4634 = vmatprep.subr.mxu0 0.0
      %4635 = vmatpush1.msra.mxu0 0.0
      %4636 = vmatprep.subr.mxu0 0.0
      %4637 = vmatpush1.msra.mxu0 0.0
      %4638 = vmatprep.subr.mxu0 0.0
      %4639 = vmatpush1.msra.mxu0 0.0
      %4640 = vmatprep.subr.mxu0 0.0
      %4641 = vmatpush1.msra.mxu0 0.0
      %4642 = vmatprep.subr.mxu0 0.0
      %4643 = vmatpush1.msra.mxu0 0.0
      %4644 = vmatprep.subr.mxu0 0.0
      %4645 = vmatpush1.msra.mxu0 0.0
      %4646 = vmatprep.mubr.f32.mxu0 0.0
      %4647 = vmatmul.mubr.f32.gmra.mrb[0].mxu0 %v4580
      %v4648 = vpop.f32.mrb[0].mxu0
      %v4649 = vadd.f32 0.0, %v4648
      %v4650 = vpop.f32.mrb[0].mxu0
      %4651 = vdwg.mxu0
      %s4652 = scalar_lea.vmem %s11, 32
      %v4653 = vld [vmem:[%s4652] sm:$0xff]
      %v4654 = vld [vmem:[%s4652 + $0x8] sm:$0xff]
      %v4655 = vld [vmem:[%s4652 + $0x10] sm:$0xff]
      %v4656 = vld [vmem:[%s4652 + $0x18] sm:$0xff]
      %v4658 = vsel %vm1822, %v4430, 0
      %4660 = vmatprep.subr.mxu0 0.0
      %4661 = vmatpush1.msra.mxu0 %v4653
      %4662 = vmatprep.subr.mxu0 0.0
      %4663 = vmatpush1.msra.mxu0 0.0
      %4664 = vmatprep.subr.mxu0 0.0
      %4665 = vmatpush1.msra.mxu0 0.0
      %4666 = vmatprep.subr.mxu0 0.0
      %4667 = vmatpush1.msra.mxu0 0.0
      %4668 = vmatprep.subr.mxu0 0.0
      %4669 = vmatpush1.msra.mxu0 0.0
      %4670 = vmatprep.subr.mxu0 0.0
      %4671 = vmatpush1.msra.mxu0 0.0
      %4672 = vmatprep.subr.mxu0 0.0
      %4673 = vmatpush1.msra.mxu0 0.0
      %4674 = vmatprep.subr.mxu0 0.0
      %4675 = vmatpush1.msra.mxu0 0.0
      %4676 = vmatprep.subr.mxu0 0.0
      %4677 = vmatpush1.msra.mxu0 0.0
      %4678 = vmatprep.subr.mxu0 0.0
      %4679 = vmatpush1.msra.mxu0 0.0
      %4680 = vmatprep.subr.mxu0 0.0
      %4681 = vmatpush1.msra.mxu0 0.0
      %4682 = vmatprep.subr.mxu0 0.0
      %4683 = vmatpush1.msra.mxu0 0.0
      %4684 = vmatprep.subr.mxu0 0.0
      %4685 = vmatpush1.msra.mxu0 0.0
      %4686 = vmatprep.subr.mxu0 0.0
      %4687 = vmatpush1.msra.mxu0 0.0
      %4688 = vmatprep.subr.mxu0 0.0
      %4689 = vmatpush1.msra.mxu0 0.0
      %4690 = vmatprep.subr.mxu0 0.0
      %4691 = vmatpush1.msra.mxu0 0.0
      %4692 = vmatprep.subr.mxu0 0.0
      %4693 = vmatpush1.msra.mxu0 0.0
      %4694 = vmatprep.subr.mxu0 0.0
      %4695 = vmatpush1.msra.mxu0 0.0
      %4696 = vmatprep.subr.mxu0 0.0
      %4697 = vmatpush1.msra.mxu0 0.0
      %4698 = vmatprep.subr.mxu0 0.0
      %4699 = vmatpush1.msra.mxu0 0.0
      %4700 = vmatprep.subr.mxu0 0.0
      %4701 = vmatpush1.msra.mxu0 0.0
      %4702 = vmatprep.subr.mxu0 0.0
      %4703 = vmatpush1.msra.mxu0 0.0
      %4704 = vmatprep.subr.mxu0 0.0
      %4705 = vmatpush1.msra.mxu0 0.0
      %4706 = vmatprep.subr.mxu0 0.0
      %4707 = vmatpush1.msra.mxu0 0.0
      %4708 = vmatprep.subr.mxu0 0.0
      %4709 = vmatpush1.msra.mxu0 0.0
      %4710 = vmatprep.subr.mxu0 0.0
      %4711 = vmatpush1.msra.mxu0 0.0
      %4712 = vmatprep.subr.mxu0 0.0
      %4713 = vmatpush1.msra.mxu0 0.0
      %4714 = vmatprep.subr.mxu0 0.0
      %4715 = vmatpush1.msra.mxu0 0.0
      %4716 = vmatprep.subr.mxu0 0.0
      %4717 = vmatpush1.msra.mxu0 0.0
      %4718 = vmatprep.subr.mxu0 0.0
      %4719 = vmatpush1.msra.mxu0 0.0
      %4720 = vmatprep.subr.mxu0 0.0
      %4721 = vmatpush1.msra.mxu0 0.0
      %4722 = vmatprep.subr.mxu0 0.0
      %4723 = vmatpush1.msra.mxu0 0.0
      %4724 = vmatprep.mubr.f32.mxu0 0.0
      %4725 = vmatmul.mubr.f32.gmra.mrb[0].mxu0 %v4658
      %v4726 = vpop.f32.mrb[0].mxu0
      %v4727 = vadd.f32 0.0, %v4726
      %v4728 = vpop.f32.mrb[0].mxu0
      %4729 = vdwg.mxu0
      %v4731 = vsel %vm1822, %v4503, 0
      %4733 = vmatprep.subr.mxu0 0.0
      %4734 = vmatpush1.msra.mxu0 %v4654
      %4735 = vmatprep.subr.mxu0 0.0
      %4736 = vmatpush1.msra.mxu0 0.0
      %4737 = vmatprep.subr.mxu0 0.0
      %4738 = vmatpush1.msra.mxu0 0.0
      %4739 = vmatprep.subr.mxu0 0.0
      %4740 = vmatpush1.msra.mxu0 0.0
      %4741 = vmatprep.subr.mxu0 0.0
      %4742 = vmatpush1.msra.mxu0 0.0
      %4743 = vmatprep.subr.mxu0 0.0
      %4744 = vmatpush1.msra.mxu0 0.0
      %4745 = vmatprep.subr.mxu0 0.0
      %4746 = vmatpush1.msra.mxu0 0.0
      %4747 = vmatprep.subr.mxu0 0.0
      %4748 = vmatpush1.msra.mxu0 0.0
      %4749 = vmatprep.subr.mxu0 0.0
      %4750 = vmatpush1.msra.mxu0 0.0
      %4751 = vmatprep.subr.mxu0 0.0
      %4752 = vmatpush1.msra.mxu0 0.0
      %4753 = vmatprep.subr.mxu0 0.0
      %4754 = vmatpush1.msra.mxu0 0.0
      %4755 = vmatprep.subr.mxu0 0.0
      %4756 = vmatpush1.msra.mxu0 0.0
      %4757 = vmatprep.subr.mxu0 0.0
      %4758 = vmatpush1.msra.mxu0 0.0
      %4759 = vmatprep.subr.mxu0 0.0
      %4760 = vmatpush1.msra.mxu0 0.0
      %4761 = vmatprep.subr.mxu0 0.0
      %4762 = vmatpush1.msra.mxu0 0.0
      %4763 = vmatprep.subr.mxu0 0.0
      %4764 = vmatpush1.msra.mxu0 0.0
      %4765 = vmatprep.subr.mxu0 0.0
      %4766 = vmatpush1.msra.mxu0 0.0
      %4767 = vmatprep.subr.mxu0 0.0
      %4768 = vmatpush1.msra.mxu0 0.0
      %4769 = vmatprep.subr.mxu0 0.0
      %4770 = vmatpush1.msra.mxu0 0.0
      %4771 = vmatprep.subr.mxu0 0.0
      %4772 = vmatpush1.msra.mxu0 0.0
      %4773 = vmatprep.subr.mxu0 0.0
      %4774 = vmatpush1.msra.mxu0 0.0
      %4775 = vmatprep.subr.mxu0 0.0
      %4776 = vmatpush1.msra.mxu0 0.0
      %4777 = vmatprep.subr.mxu0 0.0
      %4778 = vmatpush1.msra.mxu0 0.0
      %4779 = vmatprep.subr.mxu0 0.0
      %4780 = vmatpush1.msra.mxu0 0.0
      %4781 = vmatprep.subr.mxu0 0.0
      %4782 = vmatpush1.msra.mxu0 0.0
      %4783 = vmatprep.subr.mxu0 0.0
      %4784 = vmatpush1.msra.mxu0 0.0
      %4785 = vmatprep.subr.mxu0 0.0
      %4786 = vmatpush1.msra.mxu0 0.0
      %4787 = vmatprep.subr.mxu0 0.0
      %4788 = vmatpush1.msra.mxu0 0.0
      %4789 = vmatprep.subr.mxu0 0.0
      %4790 = vmatpush1.msra.mxu0 0.0
      %4791 = vmatprep.subr.mxu0 0.0
      %4792 = vmatpush1.msra.mxu0 0.0
      %4793 = vmatprep.subr.mxu0 0.0
      %4794 = vmatpush1.msra.mxu0 0.0
      %4795 = vmatprep.subr.mxu0 0.0
      %4796 = vmatpush1.msra.mxu0 0.0
      %4797 = vmatprep.mubr.f32.mxu0 0.0
      %4798 = vmatmul.mubr.f32.gmra.mrb[0].mxu0 %v4731
      %v4799 = vpop.f32.mrb[0].mxu0
      %v4800 = vadd.f32 0.0, %v4799
      %v4801 = vpop.f32.mrb[0].mxu0
      %4802 = vdwg.mxu0
      %v4804 = vsel %vm1822, %v4576, 0
      %4806 = vmatprep.subr.mxu0 0.0
      %4807 = vmatpush1.msra.mxu0 %v4655
      %4808 = vmatprep.subr.mxu0 0.0
      %4809 = vmatpush1.msra.mxu0 0.0
      %4810 = vmatprep.subr.mxu0 0.0
      %4811 = vmatpush1.msra.mxu0 0.0
      %4812 = vmatprep.subr.mxu0 0.0
      %4813 = vmatpush1.msra.mxu0 0.0
      %4814 = vmatprep.subr.mxu0 0.0
      %4815 = vmatpush1.msra.mxu0 0.0
      %4816 = vmatprep.subr.mxu0 0.0
      %4817 = vmatpush1.msra.mxu0 0.0
      %4818 = vmatprep.subr.mxu0 0.0
      %4819 = vmatpush1.msra.mxu0 0.0
      %4820 = vmatprep.subr.mxu0 0.0
      %4821 = vmatpush1.msra.mxu0 0.0
      %4822 = vmatprep.subr.mxu0 0.0
      %4823 = vmatpush1.msra.mxu0 0.0
      %4824 = vmatprep.subr.mxu0 0.0
      %4825 = vmatpush1.msra.mxu0 0.0
      %4826 = vmatprep.subr.mxu0 0.0
      %4827 = vmatpush1.msra.mxu0 0.0
      %4828 = vmatprep.subr.mxu0 0.0
      %4829 = vmatpush1.msra.mxu0 0.0
      %4830 = vmatprep.subr.mxu0 0.0
      %4831 = vmatpush1.msra.mxu0 0.0
      %4832 = vmatprep.subr.mxu0 0.0
      %4833 = vmatpush1.msra.mxu0 0.0
      %4834 = vmatprep.subr.mxu0 0.0
      %4835 = vmatpush1.msra.mxu0 0.0
      %4836 = vmatprep.subr.mxu0 0.0
      %4837 = vmatpush1.msra.mxu0 0.0
      %4838 = vmatprep.subr.mxu0 0.0
      %4839 = vmatpush1.msra.mxu0 0.0
      %4840 = vmatprep.subr.mxu0 0.0
      %4841 = vmatpush1.msra.mxu0 0.0
      %4842 = vmatprep.subr.mxu0 0.0
      %4843 = vmatpush1.msra.mxu0 0.0
      %4844 = vmatprep.subr.mxu0 0.0
      %4845 = vmatpush1.msra.mxu0 0.0
      %4846 = vmatprep.subr.mxu0 0.0
      %4847 = vmatpush1.msra.mxu0 0.0
      %4848 = vmatprep.subr.mxu0 0.0
      %4849 = vmatpush1.msra.mxu0 0.0
      %4850 = vmatprep.subr.mxu0 0.0
      %4851 = vmatpush1.msra.mxu0 0.0
      %4852 = vmatprep.subr.mxu0 0.0
      %4853 = vmatpush1.msra.mxu0 0.0
      %4854 = vmatprep.subr.mxu0 0.0
      %4855 = vmatpush1.msra.mxu0 0.0
      %4856 = vmatprep.subr.mxu0 0.0
      %4857 = vmatpush1.msra.mxu0 0.0
      %4858 = vmatprep.subr.mxu0 0.0
      %4859 = vmatpush1.msra.mxu0 0.0
      %4860 = vmatprep.subr.mxu0 0.0
      %4861 = vmatpush1.msra.mxu0 0.0
      %4862 = vmatprep.subr.mxu0 0.0
      %4863 = vmatpush1.msra.mxu0 0.0
      %4864 = vmatprep.subr.mxu0 0.0
      %4865 = vmatpush1.msra.mxu0 0.0
      %4866 = vmatprep.subr.mxu0 0.0
      %4867 = vmatpush1.msra.mxu0 0.0
      %4868 = vmatprep.subr.mxu0 0.0
      %4869 = vmatpush1.msra.mxu0 0.0
      %4870 = vmatprep.mubr.f32.mxu0 0.0
      %4871 = vmatmul.mubr.f32.gmra.mrb[0].mxu0 %v4804
      %v4872 = vpop.f32.mrb[0].mxu0
      %v4873 = vadd.f32 0.0, %v4872
      %v4874 = vpop.f32.mrb[0].mxu0
      %4875 = vdwg.mxu0
      %v4877 = vsel %vm1822, %v4649, 0
      %4879 = vmatprep.subr.mxu0 0.0
      %4880 = vmatpush1.msra.mxu0 %v4656
      %4881 = vmatprep.subr.mxu0 0.0
      %4882 = vmatpush1.msra.mxu0 0.0
      %4883 = vmatprep.subr.mxu0 0.0
      %4884 = vmatpush1.msra.mxu0 0.0
      %4885 = vmatprep.subr.mxu0 0.0
      %4886 = vmatpush1.msra.mxu0 0.0
      %4887 = vmatprep.subr.mxu0 0.0
      %4888 = vmatpush1.msra.mxu0 0.0
      %4889 = vmatprep.subr.mxu0 0.0
      %4890 = vmatpush1.msra.mxu0 0.0
      %4891 = vmatprep.subr.mxu0 0.0
      %4892 = vmatpush1.msra.mxu0 0.0
      %4893 = vmatprep.subr.mxu0 0.0
      %4894 = vmatpush1.msra.mxu0 0.0
      %4895 = vmatprep.subr.mxu0 0.0
      %4896 = vmatpush1.msra.mxu0 0.0
      %4897 = vmatprep.subr.mxu0 0.0
      %4898 = vmatpush1.msra.mxu0 0.0
      %4899 = vmatprep.subr.mxu0 0.0
      %4900 = vmatpush1.msra.mxu0 0.0
      %4901 = vmatprep.subr.mxu0 0.0
      %4902 = vmatpush1.msra.mxu0 0.0
      %4903 = vmatprep.subr.mxu0 0.0
      %4904 = vmatpush1.msra.mxu0 0.0
      %4905 = vmatprep.subr.mxu0 0.0
      %4906 = vmatpush1.msra.mxu0 0.0
      %4907 = vmatprep.subr.mxu0 0.0
      %4908 = vmatpush1.msra.mxu0 0.0
      %4909 = vmatprep.subr.mxu0 0.0
      %4910 = vmatpush1.msra.mxu0 0.0
      %4911 = vmatprep.subr.mxu0 0.0
      %4912 = vmatpush1.msra.mxu0 0.0
      %4913 = vmatprep.subr.mxu0 0.0
      %4914 = vmatpush1.msra.mxu0 0.0
      %4915 = vmatprep.subr.mxu0 0.0
      %4916 = vmatpush1.msra.mxu0 0.0
      %4917 = vmatprep.subr.mxu0 0.0
      %4918 = vmatpush1.msra.mxu0 0.0
      %4919 = vmatprep.subr.mxu0 0.0
      %4920 = vmatpush1.msra.mxu0 0.0
      %4921 = vmatprep.subr.mxu0 0.0
      %4922 = vmatpush1.msra.mxu0 0.0
      %4923 = vmatprep.subr.mxu0 0.0
      %4924 = vmatpush1.msra.mxu0 0.0
      %4925 = vmatprep.subr.mxu0 0.0
      %4926 = vmatpush1.msra.mxu0 0.0
      %4927 = vmatprep.subr.mxu0 0.0
      %4928 = vmatpush1.msra.mxu0 0.0
      %4929 = vmatprep.subr.mxu0 0.0
      %4930 = vmatpush1.msra.mxu0 0.0
      %4931 = vmatprep.subr.mxu0 0.0
      %4932 = vmatpush1.msra.mxu0 0.0
      %4933 = vmatprep.subr.mxu0 0.0
      %4934 = vmatpush1.msra.mxu0 0.0
      %4935 = vmatprep.subr.mxu0 0.0
      %4936 = vmatpush1.msra.mxu0 0.0
      %4937 = vmatprep.subr.mxu0 0.0
      %4938 = vmatpush1.msra.mxu0 0.0
      %4939 = vmatprep.subr.mxu0 0.0
      %4940 = vmatpush1.msra.mxu0 0.0
      %4941 = vmatprep.subr.mxu0 0.0
      %4942 = vmatpush1.msra.mxu0 0.0
      %4943 = vmatprep.mubr.f32.mxu0 0.0
      %4944 = vmatmul.mubr.f32.gmra.mrb[0].mxu0 %v4877
      %v4945 = vpop.f32.mrb[0].mxu0
      %v4946 = vadd.f32 0.0, %v4945
      %v4947 = vpop.f32.mrb[0].mxu0
      %4948 = vdwg.mxu0
      %v4949 = vsel %vm890, %v4727, 0.0
      %v4950 = vsel %vm890, %v4800, 0.0
      %v4951 = vadd.f32 %v4949, %v4950
      %v4952 = vsel %vm890, %v4873, 0.0
      %v4953 = vadd.f32 %v4951, %v4952
      %v4954 = vsel %vm890, %v4946, 0.0
      %v4955 = vadd.f32 %v4953, %v4954
      %s4956 = scalar_lea.vmem %s12, 1
      %v4957 = vld [vmem:[%s4956] sm:$0x1]
      %v4959 = vlaneseq
      %v4960 = vshrl.u32 %v4959, 7
      %v4961 = vsub.s32 0, %v4960
      %v4962 = vrot.slane %v4957, %v4961
      %v4964 = vadd.f32 %v4955, %v4962
      %v4965 = vadd.f32 %v3022, %v4964
      %s4966 = scalar_lea.vmem %s13, 1
      %v4967 = vld [vmem:[%s4966] sm:$0x1]
      %s4968 = scalar_lea.vmem %s14, 1
      %v4969 = vld [vmem:[%s4968] sm:$0x1]
      %v4970 = vsel %vm890, %v4965, 0.0
      %4971 = vadd.xlane.f32.xlu0 %v4970
      %v4972 = vpop.xlane.xlu0 %4971
      %v4973 = vmul.f32 %v4972, %v2794
      %v4974 = vsub.f32 %v4965, %v4973
      %v4975 = vmul.f32 %v4974, %v4974
      %v4976 = vsel %vm890, %v4975, 0.0
      %4977 = vadd.xlane.f32.xlu0 %v4976
      %v4978 = vpop.xlane.xlu0 %4977
      %v4979 = vmul.f32 %v4978, %v2794
      %v4980 = vadd.f32 %v4979, 1e-05
      %v4981 = vrsqrt.pop %v4980
      %v4982 = vmul.f32 %v4974, %v4981
      %v4984 = vlaneseq
      %v4985 = vshrl.u32 %v4984, 7
      %v4986 = vsub.s32 0, %v4985
      %v4987 = vrot.slane %v4967, %v4986
      %v4989 = vmul.f32 %v4982, %v4987
      %v4991 = vlaneseq
      %v4992 = vshrl.u32 %v4991, 7
      %v4993 = vsub.s32 0, %v4992
      %v4994 = vrot.slane %v4969, %v4993
      %v4996 = vadd.f32 %v4989, %v4994
      %s4997 = scalar_lea.vmem %s15, 32
      %v4998 = vld [vmem:[%s4997] sm:$0xff]
      %v4999 = vld [vmem:[%s4997 + $0x8] sm:$0xff]
      %v5000 = vld [vmem:[%s4997 + $0x10] sm:$0xff]
      %v5001 = vld [vmem:[%s4997 + $0x18] sm:$0xff]
      %s5002 = scalar_lea.vmem %s16, 1
      %v5003 = vld [vmem:[%s5002] sm:$0x1]
      %v5005 = vlaneseq
      %v5006 = vshrl.u32 %v5005, 7
      %v5007 = vsub.s32 0, %v5006
      %v5008 = vrot.slane %v5003, %v5007
      %v5011 = vsel %vm890, %v4996, 0
      %5013 = vmatprep.subr.mxu0 0.0
      %5014 = vmatpush1.msra.mxu0 %v4998
      %5015 = vmatprep.subr.mxu0 0.0
      %5016 = vmatpush1.msra.mxu0 %v4999
      %5017 = vmatprep.subr.mxu0 0.0
      %5018 = vmatpush1.msra.mxu0 %v5000
      %5019 = vmatprep.subr.mxu0 0.0
      %5020 = vmatpush1.msra.mxu0 %v5001
      %5021 = vmatprep.subr.mxu0 0.0
      %5022 = vmatpush1.msra.mxu0 0.0
      %5023 = vmatprep.subr.mxu0 0.0
      %5024 = vmatpush1.msra.mxu0 0.0
      %5025 = vmatprep.subr.mxu0 0.0
      %5026 = vmatpush1.msra.mxu0 0.0
      %5027 = vmatprep.subr.mxu0 0.0
      %5028 = vmatpush1.msra.mxu0 0.0
      %5029 = vmatprep.subr.mxu0 0.0
      %5030 = vmatpush1.msra.mxu0 0.0
      %5031 = vmatprep.subr.mxu0 0.0
      %5032 = vmatpush1.msra.mxu0 0.0
      %5033 = vmatprep.subr.mxu0 0.0
      %5034 = vmatpush1.msra.mxu0 0.0
      %5035 = vmatprep.subr.mxu0 0.0
      %5036 = vmatpush1.msra.mxu0 0.0
      %5037 = vmatprep.subr.mxu0 0.0
      %5038 = vmatpush1.msra.mxu0 0.0
      %5039 = vmatprep.subr.mxu0 0.0
      %5040 = vmatpush1.msra.mxu0 0.0
      %5041 = vmatprep.subr.mxu0 0.0
      %5042 = vmatpush1.msra.mxu0 0.0
      %5043 = vmatprep.subr.mxu0 0.0
      %5044 = vmatpush1.msra.mxu0 0.0
      %5045 = vmatprep.subr.mxu0 0.0
      %5046 = vmatpush1.msra.mxu0 0.0
      %5047 = vmatprep.subr.mxu0 0.0
      %5048 = vmatpush1.msra.mxu0 0.0
      %5049 = vmatprep.subr.mxu0 0.0
      %5050 = vmatpush1.msra.mxu0 0.0
      %5051 = vmatprep.subr.mxu0 0.0
      %5052 = vmatpush1.msra.mxu0 0.0
      %5053 = vmatprep.subr.mxu0 0.0
      %5054 = vmatpush1.msra.mxu0 0.0
      %5055 = vmatprep.subr.mxu0 0.0
      %5056 = vmatpush1.msra.mxu0 0.0
      %5057 = vmatprep.subr.mxu0 0.0
      %5058 = vmatpush1.msra.mxu0 0.0
      %5059 = vmatprep.subr.mxu0 0.0
      %5060 = vmatpush1.msra.mxu0 0.0
      %5061 = vmatprep.subr.mxu0 0.0
      %5062 = vmatpush1.msra.mxu0 0.0
      %5063 = vmatprep.subr.mxu0 0.0
      %5064 = vmatpush1.msra.mxu0 0.0
      %5065 = vmatprep.subr.mxu0 0.0
      %5066 = vmatpush1.msra.mxu0 0.0
      %5067 = vmatprep.subr.mxu0 0.0
      %5068 = vmatpush1.msra.mxu0 0.0
      %5069 = vmatprep.subr.mxu0 0.0
      %5070 = vmatpush1.msra.mxu0 0.0
      %5071 = vmatprep.subr.mxu0 0.0
      %5072 = vmatpush1.msra.mxu0 0.0
      %5073 = vmatprep.subr.mxu0 0.0
      %5074 = vmatpush1.msra.mxu0 0.0
      %5075 = vmatprep.subr.mxu0 0.0
      %5076 = vmatpush1.msra.mxu0 0.0
      %5077 = vmatprep.mubr.f32.mxu0 0.0
      %5078 = vmatmul.mubr.f32.gmra.mrb[0].mxu0 %v5011
      %v5079 = vpop.f32.mrb[0].mxu0
      %v5080 = vadd.f32 %v5008, %v5079
      %v5081 = vpop.f32.mrb[0].mxu0
      %5082 = vdwg.mxu0
      %v5083 = vmax.f32 %v5080, 0.0
      %s5084 = scalar_lea.vmem %s17, 64
      %v5085 = vld [vmem:[%s5084] sm:$0xff]
      %v5086 = vld [vmem:[%s5084 + $0x8] sm:$0xff]
      %v5087 = vld [vmem:[%s5084 + $0x10] sm:$0xff]
      %v5088 = vld [vmem:[%s5084 + $0x18] sm:$0xff]
      %v5089 = vld [vmem:[%s5084 + $0x20] sm:$0xff]
      %v5090 = vld [vmem:[%s5084 + $0x28] sm:$0xff]
      %v5091 = vld [vmem:[%s5084 + $0x30] sm:$0xff]
      %v5092 = vld [vmem:[%s5084 + $0x38] sm:$0xff]
      %s5093 = scalar_lea.vmem %s18, 1
      %v5094 = vld [vmem:[%s5093] sm:$0x1]
      %v5096 = vlaneseq
      %v5097 = vshrl.u32 %v5096, 7
      %v5098 = vsub.s32 0, %v5097
      %v5099 = vrot.slane %v5094, %v5098
      %v5102 = vsel %vm2919, %v5083, 0
      %5104 = vmatprep.subr.mxu0 0.0
      %5105 = vmatpush1.msra.mxu0 %v5085
      %5106 = vmatprep.subr.mxu0 0.0
      %5107 = vmatpush1.msra.mxu0 %v5086
      %5108 = vmatprep.subr.mxu0 0.0
      %5109 = vmatpush1.msra.mxu0 %v5087
      %5110 = vmatprep.subr.mxu0 0.0
      %5111 = vmatpush1.msra.mxu0 %v5088
      %5112 = vmatprep.subr.mxu0 0.0
      %5113 = vmatpush1.msra.mxu0 %v5089
      %5114 = vmatprep.subr.mxu0 0.0
      %5115 = vmatpush1.msra.mxu0 %v5090
      %5116 = vmatprep.subr.mxu0 0.0
      %5117 = vmatpush1.msra.mxu0 %v5091
      %5118 = vmatprep.subr.mxu0 0.0
      %5119 = vmatpush1.msra.mxu0 %v5092
      %5120 = vmatprep.subr.mxu0 0.0
      %5121 = vmatpush1.msra.mxu0 0.0
      %5122 = vmatprep.subr.mxu0 0.0
      %5123 = vmatpush1.msra.mxu0 0.0
      %5124 = vmatprep.subr.mxu0 0.0
      %5125 = vmatpush1.msra.mxu0 0.0
      %5126 = vmatprep.subr.mxu0 0.0
      %5127 = vmatpush1.msra.mxu0 0.0
      %5128 = vmatprep.subr.mxu0 0.0
      %5129 = vmatpush1.msra.mxu0 0.0
      %5130 = vmatprep.subr.mxu0 0.0
      %5131 = vmatpush1.msra.mxu0 0.0
      %5132 = vmatprep.subr.mxu0 0.0
      %5133 = vmatpush1.msra.mxu0 0.0
      %5134 = vmatprep.subr.mxu0 0.0
      %5135 = vmatpush1.msra.mxu0 0.0
      %5136 = vmatprep.subr.mxu0 0.0
      %5137 = vmatpush1.msra.mxu0 0.0
      %5138 = vmatprep.subr.mxu0 0.0
      %5139 = vmatpush1.msra.mxu0 0.0
      %5140 = vmatprep.subr.mxu0 0.0
      %5141 = vmatpush1.msra.mxu0 0.0
      %5142 = vmatprep.subr.mxu0 0.0
      %5143 = vmatpush1.msra.mxu0 0.0
      %5144 = vmatprep.subr.mxu0 0.0
      %5145 = vmatpush1.msra.mxu0 0.0
      %5146 = vmatprep.subr.mxu0 0.0
      %5147 = vmatpush1.msra.mxu0 0.0
      %5148 = vmatprep.subr.mxu0 0.0
      %5149 = vmatpush1.msra.mxu0 0.0
      %5150 = vmatprep.subr.mxu0 0.0
      %5151 = vmatpush1.msra.mxu0 0.0
      %5152 = vmatprep.subr.mxu0 0.0
      %5153 = vmatpush1.msra.mxu0 0.0
      %5154 = vmatprep.subr.mxu0 0.0
      %5155 = vmatpush1.msra.mxu0 0.0
      %5156 = vmatprep.subr.mxu0 0.0
      %5157 = vmatpush1.msra.mxu0 0.0
      %5158 = vmatprep.subr.mxu0 0.0
      %5159 = vmatpush1.msra.mxu0 0.0
      %5160 = vmatprep.subr.mxu0 0.0
      %5161 = vmatpush1.msra.mxu0 0.0
      %5162 = vmatprep.subr.mxu0 0.0
      %5163 = vmatpush1.msra.mxu0 0.0
      %5164 = vmatprep.subr.mxu0 0.0
      %5165 = vmatpush1.msra.mxu0 0.0
      %5166 = vmatprep.subr.mxu0 0.0
      %5167 = vmatpush1.msra.mxu0 0.0
      %5168 = vmatprep.mubr.f32.mxu0 0.0
      %5169 = vmatmul.mubr.f32.gmra.mrb[0].mxu0 %v5102
      %v5170 = vpop.f32.mrb[0].mxu0
      %v5171 = vadd.f32 %v5099, %v5170
      %v5172 = vpop.f32.mrb[0].mxu0
      %5173 = vdwg.mxu0
      %v5174 = vadd.f32 %v4996, %v5171
      %s5175 = scalar_lea.vmem %s19, 1
      %v5176 = vld [vmem:[%s5175] sm:$0x1]
      %s5177 = scalar_lea.vmem %s20, 1
      %v5178 = vld [vmem:[%s5177] sm:$0x1]
      %v5179 = vsel %vm890, %v5174, 0.0
      %5180 = vadd.xlane.f32.xlu0 %v5179
      %v5181 = vpop.xlane.xlu0 %5180
      %v5182 = vmul.f32 %v5181, %v2794
      %v5183 = vsub.f32 %v5174, %v5182
      %v5184 = vmul.f32 %v5183, %v5183
      %v5185 = vsel %vm890, %v5184, 0.0
      %5186 = vadd.xlane.f32.xlu0 %v5185
      %v5187 = vpop.xlane.xlu0 %5186
      %v5188 = vmul.f32 %v5187, %v2794
      %v5189 = vadd.f32 %v5188, 1e-05
      %v5190 = vrsqrt.pop %v5189
      %v5191 = vmul.f32 %v5183, %v5190
      %v5193 = vlaneseq
      %v5194 = vshrl.u32 %v5193, 7
      %v5195 = vsub.s32 0, %v5194
      %v5196 = vrot.slane %v5176, %v5195
      %v5198 = vmul.f32 %v5191, %v5196
      %v5200 = vlaneseq
      %v5201 = vshrl.u32 %v5200, 7
      %v5202 = vsub.s32 0, %v5201
      %v5203 = vrot.slane %v5178, %v5202
      %v5205 = vadd.f32 %v5198, %v5203
      %5206 = vst.msk [vmem:[%s757] sm:$0xff] %vm890, %v5205
      %v5207 = vld [vmem:[%s21] sm:$0xff]
      %v5208 = vld [vmem:[%s21 + $0x8] sm:$0xff]
      %v5209 = vld [vmem:[%s21 + $0x10] sm:$0xff]
      %v5210 = vld [vmem:[%s21 + $0x18] sm:$0xff]
      %v5211 = vld [vmem:[%s22] sm:$0x1]
      %v5213 = vlaneseq
      %v5214 = vshrl.u32 %v5213, 7
      %v5215 = vsub.s32 0, %v5214
      %v5216 = vrot.slane %v5211, %v5215
      %v5219 = vsel %vm890, %v5205, 0
      %5221 = vmatprep.subr.mxu0 0.0
      %5222 = vmatpush1.msra.mxu0 %v5207
      %5223 = vmatprep.subr.mxu0 0.0
      %5224 = vmatpush1.msra.mxu0 %v5208
      %5225 = vmatprep.subr.mxu0 0.0
      %5226 = vmatpush1.msra.mxu0 %v5209
      %5227 = vmatprep.subr.mxu0 0.0
      %5228 = vmatpush1.msra.mxu0 %v5210
      %5229 = vmatprep.subr.mxu0 0.0
      %5230 = vmatpush1.msra.mxu0 0.0
      %5231 = vmatprep.subr.mxu0 0.0
      %5232 = vmatpush1.msra.mxu0 0.0
      %5233 = vmatprep.subr.mxu0 0.0
      %5234 = vmatpush1.msra.mxu0 0.0
      %5235 = vmatprep.subr.mxu0 0.0
      %5236 = vmatpush1.msra.mxu0 0.0
      %5237 = vmatprep.subr.mxu0 0.0
      %5238 = vmatpush1.msra.mxu0 0.0
      %5239 = vmatprep.subr.mxu0 0.0
      %5240 = vmatpush1.msra.mxu0 0.0
      %5241 = vmatprep.subr.mxu0 0.0
      %5242 = vmatpush1.msra.mxu0 0.0
      %5243 = vmatprep.subr.mxu0 0.0
      %5244 = vmatpush1.msra.mxu0 0.0
      %5245 = vmatprep.subr.mxu0 0.0
      %5246 = vmatpush1.msra.mxu0 0.0
      %5247 = vmatprep.subr.mxu0 0.0
      %5248 = vmatpush1.msra.mxu0 0.0
      %5249 = vmatprep.subr.mxu0 0.0
      %5250 = vmatpush1.msra.mxu0 0.0
      %5251 = vmatprep.subr.mxu0 0.0
      %5252 = vmatpush1.msra.mxu0 0.0
      %5253 = vmatprep.subr.mxu0 0.0
      %5254 = vmatpush1.msra.mxu0 0.0
      %5255 = vmatprep.subr.mxu0 0.0
      %5256 = vmatpush1.msra.mxu0 0.0
      %5257 = vmatprep.subr.mxu0 0.0
      %5258 = vmatpush1.msra.mxu0 0.0
      %5259 = vmatprep.subr.mxu0 0.0
      %5260 = vmatpush1.msra.mxu0 0.0
      %5261 = vmatprep.subr.mxu0 0.0
      %5262 = vmatpush1.msra.mxu0 0.0
      %5263 = vmatprep.subr.mxu0 0.0
      %5264 = vmatpush1.msra.mxu0 0.0
      %5265 = vmatprep.subr.mxu0 0.0
      %5266 = vmatpush1.msra.mxu0 0.0
      %5267 = vmatprep.subr.mxu0 0.0
      %5268 = vmatpush1.msra.mxu0 0.0
      %5269 = vmatprep.subr.mxu0 0.0
      %5270 = vmatpush1.msra.mxu0 0.0
      %5271 = vmatprep.subr.mxu0 0.0
      %5272 = vmatpush1.msra.mxu0 0.0
      %5273 = vmatprep.subr.mxu0 0.0
      %5274 = vmatpush1.msra.mxu0 0.0
      %5275 = vmatprep.subr.mxu0 0.0
      %5276 = vmatpush1.msra.mxu0 0.0
      %5277 = vmatprep.subr.mxu0 0.0
      %5278 = vmatpush1.msra.mxu0 0.0
      %5279 = vmatprep.subr.mxu0 0.0
      %5280 = vmatpush1.msra.mxu0 0.0
      %5281 = vmatprep.subr.mxu0 0.0
      %5282 = vmatpush1.msra.mxu0 0.0
      %5283 = vmatprep.subr.mxu0 0.0
      %5284 = vmatpush1.msra.mxu0 0.0
      %5285 = vmatprep.mubr.f32.mxu0 0.0
      %5286 = vmatmul.mubr.f32.gmra.mrb[0].mxu0 %v5219
      %v5287 = vpop.f32.mrb[0].mxu0
      %v5288 = vadd.f32 %v5216, %v5287
      %v5289 = vpop.f32.mrb[0].mxu0
      %5290 = vdwg.mxu0
      %5291 = vst.msk [vmem:[%s753] sm:$0xff] %vm1822, %v5288
      %p5292 = scmp.lt.s32.totalorder %s36, 1
      %s5293 = scalar_select %p5292, %s36, 1
      %s5294 = smul.addr %s5293, 8
      %s5295 = scalar_lea.vmem %s23, %s5294
      %p5296 = scmp.lt.s32.totalorder %s36, 1
      %s5297 = scalar_select %p5296, %s36, 1
      %s5298 = smul.addr %s5297, 8
      %s5299 = scalar_lea.vmem %s24, %s5298
      // Predicated region
      $region113: #{transformer_forward.1} parent=111 // pred_check
        %p5300 = pneg %p547
      $region114: #{transformer_forward.1} parent=111 // pred_check_branch
        %5302 = sbr.rel (%p5300) target = $region116
      $region115: #{transformer_forward.1} parent=111 // pred_region
        _
      $region116: #{transformer_forward.1} parent=111 // pred_fallthru
        _
      // Predicated region
      $region117: #{transformer_forward.1} parent=111 // pred_check
        %p5303 = pneg %p573
      $region118: #{transformer_forward.1} parent=111 // pred_check_branch
        %5305 = sbr.rel (%p5303) target = $region120
      $region119: #{transformer_forward.1} parent=111 // pred_region
        _
      $region120: #{transformer_forward.1} parent=111 // pred_fallthru
        _
    $region112: #{transformer_forward.1} parent=5 // pred_fallthru
      _
    %p5306 = scmp.le.s32.totalorder 2, %s31
    // Predicated region
    $region121: #{transformer_forward.1} parent=5 // pred_check
      %p5307 = pneg %p5306
    $region122: #{transformer_forward.1} parent=5 // pred_check_branch
      %5309 = sbr.rel (%p5307) target = $region124
    $region123: #{transformer_forward.1} parent=5 // pred_region
      %s5310 = ssub.s32 %s31, 2
      // Predicated region
      $region125: #{transformer_forward.1} parent=123 // pred_check
        %p5311 = pneg %p553
      $region126: #{transformer_forward.1} parent=123 // pred_check_branch
        %5313 = sbr.rel (%p5311) target = $region128
      $region127: #{transformer_forward.1} parent=123 // pred_region
        %p5314 = scmp.lt.s32.totalorder %s37, 1
        %s5315 = scalar_select %p5314, %s37, 1
        %s5316 = smul.addr %s5315, 8
        %s5317 = scalar_lea.vmem %s23, %s5316
      $region128: #{transformer_forward.1} parent=123 // pred_fallthru
        _
      // Predicated region
      $region129: #{transformer_forward.1} parent=123 // pred_check
        %p5318 = pneg %p579
      $region130: #{transformer_forward.1} parent=123 // pred_check_branch
        %5320 = sbr.rel (%p5318) target = $region132
      $region131: #{transformer_forward.1} parent=123 // pred_region
        %p5321 = scmp.lt.s32.totalorder %s37, 1
        %s5322 = scalar_select %p5321, %s37, 1
        %s5323 = smul.addr %s5322, 8
        %s5324 = scalar_lea.vmem %s24, %s5323
      $region132: #{transformer_forward.1} parent=123 // pred_fallthru
        _
    $region124: #{transformer_forward.1} parent=5 // pred_fallthru
      _
  $region6: #{transformer_forward.1} parent=0 // loop_footer
    %s35 = sadd.s32 1, %s31
  $region7: #{transformer_forward.1} parent=0 // loop_footer_branch
    %30 = sbr.rel target = $region3
  $region8: #{transformer_forward.1} parent=0 // loop_exit
    _

</llo_original>
